<compile_context>
chip_gen: v6e
topology: v6e:2x2x1
jax: 0.10.0
libtpu: 0.0.40
codegen_flags: <defaults>
</compile_context>

<pallas_src>
import functools
import math

import jax
import jax.numpy as jnp
from jax.experimental import pallas as pl
from jax.experimental.pallas import tpu as pltpu


# ---------------------------------------------------------------------------
# helpers
# ---------------------------------------------------------------------------

def _round_up(x, m):
    return ((x + m - 1) // m) * m


def _pick_row_tile(rows, cols, itemsize, target_bytes=2 << 20):
    """Row tile sized by bytes: multiple of 8 sublanes, capped near `rows`."""
    tr = (target_bytes // max(1, cols * itemsize) // 8) * 8
    tr = max(8, tr)
    return min(tr, _round_up(max(rows, 1), 8))


def _prepare_key_mask(attention_mask, B, S):
    """Standard BERT additive key-padding mask, broadcastable to (B,1,1,S) ->
    stored compactly as (B,1,S).  Never expanded to (B*H,S,S)."""
    if attention_mask is None:
        return None
    # TODO(synk): general (B,H,Sq,Sk) masks would need a per-head BlockSpec.
    m = jnp.broadcast_to(attention_mask.astype(jnp.float32), (B, 1, 1, S))
    return m.reshape(B, 1, S)


# ---------------------------------------------------------------------------
# PRIMARY PATH: fully fused SelfattLayer kernel (grid over batch)
# ---------------------------------------------------------------------------

def _fused_core(x_in, mask, wqkv, bqkv, wo, bo, gamma, beta,
                *, num_heads, scale, eps):
    S, D = x_in.shape
    H = num_heads
    Dh = D // H

    x = x_in.astype(jnp.float32)
    # QKV projection: bf16 MXU operands, f32 accumulation.
    qkv = jnp.dot(x.astype(jnp.bfloat16), wqkv.astype(jnp.bfloat16),
                  preferred_element_type=jnp.float32)
    qkv = qkv + bqkv.astype(jnp.float32)                       # (S, 3D)

    if mask is not None:
        mask = mask.astype(jnp.float32)                        # (1, S) key mask

    # Per-head attention; heads are unrolled inside one grid step (no per-head
    # launch / DMA overhead).  Scale applied to q (SxDh) not the SxS scores.
    ctx_heads = []
    for hh in range(H):
        qh = (qkv[:, hh * Dh:(hh + 1) * Dh] * scale).astype(jnp.bfloat16)
        kh = qkv[:, D + hh * Dh: D + (hh + 1) * Dh].astype(jnp.bfloat16)
        vh = qkv[:, 2 * D + hh * Dh: 2 * D + (hh + 1) * Dh].astype(jnp.bfloat16)
        s = jax.lax.dot_general(qh, kh, (((1,), (1,)), ((), ())),
                                preferred_element_type=jnp.float32)  # (S, S)
        if mask is not None:
            s = s + mask
        s = s - jnp.max(s, axis=-1, keepdims=True)
        p = jnp.exp(s)
        p = p * pl.reciprocal(jnp.sum(p, axis=-1, keepdims=True), approx=True)
        ctx_heads.append(jnp.dot(p.astype(jnp.bfloat16), vh,
                                 preferred_element_type=jnp.float32))
    ctx = jnp.concatenate(ctx_heads, axis=-1)                  # (S, D)

    # Output projection + residual + LayerNorm(eps).
    y = jnp.dot(ctx.astype(jnp.bfloat16), wo.astype(jnp.bfloat16),
                preferred_element_type=jnp.float32)
    y = y + bo.astype(jnp.float32) + x
    mean = jnp.mean(y, axis=-1, keepdims=True)
    var = jnp.mean((y - mean) * (y - mean), axis=-1, keepdims=True)
    yn = (y - mean) * jax.lax.rsqrt(var + eps)
    return yn * gamma.astype(jnp.float32) + beta.astype(jnp.float32)


def _fused_layer_kernel(h_ref, wqkv_ref, bqkv_ref, wo_ref, bo_ref,
                        g_ref, b2_ref, o_ref, *, num_heads, scale, eps):
    o_ref[0] = _fused_core(h_ref[0], None, wqkv_ref[...], bqkv_ref[...],
                           wo_ref[...], bo_ref[...], g_ref[...], b2_ref[...],
                           num_heads=num_heads, scale=scale,
                           eps=eps).astype(o_ref.dtype)


def _fused_layer_mask_kernel(h_ref, m_ref, wqkv_ref, bqkv_ref, wo_ref, bo_ref,
                             g_ref, b2_ref, o_ref, *, num_heads, scale, eps):
    o_ref[0] = _fused_core(h_ref[0], m_ref[0], wqkv_ref[...], bqkv_ref[...],
                           wo_ref[...], bo_ref[...], g_ref[...], b2_ref[...],
                           num_heads=num_heads, scale=scale,
                           eps=eps).astype(o_ref.dtype)


def _fused_selfatt_layer(lp, h, mask_b1s, num_heads):
    B, S, D = h.shape
    H = num_heads
    Dh = D // H
    scale = 1.0 / math.sqrt(Dh + 1e-5)
    has_mask = mask_b1s is not None

    kernel = functools.partial(
        _fused_layer_mask_kernel if has_mask else _fused_layer_kernel,
        num_heads=H, scale=scale, eps=1e-5)

    in_specs = [pl.BlockSpec((1, S, D), lambda b: (b, 0, 0))]
    args = [h]
    if has_mask:
        in_specs.append(pl.BlockSpec((1, 1, S), lambda b: (b, 0, 0)))
        args.append(mask_b1s)
    in_specs += [
        pl.BlockSpec((D, 3 * D), lambda b: (0, 0)),   # weights resident in VMEM
        pl.BlockSpec((1, 3 * D), lambda b: (0, 0)),
        pl.BlockSpec((D, D), lambda b: (0, 0)),
        pl.BlockSpec((1, D), lambda b: (0, 0)),
        pl.BlockSpec((1, D), lambda b: (0, 0)),
        pl.BlockSpec((1, D), lambda b: (0, 0)),
    ]
    args += [lp["w_qkv"], lp["b_qkv"].reshape(1, 3 * D), lp["w_o"],
             lp["b_o"].reshape(1, D), lp["ln_g"].reshape(1, D),
             lp["ln_b"].reshape(1, D)]

    flops_per_b = 2 * S * D * 3 * D + 4 * S * S * D + 2 * S * D * D
    cost = pl.CostEstimate(
        flops=B * flops_per_b,
        transcendentals=B * H * S * S,
        bytes_accessed=(2 * B * S * D + 4 * D * D + 6 * D
                        + (B * S if has_mask else 0)) * 4,
    )
    return pl.pallas_call(
        kernel,
        out_shape=jax.ShapeDtypeStruct((B, S, D), h.dtype),
        grid_spec=pltpu.PrefetchScalarGridSpec(
            num_scalar_prefetch=0,
            grid=(B,),
            in_specs=in_specs,
            out_specs=pl.BlockSpec((1, S, D), lambda b: (b, 0, 0)),
        ),
        compiler_params=pltpu.CompilerParams(dimension_semantics=("parallel",)),
        cost_estimate=cost,
    )(*args)


# ---------------------------------------------------------------------------
# FALLBACK PATH kernel 1: matmul + bias, 2-D (row, col) parallel grid
# ---------------------------------------------------------------------------

def _linear_bias_kernel(x_ref, w_ref, b_ref, o_ref):
    x = x_ref[...].astype(jnp.bfloat16)
    w = w_ref[...].astype(jnp.bfloat16)
    y = jnp.dot(x, w, preferred_element_type=jnp.float32)
    y = y + b_ref[...].astype(jnp.float32)
    o_ref[...] = y.astype(o_ref.dtype)


def linear_pallas(x2, w, b):
    M, K = x2.shape
    _, N = w.shape
    itemsize = jnp.dtype(x2.dtype).itemsize
    # Stream the weight in N-tiles so it is never fully VMEM-resident
    # (important on v5e's 16 MiB scoped / v7x's 64 MiB physical VMEM) and the
    # 2-D grid gives v7x's two TensorCores a second parallel axis.
    tn = N if N <= 512 else 512
    tr = _pick_row_tile(M, max(K, tn), itemsize)
    grid = (pl.cdiv(M, tr), pl.cdiv(N, tn))
    cost = pl.CostEstimate(
        flops=2 * M * K * N,
        transcendentals=0,
        bytes_accessed=(M * K + K * N + N + M * N) * itemsize,
    )
    return pl.pallas_call(
        _linear_bias_kernel,
        out_shape=jax.ShapeDtypeStruct((M, N), x2.dtype),
        grid_spec=pltpu.PrefetchScalarGridSpec(
            num_scalar_prefetch=0,
            grid=grid,
            in_specs=[
                pl.BlockSpec((tr, K), lambda i, j: (i, 0)),
                pl.BlockSpec((K, tn), lambda i, j: (0, j)),
                pl.BlockSpec((1, tn), lambda i, j: (0, j)),
            ],
            out_specs=pl.BlockSpec((tr, tn), lambda i, j: (i, j)),
        ),
        compiler_params=pltpu.CompilerParams(
            dimension_semantics=("parallel", "parallel")),
        cost_estimate=cost,
    )(x2, w, b.reshape(1, N))


# ---------------------------------------------------------------------------
# FALLBACK PATH kernel 2: all-heads-per-batch attention
# ---------------------------------------------------------------------------

def _attn_heads_core(q, k, v, scale, mask):
    qb = (q.astype(jnp.float32) * scale).astype(jnp.bfloat16)   # (H, S, Dh)
    kb = k.astype(jnp.bfloat16)
    vb = v.astype(jnp.bfloat16)
    s = jnp.einsum("hqd,hkd->hqk", qb, kb, preferred_element_type=jnp.float32)
    if mask is not None:
        s = s + mask                                            # (1,S) key mask
    s = s - jnp.max(s, axis=-1, keepdims=True)
    p = jnp.exp(s)
    p = p * pl.reciprocal(jnp.sum(p, axis=-1, keepdims=True), approx=True)
    return jnp.einsum("hqk,hkd->hqd", p.astype(jnp.bfloat16), vb,
                      preferred_element_type=jnp.float32)


def _attn_heads_kernel(q_ref, k_ref, v_ref, o_ref, *, scale):
    o_ref[0] = _attn_heads_core(q_ref[0], k_ref[0], v_ref[0], scale,
                                None).astype(o_ref.dtype)


def _attn_heads_mask_kernel(q_ref, k_ref, v_ref, m_ref, o_ref, *, scale):
    o_ref[0] = _attn_heads_core(q_ref[0], k_ref[0], v_ref[0], scale,
                                m_ref[0].astype(jnp.float32)).astype(o_ref.dtype)


def attention_pallas(q, k, v, scale, mask=None):
    # q, k, v: (B, H, S, Dh); mask: (B, 1, S) or None.
    # TODO(synk): switch to a KV-tiled online-softmax (flash) grid for long S.
    B, H, S, Dh = q.shape
    itemsize = jnp.dtype(q.dtype).itemsize
    in_specs = [pl.BlockSpec((1, H, S, Dh), lambda b: (b, 0, 0, 0))
                for _ in range(3)]
    args = (q, k, v)
    bytes_accessed = 4 * B * H * S * Dh * itemsize
    if mask is not None:
        in_specs.append(pl.BlockSpec((1, 1, S), lambda b: (b, 0, 0)))
        args = args + (mask,)
        bytes_accessed += B * S * 4
        kernel = functools.partial(_attn_heads_mask_kernel, scale=scale)
    else:
        kernel = functools.partial(_attn_heads_kernel, scale=scale)

    cost = pl.CostEstimate(
        flops=4 * B * H * S * S * Dh,
        transcendentals=B * H * S * S,
        bytes_accessed=bytes_accessed,
    )
    return pl.pallas_call(
        kernel,
        out_shape=jax.ShapeDtypeStruct((B, H, S, Dh), q.dtype),
        grid_spec=pltpu.PrefetchScalarGridSpec(
            num_scalar_prefetch=0,
            grid=(B,),
            in_specs=in_specs,
            out_specs=pl.BlockSpec((1, H, S, Dh), lambda b: (b, 0, 0, 0)),
        ),
        compiler_params=pltpu.CompilerParams(dimension_semantics=("parallel",)),
        cost_estimate=cost,
    )(*args)


# ---------------------------------------------------------------------------
# FALLBACK PATH kernel 3: output projection + residual + LayerNorm
# ---------------------------------------------------------------------------

def _out_ln_kernel(h_ref, w_ref, b_ref, res_ref, g_ref, beta_ref, o_ref, *, eps):
    hb = h_ref[...].astype(jnp.bfloat16)
    wb = w_ref[...].astype(jnp.bfloat16)
    y = jnp.dot(hb, wb, preferred_element_type=jnp.float32)
    y = y + b_ref[...].astype(jnp.float32) + res_ref[...].astype(jnp.float32)
    mean = jnp.mean(y, axis=-1, keepdims=True)
    var = jnp.mean((y - mean) * (y - mean), axis=-1, keepdims=True)
    yn = (y - mean) * jax.lax.rsqrt(var + eps)
    yn = yn * g_ref[...].astype(jnp.float32) + beta_ref[...].astype(jnp.float32)
    o_ref[...] = yn.astype(o_ref.dtype)


def out_proj_ln_pallas(h2, w, b, res2, gamma, beta, *, eps=1e-5):
    M, D = h2.shape
    itemsize = jnp.dtype(h2.dtype).itemsize
    tr = _pick_row_tile(M, D, itemsize)
    grid = (pl.cdiv(M, tr),)
    cost = pl.CostEstimate(
        flops=2 * M * D * D + 10 * M * D,
        transcendentals=M,
        bytes_accessed=(3 * M * D + D * D + 3 * D) * itemsize,
    )
    return pl.pallas_call(
        functools.partial(_out_ln_kernel, eps=eps),
        out_shape=jax.ShapeDtypeStruct((M, D), h2.dtype),
        grid_spec=pltpu.PrefetchScalarGridSpec(
            num_scalar_prefetch=0,
            grid=grid,
            in_specs=[
                pl.BlockSpec((tr, D), lambda i: (i, 0)),
                pl.BlockSpec((D, D), lambda i: (0, 0)),
                pl.BlockSpec((1, D), lambda i: (0, 0)),
                pl.BlockSpec((tr, D), lambda i: (i, 0)),
                pl.BlockSpec((1, D), lambda i: (0, 0)),
                pl.BlockSpec((1, D), lambda i: (0, 0)),
            ],
            out_specs=pl.BlockSpec((tr, D), lambda i: (i, 0)),
        ),
        compiler_params=pltpu.CompilerParams(dimension_semantics=("parallel",)),
        cost_estimate=cost,
    )(h2, w, b.reshape(1, D), res2, gamma.reshape(1, D), beta.reshape(1, D))


# ---------------------------------------------------------------------------
# layer / model wrappers
# ---------------------------------------------------------------------------

def _tiled_selfatt_layer(lp, h, mask_b1s, num_heads):
    B, S, D = h.shape
    H = num_heads
    Dh = D // H
    scale = 1.0 / math.sqrt(Dh + 1e-5)

    x2 = h.reshape(B * S, D)
    qkv = linear_pallas(x2, lp["w_qkv"], lp["b_qkv"])            # (B*S, 3D)
    # TODO(synk): these two XLA relayouts could be folded into the kernels via
    # BlockSpec index maps on the (B,S,3,H,Dh) view for very large models.
    qkv = qkv.reshape(B, S, 3, H, Dh).transpose(2, 0, 3, 1, 4)    # (3,B,H,S,Dh)
    q, k, v = qkv[0], qkv[1], qkv[2]

    ctx = attention_pallas(q, k, v, scale, mask_b1s)              # (B,H,S,Dh)
    ctx = ctx.transpose(0, 2, 1, 3).reshape(B * S, D)

    out = out_proj_ln_pallas(ctx, lp["w_o"], lp["b_o"], x2,
                             lp["ln_g"], lp["ln_b"], eps=1e-5)
    return out.reshape(B, S, D)


def selfatt_layer_pallas(lp, h, mask_b1s, num_heads, use_fused=None):
    B, S, D = h.shape
    if use_fused is None:
        # Fused path when weights + per-batch activations comfortably fit VMEM.
        est_bytes = 4 * (4 * D * D + 4 * S * D + 2 * S * S + 8 * D)
        use_fused = (num_heads <= 16) and (S <= 512) and (est_bytes < (10 << 20))
    if use_fused:
        return _fused_selfatt_layer(lp, h, mask_b1s, num_heads)
    return _tiled_selfatt_layer(lp, h, mask_b1s, num_heads)


def mmformer_pallas(params, x, attention_mask=None, *, num_heads, use_fused=None):
    B, L, D = x.shape
    Qn = params["queries"].shape[1]
    S = L + Qn
    queries = jnp.broadcast_to(params["queries"].astype(x.dtype), (B, Qn, D))
    h = jnp.concatenate([queries, x], axis=1)                    # (B, S, D)
    mask_b1s = _prepare_key_mask(attention_mask, B, S)
    for lp in params["layers"]:
        h = selfatt_layer_pallas(lp, h, mask_b1s, num_heads, use_fused)
    return h


# ---------------------------------------------------------------------------
# pure-JAX reference (mirrors the kernels' bf16-MXU / f32-accumulate precision)
# ---------------------------------------------------------------------------

def _selfatt_layer_ref(lp, h, attention_mask, num_heads):
    B, S, D = h.shape
    H = num_heads
    Dh = D // H
    scale = 1.0 / math.sqrt(Dh + 1e-5)
    bf = jnp.bfloat16

    x2 = h.reshape(B * S, D).astype(jnp.float32)
    qkv = jnp.dot(x2.astype(bf), lp["w_qkv"].astype(bf),
                  preferred_element_type=jnp.float32) + lp["b_qkv"]
    qkv = qkv.reshape(B, S, 3, H, Dh).transpose(2, 0, 3, 1, 4)
    q, k, v = qkv[0], qkv[1], qkv[2]                             # (B,H,S,Dh)
    q = q * scale
    s = jnp.einsum("bhqd,bhkd->bhqk", q.astype(bf), k.astype(bf),
                   preferred_element_type=jnp.float32)
    if attention_mask is not None:
        s = s + attention_mask
    p = jax.nn.softmax(s, axis=-1)
    ctx = jnp.einsum("bhqk,bhkd->bhqd", p.astype(bf), v.astype(bf),
                     preferred_element_type=jnp.float32)
    ctx = ctx.transpose(0, 2, 1, 3).reshape(B * S, D)
    y = jnp.dot(ctx.astype(bf), lp["w_o"].astype(bf),
                preferred_element_type=jnp.float32) + lp["b_o"] + x2
    mean = jnp.mean(y, axis=-1, keepdims=True)
    var = jnp.mean((y - mean) ** 2, axis=-1, keepdims=True)
    y = (y - mean) / jnp.sqrt(var + 1e-5) * lp["ln_g"] + lp["ln_b"]
    return y.reshape(B, S, D).astype(h.dtype)


def mmformer_ref(params, x, attention_mask=None, *, num_heads):
    B, L, D = x.shape
    Qn = params["queries"].shape[1]
    queries = jnp.broadcast_to(params["queries"].astype(x.dtype), (B, Qn, D))
    h = jnp.concatenate([queries, x], axis=1)
    for lp in params["layers"]:
        h = _selfatt_layer_ref(lp, h, attention_mask, num_heads)
    return h


# ---------------------------------------------------------------------------
# parameter init (deterministic)
# ---------------------------------------------------------------------------

def init_params(key, query_num, layer_num, hidden_size):
    keys = jax.random.split(key, 1 + layer_num)
    bound = math.sqrt(6.0 / (query_num + hidden_size))           # xavier_uniform
    queries = jax.random.uniform(keys[0], (1, query_num, hidden_size),
                                 jnp.float32, -bound, bound)
    lim = 1.0 / math.sqrt(hidden_size)
    layers = []
    for i in range(layer_num):
        ks = jax.random.split(keys[1 + i], 4)
        layers.append(dict(
            w_qkv=jax.random.uniform(ks[0], (hidden_size, 3 * hidden_size),
                                     jnp.float32, -lim, lim),
            b_qkv=jax.random.uniform(ks[1], (3 * hidden_size,),
                                     jnp.float32, -lim, lim),
            w_o=jax.random.uniform(ks[2], (hidden_size, hidden_size),
                                   jnp.float32, -lim, lim),
            b_o=jax.random.uniform(ks[3], (hidden_size,),
                                   jnp.float32, -lim, lim),
            ln_g=jnp.ones((hidden_size,), jnp.float32),
            ln_b=jnp.zeros((hidden_size,), jnp.float32),
        ))
    return dict(queries=queries, layers=layers)


# ---------------------------------------------------------------------------
# demo
# ---------------------------------------------------------------------------

if __name__ == "__main__":
    B, L, D, H = 2, 8, 64, 8          # module defaults: hidden=64, heads=8
    query_num, layer_num = 1, 2
    S = L + query_num

    key = jax.random.PRNGKey(0)
    kp, kx, km = jax.random.split(key, 3)
    params = init_params(kp, query_num, layer_num, D)
    x = jax.random.normal(kx, (B, L, D), dtype=jnp.float32)
    # BERT-style additive key-padding mask, broadcastable against (B, H, S, S)
    mask = jnp.where(jax.random.uniform(km, (B, 1, 1, S)) < 0.25,
                     -1e4, 0.0).astype(jnp.float32)

    fwd_fused = jax.jit(functools.partial(mmformer_pallas, num_heads=H,
                                          use_fused=True))
    fwd_tiled = jax.jit(functools.partial(mmformer_pallas, num_heads=H,
                                          use_fused=False))
    fwd_ref = functools.partial(mmformer_ref, num_heads=H)

    y_f = fwd_fused(params, x)               # fused path, no mask
    y_fm = fwd_fused(params, x, mask)        # fused path, masked
    y_t = fwd_tiled(params, x)               # tiled fallback path, no mask
    y_tm = fwd_tiled(params, x, mask)        # tiled fallback path, masked
    jax.block_until_ready((y_f, y_fm, y_t, y_tm))

    y_ref = fwd_ref(params, x)
    y_m_ref = fwd_ref(params, x, mask)

    for got, want in ((y_f, y_ref), (y_fm, y_m_ref),
                      (y_t, y_ref), (y_tm, y_m_ref)):
        assert got.shape == (B, S, D) and got.dtype == x.dtype
        assert bool(jnp.all(jnp.isfinite(got)))
        assert jnp.allclose(got, want, atol=1e-2, rtol=1e-2), \
            float(jnp.max(jnp.abs(got - want)))

    print("KERNEL_OK")
</pallas_src>

<mosaic_0001>
module attributes {stable_mosaic.version = 11 : i64} {
  func.func @_fused_layer_kernel(%arg0: i32, %arg1: memref<1x9x64xf32, #tpu.memory_space<vmem>>, %arg2: memref<64x192xf32, #tpu.memory_space<vmem>>, %arg3: memref<1x192xf32, #tpu.memory_space<vmem>>, %arg4: memref<64x64xf32, #tpu.memory_space<vmem>>, %arg5: memref<1x64xf32, #tpu.memory_space<vmem>>, %arg6: memref<1x64xf32, #tpu.memory_space<vmem>>, %arg7: memref<1x64xf32, #tpu.memory_space<vmem>>, %arg8: memref<1x9x64xf32, #tpu.memory_space<vmem>>) attributes {dimension_semantics = [#tpu.dimension_semantics<parallel>], iteration_bounds = array<i64: 2>, scalar_prefetch = 0 : i64, scratch_operands = 0 : i64, tpu.core_type = #tpu.core_type<tc>, window_params = [{transform_indices = @transform_0, window_bounds = array<i64: 1, 9, 64>}, {pipeline_mode = #tpu.pipeline_mode<synchronous>, transform_indices = @transform_1, window_bounds = array<i64: 64, 192>}, {pipeline_mode = #tpu.pipeline_mode<synchronous>, transform_indices = @transform_2, window_bounds = array<i64: 1, 192>}, {pipeline_mode = #tpu.pipeline_mode<synchronous>, transform_indices = @transform_3, window_bounds = array<i64: 64, 64>}, {pipeline_mode = #tpu.pipeline_mode<synchronous>, transform_indices = @transform_4, window_bounds = array<i64: 1, 64>}, {pipeline_mode = #tpu.pipeline_mode<synchronous>, transform_indices = @transform_5, window_bounds = array<i64: 1, 64>}, {pipeline_mode = #tpu.pipeline_mode<synchronous>, transform_indices = @transform_6, window_bounds = array<i64: 1, 64>}, {transform_indices = @transform_7, window_bounds = array<i64: 1, 9, 64>}]} {
    %c0 = arith.constant 0 : index
    %c0_0 = arith.constant 0 : index
    %c0_1 = arith.constant 0 : index
    %0 = vector.load %arg1[%c0, %c0_0, %c0_1] : memref<1x9x64xf32, #tpu.memory_space<vmem>>, vector<1x9x64xf32>
    %1 = vector.shape_cast %0 : vector<1x9x64xf32> to vector<9x64xf32>
    %c0_2 = arith.constant 0 : index
    %c0_3 = arith.constant 0 : index
    %2 = vector.load %arg2[%c0_2, %c0_3] : memref<64x192xf32, #tpu.memory_space<vmem>>, vector<64x192xf32>
    %c0_4 = arith.constant 0 : index
    %c0_5 = arith.constant 0 : index
    %3 = vector.load %arg3[%c0_4, %c0_5] : memref<1x192xf32, #tpu.memory_space<vmem>>, vector<1x192xf32>
    %c0_6 = arith.constant 0 : index
    %c0_7 = arith.constant 0 : index
    %4 = vector.load %arg4[%c0_6, %c0_7] : memref<64x64xf32, #tpu.memory_space<vmem>>, vector<64x64xf32>
    %c0_8 = arith.constant 0 : index
    %c0_9 = arith.constant 0 : index
    %5 = vector.load %arg5[%c0_8, %c0_9] : memref<1x64xf32, #tpu.memory_space<vmem>>, vector<1x64xf32>
    %c0_10 = arith.constant 0 : index
    %c0_11 = arith.constant 0 : index
    %6 = vector.load %arg6[%c0_10, %c0_11] : memref<1x64xf32, #tpu.memory_space<vmem>>, vector<1x64xf32>
    %c0_12 = arith.constant 0 : index
    %c0_13 = arith.constant 0 : index
    %7 = vector.load %arg7[%c0_12, %c0_13] : memref<1x64xf32, #tpu.memory_space<vmem>>, vector<1x64xf32>
    %8 = arith.truncf %1 : vector<9x64xf32> to vector<9x64xbf16>
    %9 = arith.truncf %2 : vector<64x192xf32> to vector<64x192xbf16>
    %cst = arith.constant dense<0.000000e+00> : vector<9x192xf32>
    %10 = tpu.matmul %8, %9, %cst {dimension_numbers = #tpu.dot_dimension_numbers<[1], [0], [0], [1], [0, 0, 1, 1], [], []>} : vector<9x64xbf16>, vector<64x192xbf16>, vector<9x192xf32> -> vector<9x192xf32>
    %11 = vector.broadcast %3 : vector<1x192xf32> to vector<9x192xf32>
    %12 = arith.addf %10, %11 : vector<9x192xf32>
    %13 = vector.extract_strided_slice %12 {offsets = [0, 0], sizes = [9, 8], strides = [1, 1]} : vector<9x192xf32> to vector<9x8xf32>
    %cst_14 = arith.constant 0.353553176 : f32
    %14 = vector.broadcast %cst_14 : f32 to vector<9x8xf32>
    %15 = arith.mulf %13, %14 : vector<9x8xf32>
    %16 = arith.truncf %15 : vector<9x8xf32> to vector<9x8xbf16>
    %17 = vector.extract_strided_slice %12 {offsets = [0, 64], sizes = [9, 8], strides = [1, 1]} : vector<9x192xf32> to vector<9x8xf32>
    %18 = arith.truncf %17 : vector<9x8xf32> to vector<9x8xbf16>
    %19 = vector.extract_strided_slice %12 {offsets = [0, 128], sizes = [9, 8], strides = [1, 1]} : vector<9x192xf32> to vector<9x8xf32>
    %20 = arith.truncf %19 : vector<9x8xf32> to vector<9x8xbf16>
    %cst_15 = arith.constant dense<0.000000e+00> : vector<9x9xf32>
    %21 = tpu.matmul %16, %18, %cst_15 {dimension_numbers = #tpu.dot_dimension_numbers<[1], [1], [0], [0], [0, 0, 1, 0], [], []>} : vector<9x8xbf16>, vector<9x8xbf16>, vector<9x9xf32> -> vector<9x9xf32>
    %cst_16 = arith.constant dense<0xFF800000> : vector<9xf32>
    %22 = vector.multi_reduction <maximumf>, %21, %cst_16 [1] : vector<9x9xf32> to vector<9xf32>
    %23 = vector.shape_cast %22 : vector<9xf32> to vector<9x1xf32>
    %24 = vector.broadcast %23 : vector<9x1xf32> to vector<9x9xf32>
    %25 = arith.subf %21, %24 : vector<9x9xf32>
    %26 = math.exp %25 : vector<9x9xf32>
    %cst_17 = arith.constant dense<0.000000e+00> : vector<9xf32>
    %27 = vector.multi_reduction <add>, %26, %cst_17 [1] : vector<9x9xf32> to vector<9xf32>
    %28 = vector.shape_cast %27 : vector<9xf32> to vector<9x1xf32>
    %29 = tpu.reciprocal %28 {approx = true} : vector<9x1xf32> -> vector<9x1xf32>
    %30 = vector.broadcast %29 : vector<9x1xf32> to vector<9x9xf32>
    %31 = arith.mulf %26, %30 : vector<9x9xf32>
    %32 = arith.truncf %31 : vector<9x9xf32> to vector<9x9xbf16>
    %cst_18 = arith.constant dense<0.000000e+00> : vector<9x8xf32>
    %33 = tpu.matmul %32, %20, %cst_18 {dimension_numbers = #tpu.dot_dimension_numbers<[1], [0], [0], [1], [0, 0, 1, 1], [], []>} : vector<9x9xbf16>, vector<9x8xbf16>, vector<9x8xf32> -> vector<9x8xf32>
    %34 = vector.extract_strided_slice %12 {offsets = [0, 8], sizes = [9, 8], strides = [1, 1]} : vector<9x192xf32> to vector<9x8xf32>
    %cst_19 = arith.constant 0.353553176 : f32
    %35 = vector.broadcast %cst_19 : f32 to vector<9x8xf32>
    %36 = arith.mulf %34, %35 : vector<9x8xf32>
    %37 = arith.truncf %36 : vector<9x8xf32> to vector<9x8xbf16>
    %38 = vector.extract_strided_slice %12 {offsets = [0, 72], sizes = [9, 8], strides = [1, 1]} : vector<9x192xf32> to vector<9x8xf32>
    %39 = arith.truncf %38 : vector<9x8xf32> to vector<9x8xbf16>
    %40 = vector.extract_strided_slice %12 {offsets = [0, 136], sizes = [9, 8], strides = [1, 1]} : vector<9x192xf32> to vector<9x8xf32>
    %41 = arith.truncf %40 : vector<9x8xf32> to vector<9x8xbf16>
    %cst_20 = arith.constant dense<0.000000e+00> : vector<9x9xf32>
    %42 = tpu.matmul %37, %39, %cst_20 {dimension_numbers = #tpu.dot_dimension_numbers<[1], [1], [0], [0], [0, 0, 1, 0], [], []>} : vector<9x8xbf16>, vector<9x8xbf16>, vector<9x9xf32> -> vector<9x9xf32>
    %cst_21 = arith.constant dense<0xFF800000> : vector<9xf32>
    %43 = vector.multi_reduction <maximumf>, %42, %cst_21 [1] : vector<9x9xf32> to vector<9xf32>
    %44 = vector.shape_cast %43 : vector<9xf32> to vector<9x1xf32>
    %45 = vector.broadcast %44 : vector<9x1xf32> to vector<9x9xf32>
    %46 = arith.subf %42, %45 : vector<9x9xf32>
    %47 = math.exp %46 : vector<9x9xf32>
    %cst_22 = arith.constant dense<0.000000e+00> : vector<9xf32>
    %48 = vector.multi_reduction <add>, %47, %cst_22 [1] : vector<9x9xf32> to vector<9xf32>
    %49 = vector.shape_cast %48 : vector<9xf32> to vector<9x1xf32>
    %50 = tpu.reciprocal %49 {approx = true} : vector<9x1xf32> -> vector<9x1xf32>
    %51 = vector.broadcast %50 : vector<9x1xf32> to vector<9x9xf32>
    %52 = arith.mulf %47, %51 : vector<9x9xf32>
    %53 = arith.truncf %52 : vector<9x9xf32> to vector<9x9xbf16>
    %cst_23 = arith.constant dense<0.000000e+00> : vector<9x8xf32>
    %54 = tpu.matmul %53, %41, %cst_23 {dimension_numbers = #tpu.dot_dimension_numbers<[1], [0], [0], [1], [0, 0, 1, 1], [], []>} : vector<9x9xbf16>, vector<9x8xbf16>, vector<9x8xf32> -> vector<9x8xf32>
    %55 = vector.extract_strided_slice %12 {offsets = [0, 16], sizes = [9, 8], strides = [1, 1]} : vector<9x192xf32> to vector<9x8xf32>
    %cst_24 = arith.constant 0.353553176 : f32
    %56 = vector.broadcast %cst_24 : f32 to vector<9x8xf32>
    %57 = arith.mulf %55, %56 : vector<9x8xf32>
    %58 = arith.truncf %57 : vector<9x8xf32> to vector<9x8xbf16>
    %59 = vector.extract_strided_slice %12 {offsets = [0, 80], sizes = [9, 8], strides = [1, 1]} : vector<9x192xf32> to vector<9x8xf32>
    %60 = arith.truncf %59 : vector<9x8xf32> to vector<9x8xbf16>
    %61 = vector.extract_strided_slice %12 {offsets = [0, 144], sizes = [9, 8], strides = [1, 1]} : vector<9x192xf32> to vector<9x8xf32>
    %62 = arith.truncf %61 : vector<9x8xf32> to vector<9x8xbf16>
    %cst_25 = arith.constant dense<0.000000e+00> : vector<9x9xf32>
    %63 = tpu.matmul %58, %60, %cst_25 {dimension_numbers = #tpu.dot_dimension_numbers<[1], [1], [0], [0], [0, 0, 1, 0], [], []>} : vector<9x8xbf16>, vector<9x8xbf16>, vector<9x9xf32> -> vector<9x9xf32>
    %cst_26 = arith.constant dense<0xFF800000> : vector<9xf32>
    %64 = vector.multi_reduction <maximumf>, %63, %cst_26 [1] : vector<9x9xf32> to vector<9xf32>
    %65 = vector.shape_cast %64 : vector<9xf32> to vector<9x1xf32>
    %66 = vector.broadcast %65 : vector<9x1xf32> to vector<9x9xf32>
    %67 = arith.subf %63, %66 : vector<9x9xf32>
    %68 = math.exp %67 : vector<9x9xf32>
    %cst_27 = arith.constant dense<0.000000e+00> : vector<9xf32>
    %69 = vector.multi_reduction <add>, %68, %cst_27 [1] : vector<9x9xf32> to vector<9xf32>
    %70 = vector.shape_cast %69 : vector<9xf32> to vector<9x1xf32>
    %71 = tpu.reciprocal %70 {approx = true} : vector<9x1xf32> -> vector<9x1xf32>
    %72 = vector.broadcast %71 : vector<9x1xf32> to vector<9x9xf32>
    %73 = arith.mulf %68, %72 : vector<9x9xf32>
    %74 = arith.truncf %73 : vector<9x9xf32> to vector<9x9xbf16>
    %cst_28 = arith.constant dense<0.000000e+00> : vector<9x8xf32>
    %75 = tpu.matmul %74, %62, %cst_28 {dimension_numbers = #tpu.dot_dimension_numbers<[1], [0], [0], [1], [0, 0, 1, 1], [], []>} : vector<9x9xbf16>, vector<9x8xbf16>, vector<9x8xf32> -> vector<9x8xf32>
    %76 = vector.extract_strided_slice %12 {offsets = [0, 24], sizes = [9, 8], strides = [1, 1]} : vector<9x192xf32> to vector<9x8xf32>
    %cst_29 = arith.constant 0.353553176 : f32
    %77 = vector.broadcast %cst_29 : f32 to vector<9x8xf32>
    %78 = arith.mulf %76, %77 : vector<9x8xf32>
    %79 = arith.truncf %78 : vector<9x8xf32> to vector<9x8xbf16>
    %80 = vector.extract_strided_slice %12 {offsets = [0, 88], sizes = [9, 8], strides = [1, 1]} : vector<9x192xf32> to vector<9x8xf32>
    %81 = arith.truncf %80 : vector<9x8xf32> to vector<9x8xbf16>
    %82 = vector.extract_strided_slice %12 {offsets = [0, 152], sizes = [9, 8], strides = [1, 1]} : vector<9x192xf32> to vector<9x8xf32>
    %83 = arith.truncf %82 : vector<9x8xf32> to vector<9x8xbf16>
    %cst_30 = arith.constant dense<0.000000e+00> : vector<9x9xf32>
    %84 = tpu.matmul %79, %81, %cst_30 {dimension_numbers = #tpu.dot_dimension_numbers<[1], [1], [0], [0], [0, 0, 1, 0], [], []>} : vector<9x8xbf16>, vector<9x8xbf16>, vector<9x9xf32> -> vector<9x9xf32>
    %cst_31 = arith.constant dense<0xFF800000> : vector<9xf32>
    %85 = vector.multi_reduction <maximumf>, %84, %cst_31 [1] : vector<9x9xf32> to vector<9xf32>
    %86 = vector.shape_cast %85 : vector<9xf32> to vector<9x1xf32>
    %87 = vector.broadcast %86 : vector<9x1xf32> to vector<9x9xf32>
    %88 = arith.subf %84, %87 : vector<9x9xf32>
    %89 = math.exp %88 : vector<9x9xf32>
    %cst_32 = arith.constant dense<0.000000e+00> : vector<9xf32>
    %90 = vector.multi_reduction <add>, %89, %cst_32 [1] : vector<9x9xf32> to vector<9xf32>
    %91 = vector.shape_cast %90 : vector<9xf32> to vector<9x1xf32>
    %92 = tpu.reciprocal %91 {approx = true} : vector<9x1xf32> -> vector<9x1xf32>
    %93 = vector.broadcast %92 : vector<9x1xf32> to vector<9x9xf32>
    %94 = arith.mulf %89, %93 : vector<9x9xf32>
    %95 = arith.truncf %94 : vector<9x9xf32> to vector<9x9xbf16>
    %cst_33 = arith.constant dense<0.000000e+00> : vector<9x8xf32>
    %96 = tpu.matmul %95, %83, %cst_33 {dimension_numbers = #tpu.dot_dimension_numbers<[1], [0], [0], [1], [0, 0, 1, 1], [], []>} : vector<9x9xbf16>, vector<9x8xbf16>, vector<9x8xf32> -> vector<9x8xf32>
    %97 = vector.extract_strided_slice %12 {offsets = [0, 32], sizes = [9, 8], strides = [1, 1]} : vector<9x192xf32> to vector<9x8xf32>
    %cst_34 = arith.constant 0.353553176 : f32
    %98 = vector.broadcast %cst_34 : f32 to vector<9x8xf32>
    %99 = arith.mulf %97, %98 : vector<9x8xf32>
    %100 = arith.truncf %99 : vector<9x8xf32> to vector<9x8xbf16>
    %101 = vector.extract_strided_slice %12 {offsets = [0, 96], sizes = [9, 8], strides = [1, 1]} : vector<9x192xf32> to vector<9x8xf32>
    %102 = arith.truncf %101 : vector<9x8xf32> to vector<9x8xbf16>
    %103 = vector.extract_strided_slice %12 {offsets = [0, 160], sizes = [9, 8], strides = [1, 1]} : vector<9x192xf32> to vector<9x8xf32>
    %104 = arith.truncf %103 : vector<9x8xf32> to vector<9x8xbf16>
    %cst_35 = arith.constant dense<0.000000e+00> : vector<9x9xf32>
    %105 = tpu.matmul %100, %102, %cst_35 {dimension_numbers = #tpu.dot_dimension_numbers<[1], [1], [0], [0], [0, 0, 1, 0], [], []>} : vector<9x8xbf16>, vector<9x8xbf16>, vector<9x9xf32> -> vector<9x9xf32>
    %cst_36 = arith.constant dense<0xFF800000> : vector<9xf32>
    %106 = vector.multi_reduction <maximumf>, %105, %cst_36 [1] : vector<9x9xf32> to vector<9xf32>
    %107 = vector.shape_cast %106 : vector<9xf32> to vector<9x1xf32>
    %108 = vector.broadcast %107 : vector<9x1xf32> to vector<9x9xf32>
    %109 = arith.subf %105, %108 : vector<9x9xf32>
    %110 = math.exp %109 : vector<9x9xf32>
    %cst_37 = arith.constant dense<0.000000e+00> : vector<9xf32>
    %111 = vector.multi_reduction <add>, %110, %cst_37 [1] : vector<9x9xf32> to vector<9xf32>
    %112 = vector.shape_cast %111 : vector<9xf32> to vector<9x1xf32>
    %113 = tpu.reciprocal %112 {approx = true} : vector<9x1xf32> -> vector<9x1xf32>
    %114 = vector.broadcast %113 : vector<9x1xf32> to vector<9x9xf32>
    %115 = arith.mulf %110, %114 : vector<9x9xf32>
    %116 = arith.truncf %115 : vector<9x9xf32> to vector<9x9xbf16>
    %cst_38 = arith.constant dense<0.000000e+00> : vector<9x8xf32>
    %117 = tpu.matmul %116, %104, %cst_38 {dimension_numbers = #tpu.dot_dimension_numbers<[1], [0], [0], [1], [0, 0, 1, 1], [], []>} : vector<9x9xbf16>, vector<9x8xbf16>, vector<9x8xf32> -> vector<9x8xf32>
    %118 = vector.extract_strided_slice %12 {offsets = [0, 40], sizes = [9, 8], strides = [1, 1]} : vector<9x192xf32> to vector<9x8xf32>
    %cst_39 = arith.constant 0.353553176 : f32
    %119 = vector.broadcast %cst_39 : f32 to vector<9x8xf32>
    %120 = arith.mulf %118, %119 : vector<9x8xf32>
    %121 = arith.truncf %120 : vector<9x8xf32> to vector<9x8xbf16>
    %122 = vector.extract_strided_slice %12 {offsets = [0, 104], sizes = [9, 8], strides = [1, 1]} : vector<9x192xf32> to vector<9x8xf32>
    %123 = arith.truncf %122 : vector<9x8xf32> to vector<9x8xbf16>
    %124 = vector.extract_strided_slice %12 {offsets = [0, 168], sizes = [9, 8], strides = [1, 1]} : vector<9x192xf32> to vector<9x8xf32>
    %125 = arith.truncf %124 : vector<9x8xf32> to vector<9x8xbf16>
    %cst_40 = arith.constant dense<0.000000e+00> : vector<9x9xf32>
    %126 = tpu.matmul %121, %123, %cst_40 {dimension_numbers = #tpu.dot_dimension_numbers<[1], [1], [0], [0], [0, 0, 1, 0], [], []>} : vector<9x8xbf16>, vector<9x8xbf16>, vector<9x9xf32> -> vector<9x9xf32>
    %cst_41 = arith.constant dense<0xFF800000> : vector<9xf32>
    %127 = vector.multi_reduction <maximumf>, %126, %cst_41 [1] : vector<9x9xf32> to vector<9xf32>
    %128 = vector.shape_cast %127 : vector<9xf32> to vector<9x1xf32>
    %129 = vector.broadcast %128 : vector<9x1xf32> to vector<9x9xf32>
    %130 = arith.subf %126, %129 : vector<9x9xf32>
    %131 = math.exp %130 : vector<9x9xf32>
    %cst_42 = arith.constant dense<0.000000e+00> : vector<9xf32>
    %132 = vector.multi_reduction <add>, %131, %cst_42 [1] : vector<9x9xf32> to vector<9xf32>
    %133 = vector.shape_cast %132 : vector<9xf32> to vector<9x1xf32>
    %134 = tpu.reciprocal %133 {approx = true} : vector<9x1xf32> -> vector<9x1xf32>
    %135 = vector.broadcast %134 : vector<9x1xf32> to vector<9x9xf32>
    %136 = arith.mulf %131, %135 : vector<9x9xf32>
    %137 = arith.truncf %136 : vector<9x9xf32> to vector<9x9xbf16>
    %cst_43 = arith.constant dense<0.000000e+00> : vector<9x8xf32>
    %138 = tpu.matmul %137, %125, %cst_43 {dimension_numbers = #tpu.dot_dimension_numbers<[1], [0], [0], [1], [0, 0, 1, 1], [], []>} : vector<9x9xbf16>, vector<9x8xbf16>, vector<9x8xf32> -> vector<9x8xf32>
    %139 = vector.extract_strided_slice %12 {offsets = [0, 48], sizes = [9, 8], strides = [1, 1]} : vector<9x192xf32> to vector<9x8xf32>
    %cst_44 = arith.constant 0.353553176 : f32
    %140 = vector.broadcast %cst_44 : f32 to vector<9x8xf32>
    %141 = arith.mulf %139, %140 : vector<9x8xf32>
    %142 = arith.truncf %141 : vector<9x8xf32> to vector<9x8xbf16>
    %143 = vector.extract_strided_slice %12 {offsets = [0, 112], sizes = [9, 8], strides = [1, 1]} : vector<9x192xf32> to vector<9x8xf32>
    %144 = arith.truncf %143 : vector<9x8xf32> to vector<9x8xbf16>
    %145 = vector.extract_strided_slice %12 {offsets = [0, 176], sizes = [9, 8], strides = [1, 1]} : vector<9x192xf32> to vector<9x8xf32>
    %146 = arith.truncf %145 : vector<9x8xf32> to vector<9x8xbf16>
    %cst_45 = arith.constant dense<0.000000e+00> : vector<9x9xf32>
    %147 = tpu.matmul %142, %144, %cst_45 {dimension_numbers = #tpu.dot_dimension_numbers<[1], [1], [0], [0], [0, 0, 1, 0], [], []>} : vector<9x8xbf16>, vector<9x8xbf16>, vector<9x9xf32> -> vector<9x9xf32>
    %cst_46 = arith.constant dense<0xFF800000> : vector<9xf32>
    %148 = vector.multi_reduction <maximumf>, %147, %cst_46 [1] : vector<9x9xf32> to vector<9xf32>
    %149 = vector.shape_cast %148 : vector<9xf32> to vector<9x1xf32>
    %150 = vector.broadcast %149 : vector<9x1xf32> to vector<9x9xf32>
    %151 = arith.subf %147, %150 : vector<9x9xf32>
    %152 = math.exp %151 : vector<9x9xf32>
    %cst_47 = arith.constant dense<0.000000e+00> : vector<9xf32>
    %153 = vector.multi_reduction <add>, %152, %cst_47 [1] : vector<9x9xf32> to vector<9xf32>
    %154 = vector.shape_cast %153 : vector<9xf32> to vector<9x1xf32>
    %155 = tpu.reciprocal %154 {approx = true} : vector<9x1xf32> -> vector<9x1xf32>
    %156 = vector.broadcast %155 : vector<9x1xf32> to vector<9x9xf32>
    %157 = arith.mulf %152, %156 : vector<9x9xf32>
    %158 = arith.truncf %157 : vector<9x9xf32> to vector<9x9xbf16>
    %cst_48 = arith.constant dense<0.000000e+00> : vector<9x8xf32>
    %159 = tpu.matmul %158, %146, %cst_48 {dimension_numbers = #tpu.dot_dimension_numbers<[1], [0], [0], [1], [0, 0, 1, 1], [], []>} : vector<9x9xbf16>, vector<9x8xbf16>, vector<9x8xf32> -> vector<9x8xf32>
    %160 = vector.extract_strided_slice %12 {offsets = [0, 56], sizes = [9, 8], strides = [1, 1]} : vector<9x192xf32> to vector<9x8xf32>
    %cst_49 = arith.constant 0.353553176 : f32
    %161 = vector.broadcast %cst_49 : f32 to vector<9x8xf32>
    %162 = arith.mulf %160, %161 : vector<9x8xf32>
    %163 = arith.truncf %162 : vector<9x8xf32> to vector<9x8xbf16>
    %164 = vector.extract_strided_slice %12 {offsets = [0, 120], sizes = [9, 8], strides = [1, 1]} : vector<9x192xf32> to vector<9x8xf32>
    %165 = arith.truncf %164 : vector<9x8xf32> to vector<9x8xbf16>
    %166 = vector.extract_strided_slice %12 {offsets = [0, 184], sizes = [9, 8], strides = [1, 1]} : vector<9x192xf32> to vector<9x8xf32>
    %167 = arith.truncf %166 : vector<9x8xf32> to vector<9x8xbf16>
    %cst_50 = arith.constant dense<0.000000e+00> : vector<9x9xf32>
    %168 = tpu.matmul %163, %165, %cst_50 {dimension_numbers = #tpu.dot_dimension_numbers<[1], [1], [0], [0], [0, 0, 1, 0], [], []>} : vector<9x8xbf16>, vector<9x8xbf16>, vector<9x9xf32> -> vector<9x9xf32>
    %cst_51 = arith.constant dense<0xFF800000> : vector<9xf32>
    %169 = vector.multi_reduction <maximumf>, %168, %cst_51 [1] : vector<9x9xf32> to vector<9xf32>
    %170 = vector.shape_cast %169 : vector<9xf32> to vector<9x1xf32>
    %171 = vector.broadcast %170 : vector<9x1xf32> to vector<9x9xf32>
    %172 = arith.subf %168, %171 : vector<9x9xf32>
    %173 = math.exp %172 : vector<9x9xf32>
    %cst_52 = arith.constant dense<0.000000e+00> : vector<9xf32>
    %174 = vector.multi_reduction <add>, %173, %cst_52 [1] : vector<9x9xf32> to vector<9xf32>
    %175 = vector.shape_cast %174 : vector<9xf32> to vector<9x1xf32>
    %176 = tpu.reciprocal %175 {approx = true} : vector<9x1xf32> -> vector<9x1xf32>
    %177 = vector.broadcast %176 : vector<9x1xf32> to vector<9x9xf32>
    %178 = arith.mulf %173, %177 : vector<9x9xf32>
    %179 = arith.truncf %178 : vector<9x9xf32> to vector<9x9xbf16>
    %cst_53 = arith.constant dense<0.000000e+00> : vector<9x8xf32>
    %180 = tpu.matmul %179, %167, %cst_53 {dimension_numbers = #tpu.dot_dimension_numbers<[1], [0], [0], [1], [0, 0, 1, 1], [], []>} : vector<9x9xbf16>, vector<9x8xbf16>, vector<9x8xf32> -> vector<9x8xf32>
    %181 = tpu.concatenate %33, %54, %75, %96, %117, %138, %159, %180 in 1 : vector<9x8xf32>, vector<9x8xf32>, vector<9x8xf32>, vector<9x8xf32>, vector<9x8xf32>, vector<9x8xf32>, vector<9x8xf32>, vector<9x8xf32> -> vector<9x64xf32>
    %182 = arith.truncf %181 : vector<9x64xf32> to vector<9x64xbf16>
    %183 = arith.truncf %4 : vector<64x64xf32> to vector<64x64xbf16>
    %cst_54 = arith.constant dense<0.000000e+00> : vector<9x64xf32>
    %184 = tpu.matmul %182, %183, %cst_54 {dimension_numbers = #tpu.dot_dimension_numbers<[1], [0], [0], [1], [0, 0, 1, 1], [], []>} : vector<9x64xbf16>, vector<64x64xbf16>, vector<9x64xf32> -> vector<9x64xf32>
    %185 = vector.broadcast %5 : vector<1x64xf32> to vector<9x64xf32>
    %186 = arith.addf %184, %185 : vector<9x64xf32>
    %187 = arith.addf %186, %1 : vector<9x64xf32>
    %cst_55 = arith.constant dense<0.000000e+00> : vector<9xf32>
    %188 = vector.multi_reduction <add>, %187, %cst_55 [1] : vector<9x64xf32> to vector<9xf32>
    %189 = vector.shape_cast %188 : vector<9xf32> to vector<9x1xf32>
    %cst_56 = arith.constant 6.400000e+01 : f32
    %190 = vector.broadcast %cst_56 : f32 to vector<9x1xf32>
    %191 = arith.divf %189, %190 : vector<9x1xf32>
    %192 = vector.broadcast %191 : vector<9x1xf32> to vector<9x64xf32>
    %193 = arith.subf %187, %192 : vector<9x64xf32>
    %194 = vector.broadcast %191 : vector<9x1xf32> to vector<9x64xf32>
    %195 = arith.subf %187, %194 : vector<9x64xf32>
    %196 = arith.mulf %193, %195 : vector<9x64xf32>
    %cst_57 = arith.constant dense<0.000000e+00> : vector<9xf32>
    %197 = vector.multi_reduction <add>, %196, %cst_57 [1] : vector<9x64xf32> to vector<9xf32>
    %198 = vector.shape_cast %197 : vector<9xf32> to vector<9x1xf32>
    %cst_58 = arith.constant 6.400000e+01 : f32
    %199 = vector.broadcast %cst_58 : f32 to vector<9x1xf32>
    %200 = arith.divf %198, %199 : vector<9x1xf32>
    %201 = vector.broadcast %191 : vector<9x1xf32> to vector<9x64xf32>
    %202 = arith.subf %187, %201 : vector<9x64xf32>
    %cst_59 = arith.constant 9.99999974E-6 : f32
    %203 = vector.broadcast %cst_59 : f32 to vector<9x1xf32>
    %204 = arith.addf %200, %203 : vector<9x1xf32>
    %205 = math.rsqrt %204 : vector<9x1xf32>
    %206 = vector.broadcast %205 : vector<9x1xf32> to vector<9x64xf32>
    %207 = arith.mulf %202, %206 : vector<9x64xf32>
    %208 = vector.broadcast %6 : vector<1x64xf32> to vector<9x64xf32>
    %209 = arith.mulf %207, %208 : vector<9x64xf32>
    %210 = vector.broadcast %7 : vector<1x64xf32> to vector<9x64xf32>
    %211 = arith.addf %209, %210 : vector<9x64xf32>
    %c0_60 = arith.constant 0 : index
    %c0_61 = arith.constant 0 : index
    %c0_62 = arith.constant 0 : index
    %212 = vector.load %arg8[%c0_60, %c0_61, %c0_62] : memref<1x9x64xf32, #tpu.memory_space<vmem>>, vector<1x9x64xf32>
    %213 = vector.shape_cast %212 : vector<1x9x64xf32> to vector<9x64xf32>
    %214 = vector.shape_cast %211 : vector<9x64xf32> to vector<1x9x64xf32>
    tpu.vector_store %arg8[%c0_60, %c0_61, %c0_62], %214 {strides = array<i32>} : memref<1x9x64xf32, #tpu.memory_space<vmem>>, vector<1x9x64xf32>,
    return
  }
  func.func @transform_0(%arg0: i32) -> (i32, i32, i32) {
    %c0_i32 = arith.constant 0 : i32
    %c0_i32_0 = arith.constant 0 : i32
    %c0_i32_1 = arith.constant 0 : i32
    return %arg0, %c0_i32, %c0_i32_0 : i32, i32, i32
  }
  func.func @transform_1(%arg0: i32) -> (i32, i32) {
    %c0_i32 = arith.constant 0 : i32
    %c0_i32_0 = arith.constant 0 : i32
    %c0_i32_1 = arith.constant 0 : i32
    return %c0_i32, %c0_i32_0 : i32, i32
  }
  func.func @transform_2(%arg0: i32) -> (i32, i32) {
    %c0_i32 = arith.constant 0 : i32
    %c0_i32_0 = arith.constant 0 : i32
    %c0_i32_1 = arith.constant 0 : i32
    return %c0_i32, %c0_i32_0 : i32, i32
  }
  func.func @transform_3(%arg0: i32) -> (i32, i32) {
    %c0_i32 = arith.constant 0 : i32
    %c0_i32_0 = arith.constant 0 : i32
    %c0_i32_1 = arith.constant 0 : i32
    return %c0_i32, %c0_i32_0 : i32, i32
  }
  func.func @transform_4(%arg0: i32) -> (i32, i32) {
    %c0_i32 = arith.constant 0 : i32
    %c0_i32_0 = arith.constant 0 : i32
    %c0_i32_1 = arith.constant 0 : i32
    return %c0_i32, %c0_i32_0 : i32, i32
  }
  func.func @transform_5(%arg0: i32) -> (i32, i32) {
    %c0_i32 = arith.constant 0 : i32
    %c0_i32_0 = arith.constant 0 : i32
    %c0_i32_1 = arith.constant 0 : i32
    return %c0_i32, %c0_i32_0 : i32, i32
  }
  func.func @transform_6(%arg0: i32) -> (i32, i32) {
    %c0_i32 = arith.constant 0 : i32
    %c0_i32_0 = arith.constant 0 : i32
    %c0_i32_1 = arith.constant 0 : i32
    return %c0_i32, %c0_i32_0 : i32, i32
  }
  func.func @transform_7(%arg0: i32) -> (i32, i32, i32) {
    %c0_i32 = arith.constant 0 : i32
    %c0_i32_0 = arith.constant 0 : i32
    %c0_i32_1 = arith.constant 0 : i32
    return %arg0, %c0_i32, %c0_i32_0 : i32, i32, i32
  }
}

module attributes {stable_mosaic.version = 11 : i64} {
  func.func @_fused_layer_kernel(%arg0: i32, %arg1: memref<1x9x64xf32, #tpu.memory_space<vmem>>, %arg2: memref<64x192xf32, #tpu.memory_space<vmem>>, %arg3: memref<1x192xf32, #tpu.memory_space<vmem>>, %arg4: memref<64x64xf32, #tpu.memory_space<vmem>>, %arg5: memref<1x64xf32, #tpu.memory_space<vmem>>, %arg6: memref<1x64xf32, #tpu.memory_space<vmem>>, %arg7: memref<1x64xf32, #tpu.memory_space<vmem>>, %arg8: memref<1x9x64xf32, #tpu.memory_space<vmem>>) attributes {dimension_semantics = [#tpu.dimension_semantics<parallel>], iteration_bounds = array<i64: 2>, scalar_prefetch = 0 : i64, scratch_operands = 0 : i64, tpu.core_type = #tpu.core_type<tc>, window_params = [{transform_indices = @transform_0, window_bounds = array<i64: 1, 9, 64>}, {pipeline_mode = #tpu.pipeline_mode<synchronous>, transform_indices = @transform_1, window_bounds = array<i64: 64, 192>}, {pipeline_mode = #tpu.pipeline_mode<synchronous>, transform_indices = @transform_2, window_bounds = array<i64: 1, 192>}, {pipeline_mode = #tpu.pipeline_mode<synchronous>, transform_indices = @transform_3, window_bounds = array<i64: 64, 64>}, {pipeline_mode = #tpu.pipeline_mode<synchronous>, transform_indices = @transform_4, window_bounds = array<i64: 1, 64>}, {pipeline_mode = #tpu.pipeline_mode<synchronous>, transform_indices = @transform_5, window_bounds = array<i64: 1, 64>}, {pipeline_mode = #tpu.pipeline_mode<synchronous>, transform_indices = @transform_6, window_bounds = array<i64: 1, 64>}, {transform_indices = @transform_7, window_bounds = array<i64: 1, 9, 64>}]} {
    %c0 = arith.constant 0 : index
    %c0_0 = arith.constant 0 : index
    %c0_1 = arith.constant 0 : index
    %0 = vector.load %arg1[%c0, %c0_0, %c0_1] : memref<1x9x64xf32, #tpu.memory_space<vmem>>, vector<1x9x64xf32>
    %1 = vector.shape_cast %0 : vector<1x9x64xf32> to vector<9x64xf32>
    %c0_2 = arith.constant 0 : index
    %c0_3 = arith.constant 0 : index
    %2 = vector.load %arg2[%c0_2, %c0_3] : memref<64x192xf32, #tpu.memory_space<vmem>>, vector<64x192xf32>
    %c0_4 = arith.constant 0 : index
    %c0_5 = arith.constant 0 : index
    %3 = vector.load %arg3[%c0_4, %c0_5] : memref<1x192xf32, #tpu.memory_space<vmem>>, vector<1x192xf32>
    %c0_6 = arith.constant 0 : index
    %c0_7 = arith.constant 0 : index
    %4 = vector.load %arg4[%c0_6, %c0_7] : memref<64x64xf32, #tpu.memory_space<vmem>>, vector<64x64xf32>
    %c0_8 = arith.constant 0 : index
    %c0_9 = arith.constant 0 : index
    %5 = vector.load %arg5[%c0_8, %c0_9] : memref<1x64xf32, #tpu.memory_space<vmem>>, vector<1x64xf32>
    %c0_10 = arith.constant 0 : index
    %c0_11 = arith.constant 0 : index
    %6 = vector.load %arg6[%c0_10, %c0_11] : memref<1x64xf32, #tpu.memory_space<vmem>>, vector<1x64xf32>
    %c0_12 = arith.constant 0 : index
    %c0_13 = arith.constant 0 : index
    %7 = vector.load %arg7[%c0_12, %c0_13] : memref<1x64xf32, #tpu.memory_space<vmem>>, vector<1x64xf32>
    %8 = arith.truncf %1 : vector<9x64xf32> to vector<9x64xbf16>
    %9 = arith.truncf %2 : vector<64x192xf32> to vector<64x192xbf16>
    %cst = arith.constant dense<0.000000e+00> : vector<9x192xf32>
    %10 = tpu.matmul %8, %9, %cst {dimension_numbers = #tpu.dot_dimension_numbers<[1], [0], [0], [1], [0, 0, 1, 1], [], []>} : vector<9x64xbf16>, vector<64x192xbf16>, vector<9x192xf32> -> vector<9x192xf32>
    %11 = vector.broadcast %3 : vector<1x192xf32> to vector<9x192xf32>
    %12 = arith.addf %10, %11 : vector<9x192xf32>
    %13 = vector.extract_strided_slice %12 {offsets = [0, 0], sizes = [9, 8], strides = [1, 1]} : vector<9x192xf32> to vector<9x8xf32>
    %cst_14 = arith.constant 0.353553176 : f32
    %14 = vector.broadcast %cst_14 : f32 to vector<9x8xf32>
    %15 = arith.mulf %13, %14 : vector<9x8xf32>
    %16 = arith.truncf %15 : vector<9x8xf32> to vector<9x8xbf16>
    %17 = vector.extract_strided_slice %12 {offsets = [0, 64], sizes = [9, 8], strides = [1, 1]} : vector<9x192xf32> to vector<9x8xf32>
    %18 = arith.truncf %17 : vector<9x8xf32> to vector<9x8xbf16>
    %19 = vector.extract_strided_slice %12 {offsets = [0, 128], sizes = [9, 8], strides = [1, 1]} : vector<9x192xf32> to vector<9x8xf32>
    %20 = arith.truncf %19 : vector<9x8xf32> to vector<9x8xbf16>
    %cst_15 = arith.constant dense<0.000000e+00> : vector<9x9xf32>
    %21 = tpu.matmul %16, %18, %cst_15 {dimension_numbers = #tpu.dot_dimension_numbers<[1], [1], [0], [0], [0, 0, 1, 0], [], []>} : vector<9x8xbf16>, vector<9x8xbf16>, vector<9x9xf32> -> vector<9x9xf32>
    %cst_16 = arith.constant dense<0xFF800000> : vector<9xf32>
    %22 = vector.multi_reduction <maximumf>, %21, %cst_16 [1] : vector<9x9xf32> to vector<9xf32>
    %23 = vector.shape_cast %22 : vector<9xf32> to vector<9x1xf32>
    %24 = vector.broadcast %23 : vector<9x1xf32> to vector<9x9xf32>
    %25 = arith.subf %21, %24 : vector<9x9xf32>
    %26 = math.exp %25 : vector<9x9xf32>
    %cst_17 = arith.constant dense<0.000000e+00> : vector<9xf32>
    %27 = vector.multi_reduction <add>, %26, %cst_17 [1] : vector<9x9xf32> to vector<9xf32>
    %28 = vector.shape_cast %27 : vector<9xf32> to vector<9x1xf32>
    %29 = tpu.reciprocal %28 {approx = true} : vector<9x1xf32> -> vector<9x1xf32>
    %30 = vector.broadcast %29 : vector<9x1xf32> to vector<9x9xf32>
    %31 = arith.mulf %26, %30 : vector<9x9xf32>
    %32 = arith.truncf %31 : vector<9x9xf32> to vector<9x9xbf16>
    %cst_18 = arith.constant dense<0.000000e+00> : vector<9x8xf32>
    %33 = tpu.matmul %32, %20, %cst_18 {dimension_numbers = #tpu.dot_dimension_numbers<[1], [0], [0], [1], [0, 0, 1, 1], [], []>} : vector<9x9xbf16>, vector<9x8xbf16>, vector<9x8xf32> -> vector<9x8xf32>
    %34 = vector.extract_strided_slice %12 {offsets = [0, 8], sizes = [9, 8], strides = [1, 1]} : vector<9x192xf32> to vector<9x8xf32>
    %cst_19 = arith.constant 0.353553176 : f32
    %35 = vector.broadcast %cst_19 : f32 to vector<9x8xf32>
    %36 = arith.mulf %34, %35 : vector<9x8xf32>
    %37 = arith.truncf %36 : vector<9x8xf32> to vector<9x8xbf16>
    %38 = vector.extract_strided_slice %12 {offsets = [0, 72], sizes = [9, 8], strides = [1, 1]} : vector<9x192xf32> to vector<9x8xf32>
    %39 = arith.truncf %38 : vector<9x8xf32> to vector<9x8xbf16>
    %40 = vector.extract_strided_slice %12 {offsets = [0, 136], sizes = [9, 8], strides = [1, 1]} : vector<9x192xf32> to vector<9x8xf32>
    %41 = arith.truncf %40 : vector<9x8xf32> to vector<9x8xbf16>
    %cst_20 = arith.constant dense<0.000000e+00> : vector<9x9xf32>
    %42 = tpu.matmul %37, %39, %cst_20 {dimension_numbers = #tpu.dot_dimension_numbers<[1], [1], [0], [0], [0, 0, 1, 0], [], []>} : vector<9x8xbf16>, vector<9x8xbf16>, vector<9x9xf32> -> vector<9x9xf32>
    %cst_21 = arith.constant dense<0xFF800000> : vector<9xf32>
    %43 = vector.multi_reduction <maximumf>, %42, %cst_21 [1] : vector<9x9xf32> to vector<9xf32>
    %44 = vector.shape_cast %43 : vector<9xf32> to vector<9x1xf32>
    %45 = vector.broadcast %44 : vector<9x1xf32> to vector<9x9xf32>
    %46 = arith.subf %42, %45 : vector<9x9xf32>
    %47 = math.exp %46 : vector<9x9xf32>
    %cst_22 = arith.constant dense<0.000000e+00> : vector<9xf32>
    %48 = vector.multi_reduction <add>, %47, %cst_22 [1] : vector<9x9xf32> to vector<9xf32>
    %49 = vector.shape_cast %48 : vector<9xf32> to vector<9x1xf32>
    %50 = tpu.reciprocal %49 {approx = true} : vector<9x1xf32> -> vector<9x1xf32>
    %51 = vector.broadcast %50 : vector<9x1xf32> to vector<9x9xf32>
    %52 = arith.mulf %47, %51 : vector<9x9xf32>
    %53 = arith.truncf %52 : vector<9x9xf32> to vector<9x9xbf16>
    %cst_23 = arith.constant dense<0.000000e+00> : vector<9x8xf32>
    %54 = tpu.matmul %53, %41, %cst_23 {dimension_numbers = #tpu.dot_dimension_numbers<[1], [0], [0], [1], [0, 0, 1, 1], [], []>} : vector<9x9xbf16>, vector<9x8xbf16>, vector<9x8xf32> -> vector<9x8xf32>
    %55 = vector.extract_strided_slice %12 {offsets = [0, 16], sizes = [9, 8], strides = [1, 1]} : vector<9x192xf32> to vector<9x8xf32>
    %cst_24 = arith.constant 0.353553176 : f32
    %56 = vector.broadcast %cst_24 : f32 to vector<9x8xf32>
    %57 = arith.mulf %55, %56 : vector<9x8xf32>
    %58 = arith.truncf %57 : vector<9x8xf32> to vector<9x8xbf16>
    %59 = vector.extract_strided_slice %12 {offsets = [0, 80], sizes = [9, 8], strides = [1, 1]} : vector<9x192xf32> to vector<9x8xf32>
    %60 = arith.truncf %59 : vector<9x8xf32> to vector<9x8xbf16>
    %61 = vector.extract_strided_slice %12 {offsets = [0, 144], sizes = [9, 8], strides = [1, 1]} : vector<9x192xf32> to vector<9x8xf32>
    %62 = arith.truncf %61 : vector<9x8xf32> to vector<9x8xbf16>
    %cst_25 = arith.constant dense<0.000000e+00> : vector<9x9xf32>
    %63 = tpu.matmul %58, %60, %cst_25 {dimension_numbers = #tpu.dot_dimension_numbers<[1], [1], [0], [0], [0, 0, 1, 0], [], []>} : vector<9x8xbf16>, vector<9x8xbf16>, vector<9x9xf32> -> vector<9x9xf32>
    %cst_26 = arith.constant dense<0xFF800000> : vector<9xf32>
    %64 = vector.multi_reduction <maximumf>, %63, %cst_26 [1] : vector<9x9xf32> to vector<9xf32>
    %65 = vector.shape_cast %64 : vector<9xf32> to vector<9x1xf32>
    %66 = vector.broadcast %65 : vector<9x1xf32> to vector<9x9xf32>
    %67 = arith.subf %63, %66 : vector<9x9xf32>
    %68 = math.exp %67 : vector<9x9xf32>
    %cst_27 = arith.constant dense<0.000000e+00> : vector<9xf32>
    %69 = vector.multi_reduction <add>, %68, %cst_27 [1] : vector<9x9xf32> to vector<9xf32>
    %70 = vector.shape_cast %69 : vector<9xf32> to vector<9x1xf32>
    %71 = tpu.reciprocal %70 {approx = true} : vector<9x1xf32> -> vector<9x1xf32>
    %72 = vector.broadcast %71 : vector<9x1xf32> to vector<9x9xf32>
    %73 = arith.mulf %68, %72 : vector<9x9xf32>
    %74 = arith.truncf %73 : vector<9x9xf32> to vector<9x9xbf16>
    %cst_28 = arith.constant dense<0.000000e+00> : vector<9x8xf32>
    %75 = tpu.matmul %74, %62, %cst_28 {dimension_numbers = #tpu.dot_dimension_numbers<[1], [0], [0], [1], [0, 0, 1, 1], [], []>} : vector<9x9xbf16>, vector<9x8xbf16>, vector<9x8xf32> -> vector<9x8xf32>
    %76 = vector.extract_strided_slice %12 {offsets = [0, 24], sizes = [9, 8], strides = [1, 1]} : vector<9x192xf32> to vector<9x8xf32>
    %cst_29 = arith.constant 0.353553176 : f32
    %77 = vector.broadcast %cst_29 : f32 to vector<9x8xf32>
    %78 = arith.mulf %76, %77 : vector<9x8xf32>
    %79 = arith.truncf %78 : vector<9x8xf32> to vector<9x8xbf16>
    %80 = vector.extract_strided_slice %12 {offsets = [0, 88], sizes = [9, 8], strides = [1, 1]} : vector<9x192xf32> to vector<9x8xf32>
    %81 = arith.truncf %80 : vector<9x8xf32> to vector<9x8xbf16>
    %82 = vector.extract_strided_slice %12 {offsets = [0, 152], sizes = [9, 8], strides = [1, 1]} : vector<9x192xf32> to vector<9x8xf32>
    %83 = arith.truncf %82 : vector<9x8xf32> to vector<9x8xbf16>
    %cst_30 = arith.constant dense<0.000000e+00> : vector<9x9xf32>
    %84 = tpu.matmul %79, %81, %cst_30 {dimension_numbers = #tpu.dot_dimension_numbers<[1], [1], [0], [0], [0, 0, 1, 0], [], []>} : vector<9x8xbf16>, vector<9x8xbf16>, vector<9x9xf32> -> vector<9x9xf32>
    %cst_31 = arith.constant dense<0xFF800000> : vector<9xf32>
    %85 = vector.multi_reduction <maximumf>, %84, %cst_31 [1] : vector<9x9xf32> to vector<9xf32>
    %86 = vector.shape_cast %85 : vector<9xf32> to vector<9x1xf32>
    %87 = vector.broadcast %86 : vector<9x1xf32> to vector<9x9xf32>
    %88 = arith.subf %84, %87 : vector<9x9xf32>
    %89 = math.exp %88 : vector<9x9xf32>
    %cst_32 = arith.constant dense<0.000000e+00> : vector<9xf32>
    %90 = vector.multi_reduction <add>, %89, %cst_32 [1] : vector<9x9xf32> to vector<9xf32>
    %91 = vector.shape_cast %90 : vector<9xf32> to vector<9x1xf32>
    %92 = tpu.reciprocal %91 {approx = true} : vector<9x1xf32> -> vector<9x1xf32>
    %93 = vector.broadcast %92 : vector<9x1xf32> to vector<9x9xf32>
    %94 = arith.mulf %89, %93 : vector<9x9xf32>
    %95 = arith.truncf %94 : vector<9x9xf32> to vector<9x9xbf16>
    %cst_33 = arith.constant dense<0.000000e+00> : vector<9x8xf32>
    %96 = tpu.matmul %95, %83, %cst_33 {dimension_numbers = #tpu.dot_dimension_numbers<[1], [0], [0], [1], [0, 0, 1, 1], [], []>} : vector<9x9xbf16>, vector<9x8xbf16>, vector<9x8xf32> -> vector<9x8xf32>
    %97 = vector.extract_strided_slice %12 {offsets = [0, 32], sizes = [9, 8], strides = [1, 1]} : vector<9x192xf32> to vector<9x8xf32>
    %cst_34 = arith.constant 0.353553176 : f32
    %98 = vector.broadcast %cst_34 : f32 to vector<9x8xf32>
    %99 = arith.mulf %97, %98 : vector<9x8xf32>
    %100 = arith.truncf %99 : vector<9x8xf32> to vector<9x8xbf16>
    %101 = vector.extract_strided_slice %12 {offsets = [0, 96], sizes = [9, 8], strides = [1, 1]} : vector<9x192xf32> to vector<9x8xf32>
    %102 = arith.truncf %101 : vector<9x8xf32> to vector<9x8xbf16>
    %103 = vector.extract_strided_slice %12 {offsets = [0, 160], sizes = [9, 8], strides = [1, 1]} : vector<9x192xf32> to vector<9x8xf32>
    %104 = arith.truncf %103 : vector<9x8xf32> to vector<9x8xbf16>
    %cst_35 = arith.constant dense<0.000000e+00> : vector<9x9xf32>
    %105 = tpu.matmul %100, %102, %cst_35 {dimension_numbers = #tpu.dot_dimension_numbers<[1], [1], [0], [0], [0, 0, 1, 0], [], []>} : vector<9x8xbf16>, vector<9x8xbf16>, vector<9x9xf32> -> vector<9x9xf32>
    %cst_36 = arith.constant dense<0xFF800000> : vector<9xf32>
    %106 = vector.multi_reduction <maximumf>, %105, %cst_36 [1] : vector<9x9xf32> to vector<9xf32>
    %107 = vector.shape_cast %106 : vector<9xf32> to vector<9x1xf32>
    %108 = vector.broadcast %107 : vector<9x1xf32> to vector<9x9xf32>
    %109 = arith.subf %105, %108 : vector<9x9xf32>
    %110 = math.exp %109 : vector<9x9xf32>
    %cst_37 = arith.constant dense<0.000000e+00> : vector<9xf32>
    %111 = vector.multi_reduction <add>, %110, %cst_37 [1] : vector<9x9xf32> to vector<9xf32>
    %112 = vector.shape_cast %111 : vector<9xf32> to vector<9x1xf32>
    %113 = tpu.reciprocal %112 {approx = true} : vector<9x1xf32> -> vector<9x1xf32>
    %114 = vector.broadcast %113 : vector<9x1xf32> to vector<9x9xf32>
    %115 = arith.mulf %110, %114 : vector<9x9xf32>
    %116 = arith.truncf %115 : vector<9x9xf32> to vector<9x9xbf16>
    %cst_38 = arith.constant dense<0.000000e+00> : vector<9x8xf32>
    %117 = tpu.matmul %116, %104, %cst_38 {dimension_numbers = #tpu.dot_dimension_numbers<[1], [0], [0], [1], [0, 0, 1, 1], [], []>} : vector<9x9xbf16>, vector<9x8xbf16>, vector<9x8xf32> -> vector<9x8xf32>
    %118 = vector.extract_strided_slice %12 {offsets = [0, 40], sizes = [9, 8], strides = [1, 1]} : vector<9x192xf32> to vector<9x8xf32>
    %cst_39 = arith.constant 0.353553176 : f32
    %119 = vector.broadcast %cst_39 : f32 to vector<9x8xf32>
    %120 = arith.mulf %118, %119 : vector<9x8xf32>
    %121 = arith.truncf %120 : vector<9x8xf32> to vector<9x8xbf16>
    %122 = vector.extract_strided_slice %12 {offsets = [0, 104], sizes = [9, 8], strides = [1, 1]} : vector<9x192xf32> to vector<9x8xf32>
    %123 = arith.truncf %122 : vector<9x8xf32> to vector<9x8xbf16>
    %124 = vector.extract_strided_slice %12 {offsets = [0, 168], sizes = [9, 8], strides = [1, 1]} : vector<9x192xf32> to vector<9x8xf32>
    %125 = arith.truncf %124 : vector<9x8xf32> to vector<9x8xbf16>
    %cst_40 = arith.constant dense<0.000000e+00> : vector<9x9xf32>
    %126 = tpu.matmul %121, %123, %cst_40 {dimension_numbers = #tpu.dot_dimension_numbers<[1], [1], [0], [0], [0, 0, 1, 0], [], []>} : vector<9x8xbf16>, vector<9x8xbf16>, vector<9x9xf32> -> vector<9x9xf32>
    %cst_41 = arith.constant dense<0xFF800000> : vector<9xf32>
    %127 = vector.multi_reduction <maximumf>, %126, %cst_41 [1] : vector<9x9xf32> to vector<9xf32>
    %128 = vector.shape_cast %127 : vector<9xf32> to vector<9x1xf32>
    %129 = vector.broadcast %128 : vector<9x1xf32> to vector<9x9xf32>
    %130 = arith.subf %126, %129 : vector<9x9xf32>
    %131 = math.exp %130 : vector<9x9xf32>
    %cst_42 = arith.constant dense<0.000000e+00> : vector<9xf32>
    %132 = vector.multi_reduction <add>, %131, %cst_42 [1] : vector<9x9xf32> to vector<9xf32>
    %133 = vector.shape_cast %132 : vector<9xf32> to vector<9x1xf32>
    %134 = tpu.reciprocal %133 {approx = true} : vector<9x1xf32> -> vector<9x1xf32>
    %135 = vector.broadcast %134 : vector<9x1xf32> to vector<9x9xf32>
    %136 = arith.mulf %131, %135 : vector<9x9xf32>
    %137 = arith.truncf %136 : vector<9x9xf32> to vector<9x9xbf16>
    %cst_43 = arith.constant dense<0.000000e+00> : vector<9x8xf32>
    %138 = tpu.matmul %137, %125, %cst_43 {dimension_numbers = #tpu.dot_dimension_numbers<[1], [0], [0], [1], [0, 0, 1, 1], [], []>} : vector<9x9xbf16>, vector<9x8xbf16>, vector<9x8xf32> -> vector<9x8xf32>
    %139 = vector.extract_strided_slice %12 {offsets = [0, 48], sizes = [9, 8], strides = [1, 1]} : vector<9x192xf32> to vector<9x8xf32>
    %cst_44 = arith.constant 0.353553176 : f32
    %140 = vector.broadcast %cst_44 : f32 to vector<9x8xf32>
    %141 = arith.mulf %139, %140 : vector<9x8xf32>
    %142 = arith.truncf %141 : vector<9x8xf32> to vector<9x8xbf16>
    %143 = vector.extract_strided_slice %12 {offsets = [0, 112], sizes = [9, 8], strides = [1, 1]} : vector<9x192xf32> to vector<9x8xf32>
    %144 = arith.truncf %143 : vector<9x8xf32> to vector<9x8xbf16>
    %145 = vector.extract_strided_slice %12 {offsets = [0, 176], sizes = [9, 8], strides = [1, 1]} : vector<9x192xf32> to vector<9x8xf32>
    %146 = arith.truncf %145 : vector<9x8xf32> to vector<9x8xbf16>
    %cst_45 = arith.constant dense<0.000000e+00> : vector<9x9xf32>
    %147 = tpu.matmul %142, %144, %cst_45 {dimension_numbers = #tpu.dot_dimension_numbers<[1], [1], [0], [0], [0, 0, 1, 0], [], []>} : vector<9x8xbf16>, vector<9x8xbf16>, vector<9x9xf32> -> vector<9x9xf32>
    %cst_46 = arith.constant dense<0xFF800000> : vector<9xf32>
    %148 = vector.multi_reduction <maximumf>, %147, %cst_46 [1] : vector<9x9xf32> to vector<9xf32>
    %149 = vector.shape_cast %148 : vector<9xf32> to vector<9x1xf32>
    %150 = vector.broadcast %149 : vector<9x1xf32> to vector<9x9xf32>
    %151 = arith.subf %147, %150 : vector<9x9xf32>
    %152 = math.exp %151 : vector<9x9xf32>
    %cst_47 = arith.constant dense<0.000000e+00> : vector<9xf32>
    %153 = vector.multi_reduction <add>, %152, %cst_47 [1] : vector<9x9xf32> to vector<9xf32>
    %154 = vector.shape_cast %153 : vector<9xf32> to vector<9x1xf32>
    %155 = tpu.reciprocal %154 {approx = true} : vector<9x1xf32> -> vector<9x1xf32>
    %156 = vector.broadcast %155 : vector<9x1xf32> to vector<9x9xf32>
    %157 = arith.mulf %152, %156 : vector<9x9xf32>
    %158 = arith.truncf %157 : vector<9x9xf32> to vector<9x9xbf16>
    %cst_48 = arith.constant dense<0.000000e+00> : vector<9x8xf32>
    %159 = tpu.matmul %158, %146, %cst_48 {dimension_numbers = #tpu.dot_dimension_numbers<[1], [0], [0], [1], [0, 0, 1, 1], [], []>} : vector<9x9xbf16>, vector<9x8xbf16>, vector<9x8xf32> -> vector<9x8xf32>
    %160 = vector.extract_strided_slice %12 {offsets = [0, 56], sizes = [9, 8], strides = [1, 1]} : vector<9x192xf32> to vector<9x8xf32>
    %cst_49 = arith.constant 0.353553176 : f32
    %161 = vector.broadcast %cst_49 : f32 to vector<9x8xf32>
    %162 = arith.mulf %160, %161 : vector<9x8xf32>
    %163 = arith.truncf %162 : vector<9x8xf32> to vector<9x8xbf16>
    %164 = vector.extract_strided_slice %12 {offsets = [0, 120], sizes = [9, 8], strides = [1, 1]} : vector<9x192xf32> to vector<9x8xf32>
    %165 = arith.truncf %164 : vector<9x8xf32> to vector<9x8xbf16>
    %166 = vector.extract_strided_slice %12 {offsets = [0, 184], sizes = [9, 8], strides = [1, 1]} : vector<9x192xf32> to vector<9x8xf32>
    %167 = arith.truncf %166 : vector<9x8xf32> to vector<9x8xbf16>
    %cst_50 = arith.constant dense<0.000000e+00> : vector<9x9xf32>
    %168 = tpu.matmul %163, %165, %cst_50 {dimension_numbers = #tpu.dot_dimension_numbers<[1], [1], [0], [0], [0, 0, 1, 0], [], []>} : vector<9x8xbf16>, vector<9x8xbf16>, vector<9x9xf32> -> vector<9x9xf32>
    %cst_51 = arith.constant dense<0xFF800000> : vector<9xf32>
    %169 = vector.multi_reduction <maximumf>, %168, %cst_51 [1] : vector<9x9xf32> to vector<9xf32>
    %170 = vector.shape_cast %169 : vector<9xf32> to vector<9x1xf32>
    %171 = vector.broadcast %170 : vector<9x1xf32> to vector<9x9xf32>
    %172 = arith.subf %168, %171 : vector<9x9xf32>
    %173 = math.exp %172 : vector<9x9xf32>
    %cst_52 = arith.constant dense<0.000000e+00> : vector<9xf32>
    %174 = vector.multi_reduction <add>, %173, %cst_52 [1] : vector<9x9xf32> to vector<9xf32>
    %175 = vector.shape_cast %174 : vector<9xf32> to vector<9x1xf32>
    %176 = tpu.reciprocal %175 {approx = true} : vector<9x1xf32> -> vector<9x1xf32>
    %177 = vector.broadcast %176 : vector<9x1xf32> to vector<9x9xf32>
    %178 = arith.mulf %173, %177 : vector<9x9xf32>
    %179 = arith.truncf %178 : vector<9x9xf32> to vector<9x9xbf16>
    %cst_53 = arith.constant dense<0.000000e+00> : vector<9x8xf32>
    %180 = tpu.matmul %179, %167, %cst_53 {dimension_numbers = #tpu.dot_dimension_numbers<[1], [0], [0], [1], [0, 0, 1, 1], [], []>} : vector<9x9xbf16>, vector<9x8xbf16>, vector<9x8xf32> -> vector<9x8xf32>
    %181 = tpu.concatenate %33, %54, %75, %96, %117, %138, %159, %180 in 1 : vector<9x8xf32>, vector<9x8xf32>, vector<9x8xf32>, vector<9x8xf32>, vector<9x8xf32>, vector<9x8xf32>, vector<9x8xf32>, vector<9x8xf32> -> vector<9x64xf32>
    %182 = arith.truncf %181 : vector<9x64xf32> to vector<9x64xbf16>
    %183 = arith.truncf %4 : vector<64x64xf32> to vector<64x64xbf16>
    %cst_54 = arith.constant dense<0.000000e+00> : vector<9x64xf32>
    %184 = tpu.matmul %182, %183, %cst_54 {dimension_numbers = #tpu.dot_dimension_numbers<[1], [0], [0], [1], [0, 0, 1, 1], [], []>} : vector<9x64xbf16>, vector<64x64xbf16>, vector<9x64xf32> -> vector<9x64xf32>
    %185 = vector.broadcast %5 : vector<1x64xf32> to vector<9x64xf32>
    %186 = arith.addf %184, %185 : vector<9x64xf32>
    %187 = arith.addf %186, %1 : vector<9x64xf32>
    %cst_55 = arith.constant dense<0.000000e+00> : vector<9xf32>
    %188 = vector.multi_reduction <add>, %187, %cst_55 [1] : vector<9x64xf32> to vector<9xf32>
    %189 = vector.shape_cast %188 : vector<9xf32> to vector<9x1xf32>
    %cst_56 = arith.constant 6.400000e+01 : f32
    %190 = vector.broadcast %cst_56 : f32 to vector<9x1xf32>
    %191 = arith.divf %189, %190 : vector<9x1xf32>
    %192 = vector.broadcast %191 : vector<9x1xf32> to vector<9x64xf32>
    %193 = arith.subf %187, %192 : vector<9x64xf32>
    %194 = vector.broadcast %191 : vector<9x1xf32> to vector<9x64xf32>
    %195 = arith.subf %187, %194 : vector<9x64xf32>
    %196 = arith.mulf %193, %195 : vector<9x64xf32>
    %cst_57 = arith.constant dense<0.000000e+00> : vector<9xf32>
    %197 = vector.multi_reduction <add>, %196, %cst_57 [1] : vector<9x64xf32> to vector<9xf32>
    %198 = vector.shape_cast %197 : vector<9xf32> to vector<9x1xf32>
    %cst_58 = arith.constant 6.400000e+01 : f32
    %199 = vector.broadcast %cst_58 : f32 to vector<9x1xf32>
    %200 = arith.divf %198, %199 : vector<9x1xf32>
    %201 = vector.broadcast %191 : vector<9x1xf32> to vector<9x64xf32>
    %202 = arith.subf %187, %201 : vector<9x64xf32>
    %cst_59 = arith.constant 9.99999974E-6 : f32
    %203 = vector.broadcast %cst_59 : f32 to vector<9x1xf32>
    %204 = arith.addf %200, %203 : vector<9x1xf32>
    %205 = math.rsqrt %204 : vector<9x1xf32>
    %206 = vector.broadcast %205 : vector<9x1xf32> to vector<9x64xf32>
    %207 = arith.mulf %202, %206 : vector<9x64xf32>
    %208 = vector.broadcast %6 : vector<1x64xf32> to vector<9x64xf32>
    %209 = arith.mulf %207, %208 : vector<9x64xf32>
    %210 = vector.broadcast %7 : vector<1x64xf32> to vector<9x64xf32>
    %211 = arith.addf %209, %210 : vector<9x64xf32>
    %c0_60 = arith.constant 0 : index
    %c0_61 = arith.constant 0 : index
    %c0_62 = arith.constant 0 : index
    %212 = vector.load %arg8[%c0_60, %c0_61, %c0_62] : memref<1x9x64xf32, #tpu.memory_space<vmem>>, vector<1x9x64xf32>
    %213 = vector.shape_cast %212 : vector<1x9x64xf32> to vector<9x64xf32>
    %214 = vector.shape_cast %211 : vector<9x64xf32> to vector<1x9x64xf32>
    tpu.vector_store %arg8[%c0_60, %c0_61, %c0_62], %214 {strides = array<i32>} : memref<1x9x64xf32, #tpu.memory_space<vmem>>, vector<1x9x64xf32>,
    return
  }
  func.func @transform_0(%arg0: i32) -> (i32, i32, i32) {
    %c0_i32 = arith.constant 0 : i32
    %c0_i32_0 = arith.constant 0 : i32
    %c0_i32_1 = arith.constant 0 : i32
    return %arg0, %c0_i32, %c0_i32_0 : i32, i32, i32
  }
  func.func @transform_1(%arg0: i32) -> (i32, i32) {
    %c0_i32 = arith.constant 0 : i32
    %c0_i32_0 = arith.constant 0 : i32
    %c0_i32_1 = arith.constant 0 : i32
    return %c0_i32, %c0_i32_0 : i32, i32
  }
  func.func @transform_2(%arg0: i32) -> (i32, i32) {
    %c0_i32 = arith.constant 0 : i32
    %c0_i32_0 = arith.constant 0 : i32
    %c0_i32_1 = arith.constant 0 : i32
    return %c0_i32, %c0_i32_0 : i32, i32
  }
  func.func @transform_3(%arg0: i32) -> (i32, i32) {
    %c0_i32 = arith.constant 0 : i32
    %c0_i32_0 = arith.constant 0 : i32
    %c0_i32_1 = arith.constant 0 : i32
    return %c0_i32, %c0_i32_0 : i32, i32
  }
  func.func @transform_4(%arg0: i32) -> (i32, i32) {
    %c0_i32 = arith.constant 0 : i32
    %c0_i32_0 = arith.constant 0 : i32
    %c0_i32_1 = arith.constant 0 : i32
    return %c0_i32, %c0_i32_0 : i32, i32
  }
  func.func @transform_5(%arg0: i32) -> (i32, i32) {
    %c0_i32 = arith.constant 0 : i32
    %c0_i32_0 = arith.constant 0 : i32
    %c0_i32_1 = arith.constant 0 : i32
    return %c0_i32, %c0_i32_0 : i32, i32
  }
  func.func @transform_6(%arg0: i32) -> (i32, i32) {
    %c0_i32 = arith.constant 0 : i32
    %c0_i32_0 = arith.constant 0 : i32
    %c0_i32_1 = arith.constant 0 : i32
    return %c0_i32, %c0_i32_0 : i32, i32
  }
  func.func @transform_7(%arg0: i32) -> (i32, i32, i32) {
    %c0_i32 = arith.constant 0 : i32
    %c0_i32_0 = arith.constant 0 : i32
    %c0_i32_1 = arith.constant 0 : i32
    return %arg0, %c0_i32, %c0_i32_0 : i32, i32, i32
  }
}

</mosaic_0001>

<llo_original>
// kernel: mmformer_pallas.3
$region0: #{mmformer_pallas.3}
  #allocation0 [shape = 'u32[]', space=smem, size = 0x4, offset = 0x4, fixed_abs, tag = 'smem constant byte address 0x4 - core index']
  #allocation1 [shape = 'u32[144,128]{1,0:T(1,128)}', space=vmem, size = 0x12000, scoped, tag = 'internal scratch']
  %s0 = inlined_call_operand.vmem [shape: f32[2,9,64], index: 0, kind: input, shape index: {}]
  %s1 = inlined_call_operand.vmem [shape: f32[64,192], index: 1, kind: input, shape index: {}]
  %s2 = inlined_call_operand.vmem [shape: f32[1,192], index: 2, kind: input, shape index: {}]
  %s3 = inlined_call_operand.vmem [shape: f32[64,64], index: 3, kind: input, shape index: {}]
  %s4 = inlined_call_operand.vmem [shape: f32[1,64], index: 4, kind: input, shape index: {}]
  %s5 = inlined_call_operand.vmem [shape: f32[1,64], index: 5, kind: input, shape index: {}]
  %s6 = inlined_call_operand.vmem [shape: f32[1,64], index: 6, kind: input, shape index: {}]
  %s7 = inlined_call_operand.vmem [shape: f32[2,9,64], index: 7, kind: output, shape index: {}]
  %s8 = sld [smem:[#allocation0]]
  $region61: #{mmformer_pallas.3} parent=0
    _
  %s10 = ssub.s32 1, %s8
  %s11 = scalar_select 0, %s10, %s8
  loop: start=0, step=1, limit=4
  $region2: #{mmformer_pallas.3} parent=0 // loop_pre_header
    _
  $region3: #{mmformer_pallas.3} parent=0 // loop_header
    %s13 = sphi 0, %s17
    %p14 = scmp.ge.s32.totalorder %s13, 4
    %s23 = sphi 0, %s25
    %s26 = sphi 0, %s23
    %s27 = sphi 0, %s26
    %s43 = sphi 0, %s27
    %s47 = sphi 0, %s47
    %s49 = sphi 0, %s47
    %s50 = sphi 0, %s49
    %s64 = sphi 0, %s50
    %s68 = sphi 0, %s68
    %s70 = sphi 0, %s68
    %s71 = sphi 0, %s70
    %s85 = sphi 0, %s71
    %s89 = sphi 0, %s89
    %s91 = sphi 0, %s89
    %s92 = sphi 0, %s91
    %s106 = sphi 0, %s92
    %s110 = sphi 0, %s110
    %s112 = sphi 0, %s110
    %s113 = sphi 0, %s112
    %s127 = sphi 0, %s113
    %s131 = sphi 0, %s131
    %s133 = sphi 0, %s131
    %s134 = sphi 0, %s133
    %s148 = sphi 0, %s134
    %s152 = sphi 0, %s152
    %s154 = sphi 0, %s152
    %s155 = sphi 0, %s154
    %s169 = sphi 0, %s155
    %s175 = sphi 0, %s177
    %s178 = sphi 0, %s175
    %s179 = sphi 0, %s178
    %s195 = sphi 0, %s179
  $region4: #{mmformer_pallas.3} parent=0 // loop_header_branch
    %16 = sbr.rel (%p14) target = $region8
  $region5: #{mmformer_pallas.3} parent=0 // loop_body
    %s18 = ssub.s32 %s13, 1
    %s19 = ssub.s32 %s13, 2
    %s20 = sadd.s32 %s13, 1
    %s21 = ssub.s32 %s13, %s20
    %p22 = scmp.eq.s32.totalorder %s21, 0
    %s24 = sadd.s32 %s23, 1
    %s25 = scalar_select %p22, %s23, %s24
    %p28 = pneg %p22
    %p29 = scmp.eq.s32.totalorder %s13, 1
    %p30 = por %p28, %p29
    %p31 = scmp.ne.s32.totalorder %s23, %s26
    %p32 = scmp.eq.s32.totalorder %s13, 0
    %p33 = por %p31, %p32
    %p34 = scmp.ne.s32.totalorder %s23, %s26
    %p35 = scmp.eq.s32.totalorder %s18, 1
    %p36 = por %p34, %p35
    %p37 = scmp.ne.s32.totalorder %s26, %s27
    %p38 = scmp.eq.s32.totalorder %s18, 0
    %p39 = por %p37, %p38
    %p40 = scmp.ne.s32.totalorder %s26, %s27
    %p41 = scmp.eq.s32.totalorder %s19, 1
    %p42 = por %p40, %p41
    %p44 = scmp.ne.s32.totalorder %s27, %s43
    %p45 = scmp.eq.s32.totalorder %s19, 0
    %p46 = por %p44, %p45
    %s48 = sadd.s32 %s47, 1
    %p51 = scmp.eq.s32.totalorder %s13, 1
    %p52 = scmp.ne.s32.totalorder %s47, %s49
    %p53 = scmp.eq.s32.totalorder %s13, 0
    %p54 = por %p52, %p53
    %p55 = scmp.ne.s32.totalorder %s47, %s49
    %p56 = scmp.eq.s32.totalorder %s18, 1
    %p57 = por %p55, %p56
    %p58 = scmp.ne.s32.totalorder %s49, %s50
    %p59 = scmp.eq.s32.totalorder %s18, 0
    %p60 = por %p58, %p59
    %p61 = scmp.ne.s32.totalorder %s49, %s50
    %p62 = scmp.eq.s32.totalorder %s19, 1
    %p63 = por %p61, %p62
    %p65 = scmp.ne.s32.totalorder %s50, %s64
    %p66 = scmp.eq.s32.totalorder %s19, 0
    %p67 = por %p65, %p66
    %s69 = sadd.s32 %s68, 1
    %p72 = scmp.eq.s32.totalorder %s13, 1
    %p73 = scmp.ne.s32.totalorder %s68, %s70
    %p74 = scmp.eq.s32.totalorder %s13, 0
    %p75 = por %p73, %p74
    %p76 = scmp.ne.s32.totalorder %s68, %s70
    %p77 = scmp.eq.s32.totalorder %s18, 1
    %p78 = por %p76, %p77
    %p79 = scmp.ne.s32.totalorder %s70, %s71
    %p80 = scmp.eq.s32.totalorder %s18, 0
    %p81 = por %p79, %p80
    %p82 = scmp.ne.s32.totalorder %s70, %s71
    %p83 = scmp.eq.s32.totalorder %s19, 1
    %p84 = por %p82, %p83
    %p86 = scmp.ne.s32.totalorder %s71, %s85
    %p87 = scmp.eq.s32.totalorder %s19, 0
    %p88 = por %p86, %p87
    %s90 = sadd.s32 %s89, 1
    %p93 = scmp.eq.s32.totalorder %s13, 1
    %p94 = scmp.ne.s32.totalorder %s89, %s91
    %p95 = scmp.eq.s32.totalorder %s13, 0
    %p96 = por %p94, %p95
    %p97 = scmp.ne.s32.totalorder %s89, %s91
    %p98 = scmp.eq.s32.totalorder %s18, 1
    %p99 = por %p97, %p98
    %p100 = scmp.ne.s32.totalorder %s91, %s92
    %p101 = scmp.eq.s32.totalorder %s18, 0
    %p102 = por %p100, %p101
    %p103 = scmp.ne.s32.totalorder %s91, %s92
    %p104 = scmp.eq.s32.totalorder %s19, 1
    %p105 = por %p103, %p104
    %p107 = scmp.ne.s32.totalorder %s92, %s106
    %p108 = scmp.eq.s32.totalorder %s19, 0
    %p109 = por %p107, %p108
    %s111 = sadd.s32 %s110, 1
    %p114 = scmp.eq.s32.totalorder %s13, 1
    %p115 = scmp.ne.s32.totalorder %s110, %s112
    %p116 = scmp.eq.s32.totalorder %s13, 0
    %p117 = por %p115, %p116
    %p118 = scmp.ne.s32.totalorder %s110, %s112
    %p119 = scmp.eq.s32.totalorder %s18, 1
    %p120 = por %p118, %p119
    %p121 = scmp.ne.s32.totalorder %s112, %s113
    %p122 = scmp.eq.s32.totalorder %s18, 0
    %p123 = por %p121, %p122
    %p124 = scmp.ne.s32.totalorder %s112, %s113
    %p125 = scmp.eq.s32.totalorder %s19, 1
    %p126 = por %p124, %p125
    %p128 = scmp.ne.s32.totalorder %s113, %s127
    %p129 = scmp.eq.s32.totalorder %s19, 0
    %p130 = por %p128, %p129
    %s132 = sadd.s32 %s131, 1
    %p135 = scmp.eq.s32.totalorder %s13, 1
    %p136 = scmp.ne.s32.totalorder %s131, %s133
    %p137 = scmp.eq.s32.totalorder %s13, 0
    %p138 = por %p136, %p137
    %p139 = scmp.ne.s32.totalorder %s131, %s133
    %p140 = scmp.eq.s32.totalorder %s18, 1
    %p141 = por %p139, %p140
    %p142 = scmp.ne.s32.totalorder %s133, %s134
    %p143 = scmp.eq.s32.totalorder %s18, 0
    %p144 = por %p142, %p143
    %p145 = scmp.ne.s32.totalorder %s133, %s134
    %p146 = scmp.eq.s32.totalorder %s19, 1
    %p147 = por %p145, %p146
    %p149 = scmp.ne.s32.totalorder %s134, %s148
    %p150 = scmp.eq.s32.totalorder %s19, 0
    %p151 = por %p149, %p150
    %s153 = sadd.s32 %s152, 1
    %p156 = scmp.eq.s32.totalorder %s13, 1
    %p157 = scmp.ne.s32.totalorder %s152, %s154
    %p158 = scmp.eq.s32.totalorder %s13, 0
    %p159 = por %p157, %p158
    %p160 = scmp.ne.s32.totalorder %s152, %s154
    %p161 = scmp.eq.s32.totalorder %s18, 1
    %p162 = por %p160, %p161
    %p163 = scmp.ne.s32.totalorder %s154, %s155
    %p164 = scmp.eq.s32.totalorder %s18, 0
    %p165 = por %p163, %p164
    %p166 = scmp.ne.s32.totalorder %s154, %s155
    %p167 = scmp.eq.s32.totalorder %s19, 1
    %p168 = por %p166, %p167
    %p170 = scmp.ne.s32.totalorder %s155, %s169
    %p171 = scmp.eq.s32.totalorder %s19, 0
    %p172 = por %p170, %p171
    %s173 = ssub.s32 %s13, %s20
    %p174 = scmp.eq.s32.totalorder %s173, 0
    %s176 = sadd.s32 %s175, 1
    %s177 = scalar_select %p174, %s175, %s176
    %p180 = pneg %p174
    %p181 = scmp.eq.s32.totalorder %s13, 1
    %p182 = por %p180, %p181
    %p183 = scmp.ne.s32.totalorder %s175, %s178
    %p184 = scmp.eq.s32.totalorder %s13, 0
    %p185 = por %p183, %p184
    %p186 = scmp.ne.s32.totalorder %s175, %s178
    %p187 = scmp.eq.s32.totalorder %s18, 1
    %p188 = por %p186, %p187
    %p189 = scmp.ne.s32.totalorder %s178, %s179
    %p190 = scmp.eq.s32.totalorder %s18, 0
    %p191 = por %p189, %p190
    %p192 = scmp.ne.s32.totalorder %s178, %s179
    %p193 = scmp.eq.s32.totalorder %s19, 1
    %p194 = por %p192, %p193
    %p196 = scmp.ne.s32.totalorder %s179, %s195
    %p197 = scmp.eq.s32.totalorder %s19, 0
    %p198 = por %p196, %p197
    %p199 = scmp.le.s32.totalorder 1, %s13
    %p200 = scmp.lt.s32.totalorder %s13, 3
    %p201 = pnand %p199, %p200
    %p202 = pneg %p201
    // Predicated region
    $region9: #{mmformer_pallas.3} parent=5 // pred_check
      _
    $region10: #{mmformer_pallas.3} parent=5 // pred_check_branch
      %204 = sbr.rel (%p201) target = $region12
    $region11: #{mmformer_pallas.3} parent=5 // pred_region
      %s205 = ssub.s32 %s13, 1
      // Predicated region
      $region13: #{mmformer_pallas.3} parent=11 // pred_check
        %p206 = pneg %p60
      $region14: #{mmformer_pallas.3} parent=11 // pred_check_branch
        %208 = sbr.rel (%p206) target = $region16
      $region15: #{mmformer_pallas.3} parent=11 // pred_region
        _
      $region16: #{mmformer_pallas.3} parent=11 // pred_fallthru
        _
      // Predicated region
      $region17: #{mmformer_pallas.3} parent=11 // pred_check
        %p209 = pneg %p81
      $region18: #{mmformer_pallas.3} parent=11 // pred_check_branch
        %211 = sbr.rel (%p209) target = $region20
      $region19: #{mmformer_pallas.3} parent=11 // pred_region
        _
      $region20: #{mmformer_pallas.3} parent=11 // pred_fallthru
        _
      // Predicated region
      $region21: #{mmformer_pallas.3} parent=11 // pred_check
        %p212 = pneg %p102
      $region22: #{mmformer_pallas.3} parent=11 // pred_check_branch
        %214 = sbr.rel (%p212) target = $region24
      $region23: #{mmformer_pallas.3} parent=11 // pred_region
        _
      $region24: #{mmformer_pallas.3} parent=11 // pred_fallthru
        _
      // Predicated region
      $region25: #{mmformer_pallas.3} parent=11 // pred_check
        %p215 = pneg %p123
      $region26: #{mmformer_pallas.3} parent=11 // pred_check_branch
        %217 = sbr.rel (%p215) target = $region28
      $region27: #{mmformer_pallas.3} parent=11 // pred_region
        _
      $region28: #{mmformer_pallas.3} parent=11 // pred_fallthru
        _
      // Predicated region
      $region29: #{mmformer_pallas.3} parent=11 // pred_check
        %p218 = pneg %p144
      $region30: #{mmformer_pallas.3} parent=11 // pred_check_branch
        %220 = sbr.rel (%p218) target = $region32
      $region31: #{mmformer_pallas.3} parent=11 // pred_region
        _
      $region32: #{mmformer_pallas.3} parent=11 // pred_fallthru
        _
      // Predicated region
      $region33: #{mmformer_pallas.3} parent=11 // pred_check
        %p221 = pneg %p165
      $region34: #{mmformer_pallas.3} parent=11 // pred_check_branch
        %223 = sbr.rel (%p221) target = $region36
      $region35: #{mmformer_pallas.3} parent=11 // pred_region
        _
      $region36: #{mmformer_pallas.3} parent=11 // pred_fallthru
        _
    $region12: #{mmformer_pallas.3} parent=5 // pred_fallthru
      _
    %p224 = scmp.lt.s32.totalorder %s13, 2
    // Predicated region
    $region37: #{mmformer_pallas.3} parent=5 // pred_check
      %p225 = pneg %p224
    $region38: #{mmformer_pallas.3} parent=5 // pred_check_branch
      %227 = sbr.rel (%p225) target = $region40
    $region39: #{mmformer_pallas.3} parent=5 // pred_region
      // Predicated region
      $region41: #{mmformer_pallas.3} parent=39 // pred_check
        %p228 = pneg %p33
      $region42: #{mmformer_pallas.3} parent=39 // pred_check_branch
        %230 = sbr.rel (%p228) target = $region44
      $region43: #{mmformer_pallas.3} parent=39 // pred_region
        %p231 = scmp.lt.s32.totalorder %s13, 1
        %s232 = scalar_select %p231, %s13, 1
        %s233 = smul.addr %s232, 2
        %s234 = smul.addr %s233, 8
        %s235 = scalar_lea.vmem %s0, %s234
      $region44: #{mmformer_pallas.3} parent=39 // pred_fallthru
        _
    $region40: #{mmformer_pallas.3} parent=5 // pred_fallthru
      _
    %p236 = scmp.le.s32.totalorder 1, %s13
    %p237 = scmp.lt.s32.totalorder %s13, 3
    %p238 = pnand %p236, %p237
    %p239 = pneg %p238
    // Predicated region
    $region45: #{mmformer_pallas.3} parent=5 // pred_check
      _
    $region46: #{mmformer_pallas.3} parent=5 // pred_check_branch
      %241 = sbr.rel (%p238) target = $region48
    $region47: #{mmformer_pallas.3} parent=5 // pred_region
      %s242 = ssub.s32 %s13, 1
      %p243 = scmp.lt.s32.totalorder %s18, 1
      %s244 = scalar_select %p243, %s18, 1
      %s245 = smul.addr %s244, 2
      %s246 = smul.addr %s245, 8
      %s247 = scalar_lea.vmem %s0, %s246
      %p248 = pneg %p39
      %p249 = pneg %p36
      %p250 = pneg %p60
      %p251 = pneg %p57
      %p252 = pneg %p81
      %p253 = pneg %p78
      %p254 = pneg %p102
      %p255 = pneg %p99
      %p256 = pneg %p123
      %p257 = pneg %p120
      %p258 = pneg %p144
      %p259 = pneg %p141
      %p260 = pneg %p165
      %p261 = pneg %p162
      %p262 = pneg %p191
      %p263 = pneg %p188
      %p264 = scmp.lt.s32.totalorder %s18, 1
      %s265 = scalar_select %p264, %s18, 1
      %s266 = smul.addr %s265, 2
      %s267 = smul.addr %s266, 8
      %s268 = scalar_lea.vmem %s7, %s267
      %p269 = scmp.lt.s32.totalorder %s18, 1
      %s270 = scalar_select %p269, %s18, 1
      %s271 = smul.addr %s270, 2
      %s272 = smul.addr %s271, 8
      %s273 = scalar_lea.vmem %s0, %s272
      %p274 = scmp.lt.s32.totalorder %s18, 1
      %s275 = scalar_select %p274, %s18, 1
      %s276 = smul.addr %s275, 2
      %s277 = smul.addr %s276, 8
      %s278 = scalar_lea.vmem %s7, %s277
      %v280 = vld [vmem:[%s273] sm:$0xff]
      %v281 = vld [vmem:[%s273 + $0x8] sm:$0x1]
      %v282 = vld [vmem:[%s1] sm:$0xff]
      %v283 = vld [vmem:[%s1 + $0x8] sm:$0xff]
      %v284 = vld [vmem:[%s1 + $0x10] sm:$0xff]
      %v285 = vld [vmem:[%s1 + $0x18] sm:$0xff]
      %v286 = vld [vmem:[%s1 + $0x20] sm:$0xff]
      %v287 = vld [vmem:[%s1 + $0x28] sm:$0xff]
      %v288 = vld [vmem:[%s1 + $0x30] sm:$0xff]
      %v289 = vld [vmem:[%s1 + $0x38] sm:$0xff]
      %v290 = vld [vmem:[%s1 + $0x40] sm:$0xff]
      %v291 = vld [vmem:[%s1 + $0x48] sm:$0xff]
      %v292 = vld [vmem:[%s1 + $0x50] sm:$0xff]
      %v293 = vld [vmem:[%s1 + $0x58] sm:$0xff]
      %v294 = vld [vmem:[%s1 + $0x60] sm:$0xff]
      %v295 = vld [vmem:[%s1 + $0x68] sm:$0xff]
      %v296 = vld [vmem:[%s1 + $0x70] sm:$0xff]
      %v297 = vld [vmem:[%s1 + $0x78] sm:$0xff]
      %v298 = vld [vmem:[%s2] sm:$0x3]
      %v299 = vld [vmem:[%s3] sm:$0xff]
      %v300 = vld [vmem:[%s3 + $0x8] sm:$0xff]
      %v301 = vld [vmem:[%s3 + $0x10] sm:$0xff]
      %v302 = vld [vmem:[%s3 + $0x18] sm:$0xff]
      %v303 = vld [vmem:[%s3 + $0x20] sm:$0xff]
      %v304 = vld [vmem:[%s3 + $0x28] sm:$0xff]
      %v305 = vld [vmem:[%s3 + $0x30] sm:$0xff]
      %v306 = vld [vmem:[%s3 + $0x38] sm:$0xff]
      %v307 = vld [vmem:[%s4] sm:$0x1]
      %v308 = vld [vmem:[%s5] sm:$0x1]
      %v309 = vld [vmem:[%s6] sm:$0x1]
      %v310 = vpack.c.bf16 %v281, %v280
      %v311 = vpack.c.bf16 %v284, %v282
      %v312 = vpack.c.bf16 %v285, %v283
      %v313 = vpack.c.bf16 %v288, %v286
      %v314 = vpack.c.bf16 %v289, %v287
      %v315 = vpack.c.bf16 %v292, %v290
      %v316 = vpack.c.bf16 %v293, %v291
      %v317 = vpack.c.bf16 %v296, %v294
      %v318 = vpack.c.bf16 %v297, %v295
      %v320 = vlaneseq
      %v321 = vshrl.u32 %v320, 7
      %v322 = vsub.s32 0, %v321
      %v323 = vrot.slane %v298, %v322
      %v324 = vlaneseq
      %v325 = vshrl.u32 %v324, 7
      %v326 = vsub.s32 1, %v325
      %v327 = vrot.slane %v298, %v326
      %vm330 = vcmask 523264
      %v332 = vsel %vm330, %v310, 0
      %334 = vmatprep.subr.bf16.mxu0 0
      %335 = vmatpush1.bf16.msra.mxu0 0
      %336 = vmatprep.subr.bf16.mxu0 0
      %337 = vmatpush1.bf16.msra.mxu0 0
      %338 = vmatprep.subr.bf16.mxu0 0
      %339 = vmatpush1.bf16.msra.mxu0 0
      %340 = vmatprep.subr.bf16.mxu0 0
      %341 = vmatpush1.bf16.msra.mxu0 0
      %342 = vmatprep.subr.bf16.mxu0 %v318
      %343 = vmatpush1.bf16.msra.mxu0 %v317
      %344 = vmatprep.subr.bf16.mxu0 %v316
      %345 = vmatpush1.bf16.msra.mxu0 %v315
      %346 = vmatprep.subr.bf16.mxu0 %v314
      %347 = vmatpush1.bf16.msra.mxu0 %v313
      %348 = vmatprep.subr.bf16.mxu0 %v312
      %349 = vmatpush1.bf16.msra.mxu0 %v311
      %350 = vmatprep.subr.bf16.mxu0 0
      %351 = vmatpush2.bf16.msra.mxu0 0
      %352 = vmatprep.subr.bf16.mxu0 0
      %353 = vmatpush2.bf16.msra.mxu0 0
      %354 = vmatprep.subr.bf16.mxu0 0
      %355 = vmatpush2.bf16.msra.mxu0 0
      %356 = vmatprep.subr.bf16.mxu0 0
      %357 = vmatpush2.bf16.msra.mxu0 0
      %358 = vmatprep.subr.bf16.mxu0 0
      %359 = vmatpush2.bf16.msra.mxu0 0
      %360 = vmatprep.subr.bf16.mxu0 0
      %361 = vmatpush2.bf16.msra.mxu0 0
      %362 = vmatprep.subr.bf16.mxu0 0
      %363 = vmatpush2.bf16.msra.mxu0 0
      %364 = vmatprep.subr.bf16.mxu0 0
      %365 = vmatpush2.bf16.msra.mxu0 0
      %366 = vmatprep.mubr.bf16.mxu0 0
      %367 = vmatmul.mubr.bf16.gmra.mxu0 %v332
      %v368 = vpop.f32.mrf.mxu0
      %v369 = vadd.f32 %v323, %v368
      %v370 = vpop.f32.mrf.mxu0
      %v371 = vadd.f32 %v327, %v370
      %v372 = vpop.f32.mrf.mxu0
      %v373 = vadd.f32 %v323, %v372
      %v374 = vpop.f32.mrf.mxu0
      %v375 = vadd.f32 %v327, %v374
      %376 = vdwg.mxu0
      %v377 = vmul.f32 %v369, 0.35355318
      %v378 = vmul.f32 %v373, 0.35355318
      %v379 = vpack.c.bf16 %v378, %v377
      %v380 = vpack.c.bf16 %v373, %v369
      %v381 = vpack.c.bf16 %v375, %v371
      %383 = vrot.lane.b32.xlu0 %v380, 64
      %v384 = vpop.permute.xlu0 %383
      %vm385 = vcmask 64512
      %v387 = vsel %vm385, %v379, 0
      %v390 = vsel %vm385, %v384, 0
      %392 = vmatprep.subr.bf16.mxu0 0
      %393 = vmatpush1.bf16.xpose.msra.mxu0 0
      %394 = vmatprep.subr.bf16.mxu0 0
      %395 = vmatpush1.bf16.xpose.msra.mxu0 0
      %396 = vmatprep.subr.bf16.mxu0 0
      %397 = vmatpush1.bf16.xpose.msra.mxu0 0
      %398 = vmatprep.subr.bf16.mxu0 0
      %399 = vmatpush1.bf16.xpose.msra.mxu0 0
      %400 = vmatprep.subr.bf16.mxu0 0
      %401 = vmatpush1.bf16.xpose.msra.mxu0 0
      %402 = vmatprep.subr.bf16.mxu0 0
      %403 = vmatpush1.bf16.xpose.msra.mxu0 0
      %404 = vmatprep.subr.bf16.mxu0 0
      %405 = vmatpush1.bf16.xpose.msra.mxu0 0
      %406 = vmatprep.subr.bf16.mxu0 0
      %407 = vmatpush1.bf16.xpose.msra.mxu0 %v390
      %408 = vmatprep.subr.bf16.mxu0 0
      %409 = vmatpush2.bf16.xpose.msra.mxu0 0
      %410 = vmatprep.subr.bf16.mxu0 0
      %411 = vmatpush2.bf16.xpose.msra.mxu0 0
      %412 = vmatprep.subr.bf16.mxu0 0
      %413 = vmatpush2.bf16.xpose.msra.mxu0 0
      %414 = vmatprep.subr.bf16.mxu0 0
      %415 = vmatpush2.bf16.xpose.msra.mxu0 0
      %416 = vmatprep.subr.bf16.mxu0 0
      %417 = vmatpush2.bf16.xpose.msra.mxu0 0
      %418 = vmatprep.subr.bf16.mxu0 0
      %419 = vmatpush2.bf16.xpose.msra.mxu0 0
      %420 = vmatprep.subr.bf16.mxu0 0
      %421 = vmatpush2.bf16.xpose.msra.mxu0 0
      %422 = vmatprep.subr.bf16.mxu0 0
      %423 = vmatpush2.bf16.xpose.msra.mxu0 0
      %424 = vmatprep.mubr.bf16.mxu0 0
      %425 = vmatmul.mubr.bf16.gmra.mxu0 %v387
      %v426 = vpop.f32.mrf.mxu0
      %v427 = vadd.f32 0.0, %v426
      %v428 = vpop.f32.mrf.mxu0
      %v429 = vpop.f32.mrf.mxu0
      %v430 = vadd.f32 0.0, %v429
      %v431 = vpop.f32.mrf.mxu0
      %432 = vdwg.mxu0
      %vm433 = vcmask 72704
      %v434 = vsel %vm433, %v427, -inf
      %435 = vmax.xlane.f32.xlu0 %v434
      %v436 = vpop.xlane.xlu0 %435
      %vm437 = vcmask 65536
      %v438 = vsel %vm437, %v430, -inf
      %439 = vmax.xlane.f32.xlu0 %v438
      %v440 = vpop.xlane.xlu0 %439
      %v441 = vsub.f32 %v427, %v436
      %v442 = vsub.f32 %v430, %v440
      %v443 = vmul.f32 %v441, 1.442695
      %v444 = vpow.pop %v443
      %v445 = vmul.f32 %v442, 1.442695
      %v446 = vpow.pop %v445
      %v447 = vsel %vm433, %v444, 0.0
      %448 = vadd.xlane.f32.xlu0 %v447
      %v449 = vpop.xlane.xlu0 %448
      %v450 = vsel %vm437, %v446, 0.0
      %451 = vadd.xlane.f32.xlu0 %v450
      %v452 = vpop.xlane.xlu0 %451
      %v453 = vrcp.pop %v449
      %v454 = vrcp.pop %v452
      %v455 = vmul.f32 %v444, %v453
      %v456 = vmul.f32 %v446, %v454
      %v457 = vpack.c.bf16 %v456, %v455
      %v459 = vsel %vm433, %v457, 0
      %vm461 = vcmask 1043456
      %vm462 = vcmask 1044480
      %v463 = vsel %vm461, 4294967295, 65535
      %v464 = vsel %vm462, %v463, 0
      %v466 = vand.u32 %v381, %v464
      %468 = vmatprep.subr.bf16.mxu0 0
      %469 = vmatpush1.bf16.msra.mxu0 0
      %470 = vmatprep.subr.bf16.mxu0 0
      %471 = vmatpush1.bf16.msra.mxu0 0
      %472 = vmatprep.subr.bf16.mxu0 0
      %473 = vmatpush1.bf16.msra.mxu0 0
      %474 = vmatprep.subr.bf16.mxu0 0
      %475 = vmatpush1.bf16.msra.mxu0 0
      %476 = vmatprep.subr.bf16.mxu0 0
      %477 = vmatpush1.bf16.msra.mxu0 0
      %478 = vmatprep.subr.bf16.mxu0 0
      %479 = vmatpush1.bf16.msra.mxu0 0
      %480 = vmatprep.subr.bf16.mxu0 0
      %481 = vmatpush1.bf16.msra.mxu0 0
      %482 = vmatprep.subr.bf16.mxu0 0
      %483 = vmatpush1.bf16.msra.mxu0 %v466
      %484 = vmatprep.subr.bf16.mxu0 0
      %485 = vmatpush2.bf16.msra.mxu0 0
      %486 = vmatprep.subr.bf16.mxu0 0
      %487 = vmatpush2.bf16.msra.mxu0 0
      %488 = vmatprep.subr.bf16.mxu0 0
      %489 = vmatpush2.bf16.msra.mxu0 0
      %490 = vmatprep.subr.bf16.mxu0 0
      %491 = vmatpush2.bf16.msra.mxu0 0
      %492 = vmatprep.subr.bf16.mxu0 0
      %493 = vmatpush2.bf16.msra.mxu0 0
      %494 = vmatprep.subr.bf16.mxu0 0
      %495 = vmatpush2.bf16.msra.mxu0 0
      %496 = vmatprep.subr.bf16.mxu0 0
      %497 = vmatpush2.bf16.msra.mxu0 0
      %498 = vmatprep.subr.bf16.mxu0 0
      %499 = vmatpush2.bf16.msra.mxu0 0
      %500 = vmatprep.mubr.bf16.mxu0 0
      %501 = vmatmul.mubr.bf16.gmra.mxu0 %v459
      %v502 = vpop.f32.mrf.mxu0
      %v503 = vadd.f32 0.0, %v502
      %v504 = vpop.f32.mrf.mxu0
      %v505 = vpop.f32.mrf.mxu0
      %v506 = vadd.f32 0.0, %v505
      %v507 = vpop.f32.mrf.mxu0
      %508 = vdwg.mxu0
      %510 = vrot.lane.b32.xlu0 %v379, 120
      %v511 = vpop.permute.xlu0 %510
      %512 = vrot.lane.b32.xlu0 %v380, 56
      %v513 = vpop.permute.xlu0 %512
      %v515 = vsel %vm385, %v511, 0
      %v518 = vsel %vm385, %v513, 0
      %520 = vmatprep.subr.bf16.mxu0 0
      %521 = vmatpush1.bf16.xpose.msra.mxu0 0
      %522 = vmatprep.subr.bf16.mxu0 0
      %523 = vmatpush1.bf16.xpose.msra.mxu0 0
      %524 = vmatprep.subr.bf16.mxu0 0
      %525 = vmatpush1.bf16.xpose.msra.mxu0 0
      %526 = vmatprep.subr.bf16.mxu0 0
      %527 = vmatpush1.bf16.xpose.msra.mxu0 0
      %528 = vmatprep.subr.bf16.mxu0 0
      %529 = vmatpush1.bf16.xpose.msra.mxu0 0
      %530 = vmatprep.subr.bf16.mxu0 0
      %531 = vmatpush1.bf16.xpose.msra.mxu0 0
      %532 = vmatprep.subr.bf16.mxu0 0
      %533 = vmatpush1.bf16.xpose.msra.mxu0 0
      %534 = vmatprep.subr.bf16.mxu0 0
      %535 = vmatpush1.bf16.xpose.msra.mxu0 %v518
      %536 = vmatprep.subr.bf16.mxu0 0
      %537 = vmatpush2.bf16.xpose.msra.mxu0 0
      %538 = vmatprep.subr.bf16.mxu0 0
      %539 = vmatpush2.bf16.xpose.msra.mxu0 0
      %540 = vmatprep.subr.bf16.mxu0 0
      %541 = vmatpush2.bf16.xpose.msra.mxu0 0
      %542 = vmatprep.subr.bf16.mxu0 0
      %543 = vmatpush2.bf16.xpose.msra.mxu0 0
      %544 = vmatprep.subr.bf16.mxu0 0
      %545 = vmatpush2.bf16.xpose.msra.mxu0 0
      %546 = vmatprep.subr.bf16.mxu0 0
      %547 = vmatpush2.bf16.xpose.msra.mxu0 0
      %548 = vmatprep.subr.bf16.mxu0 0
      %549 = vmatpush2.bf16.xpose.msra.mxu0 0
      %550 = vmatprep.subr.bf16.mxu0 0
      %551 = vmatpush2.bf16.xpose.msra.mxu0 0
      %552 = vmatprep.mubr.bf16.mxu0 0
      %553 = vmatmul.mubr.bf16.gmra.mxu0 %v515
      %v554 = vpop.f32.mrf.mxu0
      %v555 = vadd.f32 0.0, %v554
      %v556 = vpop.f32.mrf.mxu0
      %v557 = vpop.f32.mrf.mxu0
      %v558 = vadd.f32 0.0, %v557
      %v559 = vpop.f32.mrf.mxu0
      %560 = vdwg.mxu0
      %v561 = vsel %vm433, %v555, -inf
      %562 = vmax.xlane.f32.xlu0 %v561
      %v563 = vpop.xlane.xlu0 %562
      %v564 = vsel %vm437, %v558, -inf
      %565 = vmax.xlane.f32.xlu0 %v564
      %v566 = vpop.xlane.xlu0 %565
      %v567 = vsub.f32 %v555, %v563
      %v568 = vsub.f32 %v558, %v566
      %v569 = vmul.f32 %v567, 1.442695
      %v570 = vpow.pop %v569
      %v571 = vmul.f32 %v568, 1.442695
      %v572 = vpow.pop %v571
      %v573 = vsel %vm433, %v570, 0.0
      %574 = vadd.xlane.f32.xlu0 %v573
      %v575 = vpop.xlane.xlu0 %574
      %v576 = vsel %vm437, %v572, 0.0
      %577 = vadd.xlane.f32.xlu0 %v576
      %v578 = vpop.xlane.xlu0 %577
      %v579 = vrcp.pop %v575
      %v580 = vrcp.pop %v578
      %v581 = vmul.f32 %v570, %v579
      %v582 = vmul.f32 %v572, %v580
      %v583 = vpack.c.bf16 %v582, %v581
      %585 = vrot.lane.b32.xlu0 %v381, 120
      %v586 = vpop.permute.xlu0 %585
      %v588 = vsel %vm433, %v583, 0
      %v591 = vand.u32 %v586, %v464
      %593 = vmatprep.subr.bf16.mxu0 0
      %594 = vmatpush1.bf16.msra.mxu0 0
      %595 = vmatprep.subr.bf16.mxu0 0
      %596 = vmatpush1.bf16.msra.mxu0 0
      %597 = vmatprep.subr.bf16.mxu0 0
      %598 = vmatpush1.bf16.msra.mxu0 0
      %599 = vmatprep.subr.bf16.mxu0 0
      %600 = vmatpush1.bf16.msra.mxu0 0
      %601 = vmatprep.subr.bf16.mxu0 0
      %602 = vmatpush1.bf16.msra.mxu0 0
      %603 = vmatprep.subr.bf16.mxu0 0
      %604 = vmatpush1.bf16.msra.mxu0 0
      %605 = vmatprep.subr.bf16.mxu0 0
      %606 = vmatpush1.bf16.msra.mxu0 0
      %607 = vmatprep.subr.bf16.mxu0 0
      %608 = vmatpush1.bf16.msra.mxu0 %v591
      %609 = vmatprep.subr.bf16.mxu0 0
      %610 = vmatpush2.bf16.msra.mxu0 0
      %611 = vmatprep.subr.bf16.mxu0 0
      %612 = vmatpush2.bf16.msra.mxu0 0
      %613 = vmatprep.subr.bf16.mxu0 0
      %614 = vmatpush2.bf16.msra.mxu0 0
      %615 = vmatprep.subr.bf16.mxu0 0
      %616 = vmatpush2.bf16.msra.mxu0 0
      %617 = vmatprep.subr.bf16.mxu0 0
      %618 = vmatpush2.bf16.msra.mxu0 0
      %619 = vmatprep.subr.bf16.mxu0 0
      %620 = vmatpush2.bf16.msra.mxu0 0
      %621 = vmatprep.subr.bf16.mxu0 0
      %622 = vmatpush2.bf16.msra.mxu0 0
      %623 = vmatprep.subr.bf16.mxu0 0
      %624 = vmatpush2.bf16.msra.mxu0 0
      %625 = vmatprep.mubr.bf16.mxu0 0
      %626 = vmatmul.mubr.bf16.gmra.mxu0 %v588
      %v627 = vpop.f32.mrf.mxu0
      %v628 = vadd.f32 0.0, %v627
      %v629 = vpop.f32.mrf.mxu0
      %v630 = vpop.f32.mrf.mxu0
      %v631 = vadd.f32 0.0, %v630
      %v632 = vpop.f32.mrf.mxu0
      %633 = vdwg.mxu0
      %634 = vrot.lane.b32.xlu0 %v379, 112
      %v635 = vpop.permute.xlu0 %634
      %636 = vrot.lane.b32.xlu0 %v380, 48
      %v637 = vpop.permute.xlu0 %636
      %v639 = vsel %vm385, %v635, 0
      %v642 = vsel %vm385, %v637, 0
      %644 = vmatprep.subr.bf16.mxu0 0
      %645 = vmatpush1.bf16.xpose.msra.mxu0 0
      %646 = vmatprep.subr.bf16.mxu0 0
      %647 = vmatpush1.bf16.xpose.msra.mxu0 0
      %648 = vmatprep.subr.bf16.mxu0 0
      %649 = vmatpush1.bf16.xpose.msra.mxu0 0
      %650 = vmatprep.subr.bf16.mxu0 0
      %651 = vmatpush1.bf16.xpose.msra.mxu0 0
      %652 = vmatprep.subr.bf16.mxu0 0
      %653 = vmatpush1.bf16.xpose.msra.mxu0 0
      %654 = vmatprep.subr.bf16.mxu0 0
      %655 = vmatpush1.bf16.xpose.msra.mxu0 0
      %656 = vmatprep.subr.bf16.mxu0 0
      %657 = vmatpush1.bf16.xpose.msra.mxu0 0
      %658 = vmatprep.subr.bf16.mxu0 0
      %659 = vmatpush1.bf16.xpose.msra.mxu0 %v642
      %660 = vmatprep.subr.bf16.mxu0 0
      %661 = vmatpush2.bf16.xpose.msra.mxu0 0
      %662 = vmatprep.subr.bf16.mxu0 0
      %663 = vmatpush2.bf16.xpose.msra.mxu0 0
      %664 = vmatprep.subr.bf16.mxu0 0
      %665 = vmatpush2.bf16.xpose.msra.mxu0 0
      %666 = vmatprep.subr.bf16.mxu0 0
      %667 = vmatpush2.bf16.xpose.msra.mxu0 0
      %668 = vmatprep.subr.bf16.mxu0 0
      %669 = vmatpush2.bf16.xpose.msra.mxu0 0
      %670 = vmatprep.subr.bf16.mxu0 0
      %671 = vmatpush2.bf16.xpose.msra.mxu0 0
      %672 = vmatprep.subr.bf16.mxu0 0
      %673 = vmatpush2.bf16.xpose.msra.mxu0 0
      %674 = vmatprep.subr.bf16.mxu0 0
      %675 = vmatpush2.bf16.xpose.msra.mxu0 0
      %676 = vmatprep.mubr.bf16.mxu0 0
      %677 = vmatmul.mubr.bf16.gmra.mxu0 %v639
      %v678 = vpop.f32.mrf.mxu0
      %v679 = vadd.f32 0.0, %v678
      %v680 = vpop.f32.mrf.mxu0
      %v681 = vpop.f32.mrf.mxu0
      %v682 = vadd.f32 0.0, %v681
      %v683 = vpop.f32.mrf.mxu0
      %684 = vdwg.mxu0
      %v685 = vsel %vm433, %v679, -inf
      %686 = vmax.xlane.f32.xlu0 %v685
      %v687 = vpop.xlane.xlu0 %686
      %v688 = vsel %vm437, %v682, -inf
      %689 = vmax.xlane.f32.xlu0 %v688
      %v690 = vpop.xlane.xlu0 %689
      %v691 = vsub.f32 %v679, %v687
      %v692 = vsub.f32 %v682, %v690
      %v693 = vmul.f32 %v691, 1.442695
      %v694 = vpow.pop %v693
      %v695 = vmul.f32 %v692, 1.442695
      %v696 = vpow.pop %v695
      %v697 = vsel %vm433, %v694, 0.0
      %698 = vadd.xlane.f32.xlu0 %v697
      %v699 = vpop.xlane.xlu0 %698
      %v700 = vsel %vm437, %v696, 0.0
      %701 = vadd.xlane.f32.xlu0 %v700
      %v702 = vpop.xlane.xlu0 %701
      %v703 = vrcp.pop %v699
      %v704 = vrcp.pop %v702
      %v705 = vmul.f32 %v694, %v703
      %v706 = vmul.f32 %v696, %v704
      %v707 = vpack.c.bf16 %v706, %v705
      %708 = vrot.lane.b32.xlu0 %v381, 112
      %v709 = vpop.permute.xlu0 %708
      %v711 = vsel %vm433, %v707, 0
      %v714 = vand.u32 %v709, %v464
      %716 = vmatprep.subr.bf16.mxu0 0
      %717 = vmatpush1.bf16.msra.mxu0 0
      %718 = vmatprep.subr.bf16.mxu0 0
      %719 = vmatpush1.bf16.msra.mxu0 0
      %720 = vmatprep.subr.bf16.mxu0 0
      %721 = vmatpush1.bf16.msra.mxu0 0
      %722 = vmatprep.subr.bf16.mxu0 0
      %723 = vmatpush1.bf16.msra.mxu0 0
      %724 = vmatprep.subr.bf16.mxu0 0
      %725 = vmatpush1.bf16.msra.mxu0 0
      %726 = vmatprep.subr.bf16.mxu0 0
      %727 = vmatpush1.bf16.msra.mxu0 0
      %728 = vmatprep.subr.bf16.mxu0 0
      %729 = vmatpush1.bf16.msra.mxu0 0
      %730 = vmatprep.subr.bf16.mxu0 0
      %731 = vmatpush1.bf16.msra.mxu0 %v714
      %732 = vmatprep.subr.bf16.mxu0 0
      %733 = vmatpush2.bf16.msra.mxu0 0
      %734 = vmatprep.subr.bf16.mxu0 0
      %735 = vmatpush2.bf16.msra.mxu0 0
      %736 = vmatprep.subr.bf16.mxu0 0
      %737 = vmatpush2.bf16.msra.mxu0 0
      %738 = vmatprep.subr.bf16.mxu0 0
      %739 = vmatpush2.bf16.msra.mxu0 0
      %740 = vmatprep.subr.bf16.mxu0 0
      %741 = vmatpush2.bf16.msra.mxu0 0
      %742 = vmatprep.subr.bf16.mxu0 0
      %743 = vmatpush2.bf16.msra.mxu0 0
      %744 = vmatprep.subr.bf16.mxu0 0
      %745 = vmatpush2.bf16.msra.mxu0 0
      %746 = vmatprep.subr.bf16.mxu0 0
      %747 = vmatpush2.bf16.msra.mxu0 0
      %748 = vmatprep.mubr.bf16.mxu0 0
      %749 = vmatmul.mubr.bf16.gmra.mxu0 %v711
      %v750 = vpop.f32.mrf.mxu0
      %v751 = vadd.f32 0.0, %v750
      %v752 = vpop.f32.mrf.mxu0
      %v753 = vpop.f32.mrf.mxu0
      %v754 = vadd.f32 0.0, %v753
      %v755 = vpop.f32.mrf.mxu0
      %756 = vdwg.mxu0
      %757 = vrot.lane.b32.xlu0 %v379, 104
      %v758 = vpop.permute.xlu0 %757
      %759 = vrot.lane.b32.xlu0 %v380, 40
      %v760 = vpop.permute.xlu0 %759
      %v762 = vsel %vm385, %v758, 0
      %v765 = vsel %vm385, %v760, 0
      %767 = vmatprep.subr.bf16.mxu0 0
      %768 = vmatpush1.bf16.xpose.msra.mxu0 0
      %769 = vmatprep.subr.bf16.mxu0 0
      %770 = vmatpush1.bf16.xpose.msra.mxu0 0
      %771 = vmatprep.subr.bf16.mxu0 0
      %772 = vmatpush1.bf16.xpose.msra.mxu0 0
      %773 = vmatprep.subr.bf16.mxu0 0
      %774 = vmatpush1.bf16.xpose.msra.mxu0 0
      %775 = vmatprep.subr.bf16.mxu0 0
      %776 = vmatpush1.bf16.xpose.msra.mxu0 0
      %777 = vmatprep.subr.bf16.mxu0 0
      %778 = vmatpush1.bf16.xpose.msra.mxu0 0
      %779 = vmatprep.subr.bf16.mxu0 0
      %780 = vmatpush1.bf16.xpose.msra.mxu0 0
      %781 = vmatprep.subr.bf16.mxu0 0
      %782 = vmatpush1.bf16.xpose.msra.mxu0 %v765
      %783 = vmatprep.subr.bf16.mxu0 0
      %784 = vmatpush2.bf16.xpose.msra.mxu0 0
      %785 = vmatprep.subr.bf16.mxu0 0
      %786 = vmatpush2.bf16.xpose.msra.mxu0 0
      %787 = vmatprep.subr.bf16.mxu0 0
      %788 = vmatpush2.bf16.xpose.msra.mxu0 0
      %789 = vmatprep.subr.bf16.mxu0 0
      %790 = vmatpush2.bf16.xpose.msra.mxu0 0
      %791 = vmatprep.subr.bf16.mxu0 0
      %792 = vmatpush2.bf16.xpose.msra.mxu0 0
      %793 = vmatprep.subr.bf16.mxu0 0
      %794 = vmatpush2.bf16.xpose.msra.mxu0 0
      %795 = vmatprep.subr.bf16.mxu0 0
      %796 = vmatpush2.bf16.xpose.msra.mxu0 0
      %797 = vmatprep.subr.bf16.mxu0 0
      %798 = vmatpush2.bf16.xpose.msra.mxu0 0
      %799 = vmatprep.mubr.bf16.mxu0 0
      %800 = vmatmul.mubr.bf16.gmra.mxu0 %v762
      %v801 = vpop.f32.mrf.mxu0
      %v802 = vadd.f32 0.0, %v801
      %v803 = vpop.f32.mrf.mxu0
      %v804 = vpop.f32.mrf.mxu0
      %v805 = vadd.f32 0.0, %v804
      %v806 = vpop.f32.mrf.mxu0
      %807 = vdwg.mxu0
      %v808 = vsel %vm433, %v802, -inf
      %809 = vmax.xlane.f32.xlu0 %v808
      %v810 = vpop.xlane.xlu0 %809
      %v811 = vsel %vm437, %v805, -inf
      %812 = vmax.xlane.f32.xlu0 %v811
      %v813 = vpop.xlane.xlu0 %812
      %v814 = vsub.f32 %v802, %v810
      %v815 = vsub.f32 %v805, %v813
      %v816 = vmul.f32 %v814, 1.442695
      %v817 = vpow.pop %v816
      %v818 = vmul.f32 %v815, 1.442695
      %v819 = vpow.pop %v818
      %v820 = vsel %vm433, %v817, 0.0
      %821 = vadd.xlane.f32.xlu0 %v820
      %v822 = vpop.xlane.xlu0 %821
      %v823 = vsel %vm437, %v819, 0.0
      %824 = vadd.xlane.f32.xlu0 %v823
      %v825 = vpop.xlane.xlu0 %824
      %v826 = vrcp.pop %v822
      %v827 = vrcp.pop %v825
      %v828 = vmul.f32 %v817, %v826
      %v829 = vmul.f32 %v819, %v827
      %v830 = vpack.c.bf16 %v829, %v828
      %831 = vrot.lane.b32.xlu0 %v381, 104
      %v832 = vpop.permute.xlu0 %831
      %v834 = vsel %vm433, %v830, 0
      %v837 = vand.u32 %v832, %v464
      %839 = vmatprep.subr.bf16.mxu0 0
      %840 = vmatpush1.bf16.msra.mxu0 0
      %841 = vmatprep.subr.bf16.mxu0 0
      %842 = vmatpush1.bf16.msra.mxu0 0
      %843 = vmatprep.subr.bf16.mxu0 0
      %844 = vmatpush1.bf16.msra.mxu0 0
      %845 = vmatprep.subr.bf16.mxu0 0
      %846 = vmatpush1.bf16.msra.mxu0 0
      %847 = vmatprep.subr.bf16.mxu0 0
      %848 = vmatpush1.bf16.msra.mxu0 0
      %849 = vmatprep.subr.bf16.mxu0 0
      %850 = vmatpush1.bf16.msra.mxu0 0
      %851 = vmatprep.subr.bf16.mxu0 0
      %852 = vmatpush1.bf16.msra.mxu0 0
      %853 = vmatprep.subr.bf16.mxu0 0
      %854 = vmatpush1.bf16.msra.mxu0 %v837
      %855 = vmatprep.subr.bf16.mxu0 0
      %856 = vmatpush2.bf16.msra.mxu0 0
      %857 = vmatprep.subr.bf16.mxu0 0
      %858 = vmatpush2.bf16.msra.mxu0 0
      %859 = vmatprep.subr.bf16.mxu0 0
      %860 = vmatpush2.bf16.msra.mxu0 0
      %861 = vmatprep.subr.bf16.mxu0 0
      %862 = vmatpush2.bf16.msra.mxu0 0
      %863 = vmatprep.subr.bf16.mxu0 0
      %864 = vmatpush2.bf16.msra.mxu0 0
      %865 = vmatprep.subr.bf16.mxu0 0
      %866 = vmatpush2.bf16.msra.mxu0 0
      %867 = vmatprep.subr.bf16.mxu0 0
      %868 = vmatpush2.bf16.msra.mxu0 0
      %869 = vmatprep.subr.bf16.mxu0 0
      %870 = vmatpush2.bf16.msra.mxu0 0
      %871 = vmatprep.mubr.bf16.mxu0 0
      %872 = vmatmul.mubr.bf16.gmra.mxu0 %v834
      %v873 = vpop.f32.mrf.mxu0
      %v874 = vadd.f32 0.0, %v873
      %v875 = vpop.f32.mrf.mxu0
      %v876 = vpop.f32.mrf.mxu0
      %v877 = vadd.f32 0.0, %v876
      %v878 = vpop.f32.mrf.mxu0
      %879 = vdwg.mxu0
      %880 = vrot.lane.b32.xlu0 %v379, 96
      %v881 = vpop.permute.xlu0 %880
      %882 = vrot.lane.b32.xlu0 %v380, 32
      %v883 = vpop.permute.xlu0 %882
      %v885 = vsel %vm385, %v881, 0
      %v888 = vsel %vm385, %v883, 0
      %890 = vmatprep.subr.bf16.mxu0 0
      %891 = vmatpush1.bf16.xpose.msra.mxu0 0
      %892 = vmatprep.subr.bf16.mxu0 0
      %893 = vmatpush1.bf16.xpose.msra.mxu0 0
      %894 = vmatprep.subr.bf16.mxu0 0
      %895 = vmatpush1.bf16.xpose.msra.mxu0 0
      %896 = vmatprep.subr.bf16.mxu0 0
      %897 = vmatpush1.bf16.xpose.msra.mxu0 0
      %898 = vmatprep.subr.bf16.mxu0 0
      %899 = vmatpush1.bf16.xpose.msra.mxu0 0
      %900 = vmatprep.subr.bf16.mxu0 0
      %901 = vmatpush1.bf16.xpose.msra.mxu0 0
      %902 = vmatprep.subr.bf16.mxu0 0
      %903 = vmatpush1.bf16.xpose.msra.mxu0 0
      %904 = vmatprep.subr.bf16.mxu0 0
      %905 = vmatpush1.bf16.xpose.msra.mxu0 %v888
      %906 = vmatprep.subr.bf16.mxu0 0
      %907 = vmatpush2.bf16.xpose.msra.mxu0 0
      %908 = vmatprep.subr.bf16.mxu0 0
      %909 = vmatpush2.bf16.xpose.msra.mxu0 0
      %910 = vmatprep.subr.bf16.mxu0 0
      %911 = vmatpush2.bf16.xpose.msra.mxu0 0
      %912 = vmatprep.subr.bf16.mxu0 0
      %913 = vmatpush2.bf16.xpose.msra.mxu0 0
      %914 = vmatprep.subr.bf16.mxu0 0
      %915 = vmatpush2.bf16.xpose.msra.mxu0 0
      %916 = vmatprep.subr.bf16.mxu0 0
      %917 = vmatpush2.bf16.xpose.msra.mxu0 0
      %918 = vmatprep.subr.bf16.mxu0 0
      %919 = vmatpush2.bf16.xpose.msra.mxu0 0
      %920 = vmatprep.subr.bf16.mxu0 0
      %921 = vmatpush2.bf16.xpose.msra.mxu0 0
      %922 = vmatprep.mubr.bf16.mxu0 0
      %923 = vmatmul.mubr.bf16.gmra.mxu0 %v885
      %v924 = vpop.f32.mrf.mxu0
      %v925 = vadd.f32 0.0, %v924
      %v926 = vpop.f32.mrf.mxu0
      %v927 = vpop.f32.mrf.mxu0
      %v928 = vadd.f32 0.0, %v927
      %v929 = vpop.f32.mrf.mxu0
      %930 = vdwg.mxu0
      %v931 = vsel %vm433, %v925, -inf
      %932 = vmax.xlane.f32.xlu0 %v931
      %v933 = vpop.xlane.xlu0 %932
      %v934 = vsel %vm437, %v928, -inf
      %935 = vmax.xlane.f32.xlu0 %v934
      %v936 = vpop.xlane.xlu0 %935
      %v937 = vsub.f32 %v925, %v933
      %v938 = vsub.f32 %v928, %v936
      %v939 = vmul.f32 %v937, 1.442695
      %v940 = vpow.pop %v939
      %v941 = vmul.f32 %v938, 1.442695
      %v942 = vpow.pop %v941
      %v943 = vsel %vm433, %v940, 0.0
      %944 = vadd.xlane.f32.xlu0 %v943
      %v945 = vpop.xlane.xlu0 %944
      %v946 = vsel %vm437, %v942, 0.0
      %947 = vadd.xlane.f32.xlu0 %v946
      %v948 = vpop.xlane.xlu0 %947
      %v949 = vrcp.pop %v945
      %v950 = vrcp.pop %v948
      %v951 = vmul.f32 %v940, %v949
      %v952 = vmul.f32 %v942, %v950
      %v953 = vpack.c.bf16 %v952, %v951
      %954 = vrot.lane.b32.xlu0 %v381, 96
      %v955 = vpop.permute.xlu0 %954
      %v957 = vsel %vm433, %v953, 0
      %v960 = vand.u32 %v955, %v464
      %962 = vmatprep.subr.bf16.mxu0 0
      %963 = vmatpush1.bf16.msra.mxu0 0
      %964 = vmatprep.subr.bf16.mxu0 0
      %965 = vmatpush1.bf16.msra.mxu0 0
      %966 = vmatprep.subr.bf16.mxu0 0
      %967 = vmatpush1.bf16.msra.mxu0 0
      %968 = vmatprep.subr.bf16.mxu0 0
      %969 = vmatpush1.bf16.msra.mxu0 0
      %970 = vmatprep.subr.bf16.mxu0 0
      %971 = vmatpush1.bf16.msra.mxu0 0
      %972 = vmatprep.subr.bf16.mxu0 0
      %973 = vmatpush1.bf16.msra.mxu0 0
      %974 = vmatprep.subr.bf16.mxu0 0
      %975 = vmatpush1.bf16.msra.mxu0 0
      %976 = vmatprep.subr.bf16.mxu0 0
      %977 = vmatpush1.bf16.msra.mxu0 %v960
      %978 = vmatprep.subr.bf16.mxu0 0
      %979 = vmatpush2.bf16.msra.mxu0 0
      %980 = vmatprep.subr.bf16.mxu0 0
      %981 = vmatpush2.bf16.msra.mxu0 0
      %982 = vmatprep.subr.bf16.mxu0 0
      %983 = vmatpush2.bf16.msra.mxu0 0
      %984 = vmatprep.subr.bf16.mxu0 0
      %985 = vmatpush2.bf16.msra.mxu0 0
      %986 = vmatprep.subr.bf16.mxu0 0
      %987 = vmatpush2.bf16.msra.mxu0 0
      %988 = vmatprep.subr.bf16.mxu0 0
      %989 = vmatpush2.bf16.msra.mxu0 0
      %990 = vmatprep.subr.bf16.mxu0 0
      %991 = vmatpush2.bf16.msra.mxu0 0
      %992 = vmatprep.subr.bf16.mxu0 0
      %993 = vmatpush2.bf16.msra.mxu0 0
      %994 = vmatprep.mubr.bf16.mxu0 0
      %995 = vmatmul.mubr.bf16.gmra.mxu0 %v957
      %v996 = vpop.f32.mrf.mxu0
      %v997 = vadd.f32 0.0, %v996
      %v998 = vpop.f32.mrf.mxu0
      %v999 = vpop.f32.mrf.mxu0
      %v1000 = vadd.f32 0.0, %v999
      %v1001 = vpop.f32.mrf.mxu0
      %1002 = vdwg.mxu0
      %1003 = vrot.lane.b32.xlu0 %v379, 88
      %v1004 = vpop.permute.xlu0 %1003
      %1005 = vrot.lane.b32.xlu0 %v380, 24
      %v1006 = vpop.permute.xlu0 %1005
      %v1008 = vsel %vm385, %v1004, 0
      %v1011 = vsel %vm385, %v1006, 0
      %1013 = vmatprep.subr.bf16.mxu0 0
      %1014 = vmatpush1.bf16.xpose.msra.mxu0 0
      %1015 = vmatprep.subr.bf16.mxu0 0
      %1016 = vmatpush1.bf16.xpose.msra.mxu0 0
      %1017 = vmatprep.subr.bf16.mxu0 0
      %1018 = vmatpush1.bf16.xpose.msra.mxu0 0
      %1019 = vmatprep.subr.bf16.mxu0 0
      %1020 = vmatpush1.bf16.xpose.msra.mxu0 0
      %1021 = vmatprep.subr.bf16.mxu0 0
      %1022 = vmatpush1.bf16.xpose.msra.mxu0 0
      %1023 = vmatprep.subr.bf16.mxu0 0
      %1024 = vmatpush1.bf16.xpose.msra.mxu0 0
      %1025 = vmatprep.subr.bf16.mxu0 0
      %1026 = vmatpush1.bf16.xpose.msra.mxu0 0
      %1027 = vmatprep.subr.bf16.mxu0 0
      %1028 = vmatpush1.bf16.xpose.msra.mxu0 %v1011
      %1029 = vmatprep.subr.bf16.mxu0 0
      %1030 = vmatpush2.bf16.xpose.msra.mxu0 0
      %1031 = vmatprep.subr.bf16.mxu0 0
      %1032 = vmatpush2.bf16.xpose.msra.mxu0 0
      %1033 = vmatprep.subr.bf16.mxu0 0
      %1034 = vmatpush2.bf16.xpose.msra.mxu0 0
      %1035 = vmatprep.subr.bf16.mxu0 0
      %1036 = vmatpush2.bf16.xpose.msra.mxu0 0
      %1037 = vmatprep.subr.bf16.mxu0 0
      %1038 = vmatpush2.bf16.xpose.msra.mxu0 0
      %1039 = vmatprep.subr.bf16.mxu0 0
      %1040 = vmatpush2.bf16.xpose.msra.mxu0 0
      %1041 = vmatprep.subr.bf16.mxu0 0
      %1042 = vmatpush2.bf16.xpose.msra.mxu0 0
      %1043 = vmatprep.subr.bf16.mxu0 0
      %1044 = vmatpush2.bf16.xpose.msra.mxu0 0
      %1045 = vmatprep.mubr.bf16.mxu0 0
      %1046 = vmatmul.mubr.bf16.gmra.mxu0 %v1008
      %v1047 = vpop.f32.mrf.mxu0
      %v1048 = vadd.f32 0.0, %v1047
      %v1049 = vpop.f32.mrf.mxu0
      %v1050 = vpop.f32.mrf.mxu0
      %v1051 = vadd.f32 0.0, %v1050
      %v1052 = vpop.f32.mrf.mxu0
      %1053 = vdwg.mxu0
      %v1054 = vsel %vm433, %v1048, -inf
      %1055 = vmax.xlane.f32.xlu0 %v1054
      %v1056 = vpop.xlane.xlu0 %1055
      %v1057 = vsel %vm437, %v1051, -inf
      %1058 = vmax.xlane.f32.xlu0 %v1057
      %v1059 = vpop.xlane.xlu0 %1058
      %v1060 = vsub.f32 %v1048, %v1056
      %v1061 = vsub.f32 %v1051, %v1059
      %v1062 = vmul.f32 %v1060, 1.442695
      %v1063 = vpow.pop %v1062
      %v1064 = vmul.f32 %v1061, 1.442695
      %v1065 = vpow.pop %v1064
      %v1066 = vsel %vm433, %v1063, 0.0
      %1067 = vadd.xlane.f32.xlu0 %v1066
      %v1068 = vpop.xlane.xlu0 %1067
      %v1069 = vsel %vm437, %v1065, 0.0
      %1070 = vadd.xlane.f32.xlu0 %v1069
      %v1071 = vpop.xlane.xlu0 %1070
      %v1072 = vrcp.pop %v1068
      %v1073 = vrcp.pop %v1071
      %v1074 = vmul.f32 %v1063, %v1072
      %v1075 = vmul.f32 %v1065, %v1073
      %v1076 = vpack.c.bf16 %v1075, %v1074
      %1077 = vrot.lane.b32.xlu0 %v381, 88
      %v1078 = vpop.permute.xlu0 %1077
      %v1080 = vsel %vm433, %v1076, 0
      %v1083 = vand.u32 %v1078, %v464
      %1085 = vmatprep.subr.bf16.mxu0 0
      %1086 = vmatpush1.bf16.msra.mxu0 0
      %1087 = vmatprep.subr.bf16.mxu0 0
      %1088 = vmatpush1.bf16.msra.mxu0 0
      %1089 = vmatprep.subr.bf16.mxu0 0
      %1090 = vmatpush1.bf16.msra.mxu0 0
      %1091 = vmatprep.subr.bf16.mxu0 0
      %1092 = vmatpush1.bf16.msra.mxu0 0
      %1093 = vmatprep.subr.bf16.mxu0 0
      %1094 = vmatpush1.bf16.msra.mxu0 0
      %1095 = vmatprep.subr.bf16.mxu0 0
      %1096 = vmatpush1.bf16.msra.mxu0 0
      %1097 = vmatprep.subr.bf16.mxu0 0
      %1098 = vmatpush1.bf16.msra.mxu0 0
      %1099 = vmatprep.subr.bf16.mxu0 0
      %1100 = vmatpush1.bf16.msra.mxu0 %v1083
      %1101 = vmatprep.subr.bf16.mxu0 0
      %1102 = vmatpush2.bf16.msra.mxu0 0
      %1103 = vmatprep.subr.bf16.mxu0 0
      %1104 = vmatpush2.bf16.msra.mxu0 0
      %1105 = vmatprep.subr.bf16.mxu0 0
      %1106 = vmatpush2.bf16.msra.mxu0 0
      %1107 = vmatprep.subr.bf16.mxu0 0
      %1108 = vmatpush2.bf16.msra.mxu0 0
      %1109 = vmatprep.subr.bf16.mxu0 0
      %1110 = vmatpush2.bf16.msra.mxu0 0
      %1111 = vmatprep.subr.bf16.mxu0 0
      %1112 = vmatpush2.bf16.msra.mxu0 0
      %1113 = vmatprep.subr.bf16.mxu0 0
      %1114 = vmatpush2.bf16.msra.mxu0 0
      %1115 = vmatprep.subr.bf16.mxu0 0
      %1116 = vmatpush2.bf16.msra.mxu0 0
      %1117 = vmatprep.mubr.bf16.mxu0 0
      %1118 = vmatmul.mubr.bf16.gmra.mxu0 %v1080
      %v1119 = vpop.f32.mrf.mxu0
      %v1120 = vadd.f32 0.0, %v1119
      %v1121 = vpop.f32.mrf.mxu0
      %v1122 = vpop.f32.mrf.mxu0
      %v1123 = vadd.f32 0.0, %v1122
      %v1124 = vpop.f32.mrf.mxu0
      %1125 = vdwg.mxu0
      %1126 = vrot.lane.b32.xlu0 %v379, 80
      %v1127 = vpop.permute.xlu0 %1126
      %1128 = vrot.lane.b32.xlu0 %v380, 16
      %v1129 = vpop.permute.xlu0 %1128
      %v1131 = vsel %vm385, %v1127, 0
      %v1134 = vsel %vm385, %v1129, 0
      %1136 = vmatprep.subr.bf16.mxu0 0
      %1137 = vmatpush1.bf16.xpose.msra.mxu0 0
      %1138 = vmatprep.subr.bf16.mxu0 0
      %1139 = vmatpush1.bf16.xpose.msra.mxu0 0
      %1140 = vmatprep.subr.bf16.mxu0 0
      %1141 = vmatpush1.bf16.xpose.msra.mxu0 0
      %1142 = vmatprep.subr.bf16.mxu0 0
      %1143 = vmatpush1.bf16.xpose.msra.mxu0 0
      %1144 = vmatprep.subr.bf16.mxu0 0
      %1145 = vmatpush1.bf16.xpose.msra.mxu0 0
      %1146 = vmatprep.subr.bf16.mxu0 0
      %1147 = vmatpush1.bf16.xpose.msra.mxu0 0
      %1148 = vmatprep.subr.bf16.mxu0 0
      %1149 = vmatpush1.bf16.xpose.msra.mxu0 0
      %1150 = vmatprep.subr.bf16.mxu0 0
      %1151 = vmatpush1.bf16.xpose.msra.mxu0 %v1134
      %1152 = vmatprep.subr.bf16.mxu0 0
      %1153 = vmatpush2.bf16.xpose.msra.mxu0 0
      %1154 = vmatprep.subr.bf16.mxu0 0
      %1155 = vmatpush2.bf16.xpose.msra.mxu0 0
      %1156 = vmatprep.subr.bf16.mxu0 0
      %1157 = vmatpush2.bf16.xpose.msra.mxu0 0
      %1158 = vmatprep.subr.bf16.mxu0 0
      %1159 = vmatpush2.bf16.xpose.msra.mxu0 0
      %1160 = vmatprep.subr.bf16.mxu0 0
      %1161 = vmatpush2.bf16.xpose.msra.mxu0 0
      %1162 = vmatprep.subr.bf16.mxu0 0
      %1163 = vmatpush2.bf16.xpose.msra.mxu0 0
      %1164 = vmatprep.subr.bf16.mxu0 0
      %1165 = vmatpush2.bf16.xpose.msra.mxu0 0
      %1166 = vmatprep.subr.bf16.mxu0 0
      %1167 = vmatpush2.bf16.xpose.msra.mxu0 0
      %1168 = vmatprep.mubr.bf16.mxu0 0
      %1169 = vmatmul.mubr.bf16.gmra.mxu0 %v1131
      %v1170 = vpop.f32.mrf.mxu0
      %v1171 = vadd.f32 0.0, %v1170
      %v1172 = vpop.f32.mrf.mxu0
      %v1173 = vpop.f32.mrf.mxu0
      %v1174 = vadd.f32 0.0, %v1173
      %v1175 = vpop.f32.mrf.mxu0
      %1176 = vdwg.mxu0
      %v1177 = vsel %vm433, %v1171, -inf
      %1178 = vmax.xlane.f32.xlu0 %v1177
      %v1179 = vpop.xlane.xlu0 %1178
      %v1180 = vsel %vm437, %v1174, -inf
      %1181 = vmax.xlane.f32.xlu0 %v1180
      %v1182 = vpop.xlane.xlu0 %1181
      %v1183 = vsub.f32 %v1171, %v1179
      %v1184 = vsub.f32 %v1174, %v1182
      %v1185 = vmul.f32 %v1183, 1.442695
      %v1186 = vpow.pop %v1185
      %v1187 = vmul.f32 %v1184, 1.442695
      %v1188 = vpow.pop %v1187
      %v1189 = vsel %vm433, %v1186, 0.0
      %1190 = vadd.xlane.f32.xlu0 %v1189
      %v1191 = vpop.xlane.xlu0 %1190
      %v1192 = vsel %vm437, %v1188, 0.0
      %1193 = vadd.xlane.f32.xlu0 %v1192
      %v1194 = vpop.xlane.xlu0 %1193
      %v1195 = vrcp.pop %v1191
      %v1196 = vrcp.pop %v1194
      %v1197 = vmul.f32 %v1186, %v1195
      %v1198 = vmul.f32 %v1188, %v1196
      %v1199 = vpack.c.bf16 %v1198, %v1197
      %1200 = vrot.lane.b32.xlu0 %v381, 80
      %v1201 = vpop.permute.xlu0 %1200
      %v1203 = vsel %vm433, %v1199, 0
      %v1206 = vand.u32 %v1201, %v464
      %1208 = vmatprep.subr.bf16.mxu0 0
      %1209 = vmatpush1.bf16.msra.mxu0 0
      %1210 = vmatprep.subr.bf16.mxu0 0
      %1211 = vmatpush1.bf16.msra.mxu0 0
      %1212 = vmatprep.subr.bf16.mxu0 0
      %1213 = vmatpush1.bf16.msra.mxu0 0
      %1214 = vmatprep.subr.bf16.mxu0 0
      %1215 = vmatpush1.bf16.msra.mxu0 0
      %1216 = vmatprep.subr.bf16.mxu0 0
      %1217 = vmatpush1.bf16.msra.mxu0 0
      %1218 = vmatprep.subr.bf16.mxu0 0
      %1219 = vmatpush1.bf16.msra.mxu0 0
      %1220 = vmatprep.subr.bf16.mxu0 0
      %1221 = vmatpush1.bf16.msra.mxu0 0
      %1222 = vmatprep.subr.bf16.mxu0 0
      %1223 = vmatpush1.bf16.msra.mxu0 %v1206
      %1224 = vmatprep.subr.bf16.mxu0 0
      %1225 = vmatpush2.bf16.msra.mxu0 0
      %1226 = vmatprep.subr.bf16.mxu0 0
      %1227 = vmatpush2.bf16.msra.mxu0 0
      %1228 = vmatprep.subr.bf16.mxu0 0
      %1229 = vmatpush2.bf16.msra.mxu0 0
      %1230 = vmatprep.subr.bf16.mxu0 0
      %1231 = vmatpush2.bf16.msra.mxu0 0
      %1232 = vmatprep.subr.bf16.mxu0 0
      %1233 = vmatpush2.bf16.msra.mxu0 0
      %1234 = vmatprep.subr.bf16.mxu0 0
      %1235 = vmatpush2.bf16.msra.mxu0 0
      %1236 = vmatprep.subr.bf16.mxu0 0
      %1237 = vmatpush2.bf16.msra.mxu0 0
      %1238 = vmatprep.subr.bf16.mxu0 0
      %1239 = vmatpush2.bf16.msra.mxu0 0
      %1240 = vmatprep.mubr.bf16.mxu0 0
      %1241 = vmatmul.mubr.bf16.gmra.mxu0 %v1203
      %v1242 = vpop.f32.mrf.mxu0
      %v1243 = vadd.f32 0.0, %v1242
      %v1244 = vpop.f32.mrf.mxu0
      %v1245 = vpop.f32.mrf.mxu0
      %v1246 = vadd.f32 0.0, %v1245
      %v1247 = vpop.f32.mrf.mxu0
      %1248 = vdwg.mxu0
      %1249 = vrot.lane.b32.xlu0 %v379, 72
      %v1250 = vpop.permute.xlu0 %1249
      %1251 = vrot.lane.b32.xlu0 %v380, 8
      %v1252 = vpop.permute.xlu0 %1251
      %v1254 = vsel %vm385, %v1250, 0
      %v1257 = vsel %vm385, %v1252, 0
      %1259 = vmatprep.subr.bf16.mxu0 0
      %1260 = vmatpush1.bf16.xpose.msra.mxu0 0
      %1261 = vmatprep.subr.bf16.mxu0 0
      %1262 = vmatpush1.bf16.xpose.msra.mxu0 0
      %1263 = vmatprep.subr.bf16.mxu0 0
      %1264 = vmatpush1.bf16.xpose.msra.mxu0 0
      %1265 = vmatprep.subr.bf16.mxu0 0
      %1266 = vmatpush1.bf16.xpose.msra.mxu0 0
      %1267 = vmatprep.subr.bf16.mxu0 0
      %1268 = vmatpush1.bf16.xpose.msra.mxu0 0
      %1269 = vmatprep.subr.bf16.mxu0 0
      %1270 = vmatpush1.bf16.xpose.msra.mxu0 0
      %1271 = vmatprep.subr.bf16.mxu0 0
      %1272 = vmatpush1.bf16.xpose.msra.mxu0 0
      %1273 = vmatprep.subr.bf16.mxu0 0
      %1274 = vmatpush1.bf16.xpose.msra.mxu0 %v1257
      %1275 = vmatprep.subr.bf16.mxu0 0
      %1276 = vmatpush2.bf16.xpose.msra.mxu0 0
      %1277 = vmatprep.subr.bf16.mxu0 0
      %1278 = vmatpush2.bf16.xpose.msra.mxu0 0
      %1279 = vmatprep.subr.bf16.mxu0 0
      %1280 = vmatpush2.bf16.xpose.msra.mxu0 0
      %1281 = vmatprep.subr.bf16.mxu0 0
      %1282 = vmatpush2.bf16.xpose.msra.mxu0 0
      %1283 = vmatprep.subr.bf16.mxu0 0
      %1284 = vmatpush2.bf16.xpose.msra.mxu0 0
      %1285 = vmatprep.subr.bf16.mxu0 0
      %1286 = vmatpush2.bf16.xpose.msra.mxu0 0
      %1287 = vmatprep.subr.bf16.mxu0 0
      %1288 = vmatpush2.bf16.xpose.msra.mxu0 0
      %1289 = vmatprep.subr.bf16.mxu0 0
      %1290 = vmatpush2.bf16.xpose.msra.mxu0 0
      %1291 = vmatprep.mubr.bf16.mxu0 0
      %1292 = vmatmul.mubr.bf16.gmra.mxu0 %v1254
      %v1293 = vpop.f32.mrf.mxu0
      %v1294 = vadd.f32 0.0, %v1293
      %v1295 = vpop.f32.mrf.mxu0
      %v1296 = vpop.f32.mrf.mxu0
      %v1297 = vadd.f32 0.0, %v1296
      %v1298 = vpop.f32.mrf.mxu0
      %1299 = vdwg.mxu0
      %v1300 = vsel %vm433, %v1294, -inf
      %1301 = vmax.xlane.f32.xlu0 %v1300
      %v1302 = vpop.xlane.xlu0 %1301
      %v1303 = vsel %vm437, %v1297, -inf
      %1304 = vmax.xlane.f32.xlu0 %v1303
      %v1305 = vpop.xlane.xlu0 %1304
      %v1306 = vsub.f32 %v1294, %v1302
      %v1307 = vsub.f32 %v1297, %v1305
      %v1308 = vmul.f32 %v1306, 1.442695
      %v1309 = vpow.pop %v1308
      %v1310 = vmul.f32 %v1307, 1.442695
      %v1311 = vpow.pop %v1310
      %v1312 = vsel %vm433, %v1309, 0.0
      %1313 = vadd.xlane.f32.xlu0 %v1312
      %v1314 = vpop.xlane.xlu0 %1313
      %v1315 = vsel %vm437, %v1311, 0.0
      %1316 = vadd.xlane.f32.xlu0 %v1315
      %v1317 = vpop.xlane.xlu0 %1316
      %v1318 = vrcp.pop %v1314
      %v1319 = vrcp.pop %v1317
      %v1320 = vmul.f32 %v1309, %v1318
      %v1321 = vmul.f32 %v1311, %v1319
      %v1322 = vpack.c.bf16 %v1321, %v1320
      %1323 = vrot.lane.b32.xlu0 %v381, 72
      %v1324 = vpop.permute.xlu0 %1323
      %v1326 = vsel %vm433, %v1322, 0
      %v1329 = vand.u32 %v1324, %v464
      %1331 = vmatprep.subr.bf16.mxu0 0
      %1332 = vmatpush1.bf16.msra.mxu0 0
      %1333 = vmatprep.subr.bf16.mxu0 0
      %1334 = vmatpush1.bf16.msra.mxu0 0
      %1335 = vmatprep.subr.bf16.mxu0 0
      %1336 = vmatpush1.bf16.msra.mxu0 0
      %1337 = vmatprep.subr.bf16.mxu0 0
      %1338 = vmatpush1.bf16.msra.mxu0 0
      %1339 = vmatprep.subr.bf16.mxu0 0
      %1340 = vmatpush1.bf16.msra.mxu0 0
      %1341 = vmatprep.subr.bf16.mxu0 0
      %1342 = vmatpush1.bf16.msra.mxu0 0
      %1343 = vmatprep.subr.bf16.mxu0 0
      %1344 = vmatpush1.bf16.msra.mxu0 0
      %1345 = vmatprep.subr.bf16.mxu0 0
      %1346 = vmatpush1.bf16.msra.mxu0 %v1329
      %1347 = vmatprep.subr.bf16.mxu0 0
      %1348 = vmatpush2.bf16.msra.mxu0 0
      %1349 = vmatprep.subr.bf16.mxu0 0
      %1350 = vmatpush2.bf16.msra.mxu0 0
      %1351 = vmatprep.subr.bf16.mxu0 0
      %1352 = vmatpush2.bf16.msra.mxu0 0
      %1353 = vmatprep.subr.bf16.mxu0 0
      %1354 = vmatpush2.bf16.msra.mxu0 0
      %1355 = vmatprep.subr.bf16.mxu0 0
      %1356 = vmatpush2.bf16.msra.mxu0 0
      %1357 = vmatprep.subr.bf16.mxu0 0
      %1358 = vmatpush2.bf16.msra.mxu0 0
      %1359 = vmatprep.subr.bf16.mxu0 0
      %1360 = vmatpush2.bf16.msra.mxu0 0
      %1361 = vmatprep.subr.bf16.mxu0 0
      %1362 = vmatpush2.bf16.msra.mxu0 0
      %1363 = vmatprep.mubr.bf16.mxu0 0
      %1364 = vmatmul.mubr.bf16.gmra.mxu0 %v1326
      %v1365 = vpop.f32.mrf.mxu0
      %v1366 = vadd.f32 0.0, %v1365
      %v1367 = vpop.f32.mrf.mxu0
      %v1368 = vpop.f32.mrf.mxu0
      %v1369 = vadd.f32 0.0, %v1368
      %v1370 = vpop.f32.mrf.mxu0
      %1371 = vdwg.mxu0
      %1374 = vrot.lane.b32.xlu0 %v628, 8
      %v1375 = vpop.permute.xlu0 %1374
      %1376 = vrot.lane.b32.xlu0 %v631, 8
      %v1377 = vpop.permute.xlu0 %1376
      %1382 = vrot.lane.b32.xlu0 %v751, 16
      %v1383 = vpop.permute.xlu0 %1382
      %1384 = vrot.lane.b32.xlu0 %v754, 16
      %v1385 = vpop.permute.xlu0 %1384
      %1390 = vrot.lane.b32.xlu0 %v874, 24
      %v1391 = vpop.permute.xlu0 %1390
      %1392 = vrot.lane.b32.xlu0 %v877, 24
      %v1393 = vpop.permute.xlu0 %1392
      %1398 = vrot.lane.b32.xlu0 %v997, 32
      %v1399 = vpop.permute.xlu0 %1398
      %1400 = vrot.lane.b32.xlu0 %v1000, 32
      %v1401 = vpop.permute.xlu0 %1400
      %1406 = vrot.lane.b32.xlu0 %v1120, 40
      %v1407 = vpop.permute.xlu0 %1406
      %1408 = vrot.lane.b32.xlu0 %v1123, 40
      %v1409 = vpop.permute.xlu0 %1408
      %1414 = vrot.lane.b32.xlu0 %v1243, 48
      %v1415 = vpop.permute.xlu0 %1414
      %1416 = vrot.lane.b32.xlu0 %v1246, 48
      %v1417 = vpop.permute.xlu0 %1416
      %1422 = vrot.lane.b32.xlu0 %v1366, 56
      %v1423 = vpop.permute.xlu0 %1422
      %1424 = vrot.lane.b32.xlu0 %v1369, 56
      %v1425 = vpop.permute.xlu0 %1424
      %v1428 = vsel %vm385, %v503, %v1375
      %v1429 = vsel %vm385, %v506, %v1377
      %vm1430 = vcmask 130048
      %v1431 = vsel %vm1430, %v1428, %v1383
      %v1432 = vsel %vm1430, %v1429, %v1385
      %vm1433 = vcmask 195584
      %v1434 = vsel %vm1433, %v1431, %v1391
      %v1435 = vsel %vm1433, %v1432, %v1393
      %vm1436 = vcmask 261120
      %v1437 = vsel %vm1436, %v1434, %v1399
      %v1438 = vsel %vm1436, %v1435, %v1401
      %vm1439 = vcmask 326656
      %v1440 = vsel %vm1439, %v1437, %v1407
      %v1441 = vsel %vm1439, %v1438, %v1409
      %vm1442 = vcmask 392192
      %v1443 = vsel %vm1442, %v1440, %v1415
      %v1444 = vsel %vm1442, %v1441, %v1417
      %vm1445 = vcmask 457728
      %v1446 = vsel %vm1445, %v1443, %v1423
      %v1447 = vsel %vm1445, %v1444, %v1425
      %v1448 = vpack.c.bf16 %v1447, %v1446
      %v1449 = vpack.c.bf16 %v300, %v299
      %v1450 = vpack.c.bf16 %v302, %v301
      %v1451 = vpack.c.bf16 %v304, %v303
      %v1452 = vpack.c.bf16 %v306, %v305
      %v1454 = vlaneseq
      %v1455 = vshrl.u32 %v1454, 7
      %v1456 = vsub.s32 0, %v1455
      %v1457 = vrot.slane %v307, %v1456
      %v1460 = vsel %vm330, %v1448, 0
      %1462 = vmatprep.subr.bf16.mxu0 0
      %1463 = vmatpush1.bf16.msra.mxu0 0
      %1464 = vmatprep.subr.bf16.mxu0 0
      %1465 = vmatpush1.bf16.msra.mxu0 0
      %1466 = vmatprep.subr.bf16.mxu0 0
      %1467 = vmatpush1.bf16.msra.mxu0 0
      %1468 = vmatprep.subr.bf16.mxu0 0
      %1469 = vmatpush1.bf16.msra.mxu0 0
      %1470 = vmatprep.subr.bf16.mxu0 0
      %1471 = vmatpush1.bf16.msra.mxu0 %v1452
      %1472 = vmatprep.subr.bf16.mxu0 0
      %1473 = vmatpush1.bf16.msra.mxu0 %v1451
      %1474 = vmatprep.subr.bf16.mxu0 0
      %1475 = vmatpush1.bf16.msra.mxu0 %v1450
      %1476 = vmatprep.subr.bf16.mxu0 0
      %1477 = vmatpush1.bf16.msra.mxu0 %v1449
      %1478 = vmatprep.subr.bf16.mxu0 0
      %1479 = vmatpush2.bf16.msra.mxu0 0
      %1480 = vmatprep.subr.bf16.mxu0 0
      %1481 = vmatpush2.bf16.msra.mxu0 0
      %1482 = vmatprep.subr.bf16.mxu0 0
      %1483 = vmatpush2.bf16.msra.mxu0 0
      %1484 = vmatprep.subr.bf16.mxu0 0
      %1485 = vmatpush2.bf16.msra.mxu0 0
      %1486 = vmatprep.subr.bf16.mxu0 0
      %1487 = vmatpush2.bf16.msra.mxu0 0
      %1488 = vmatprep.subr.bf16.mxu0 0
      %1489 = vmatpush2.bf16.msra.mxu0 0
      %1490 = vmatprep.subr.bf16.mxu0 0
      %1491 = vmatpush2.bf16.msra.mxu0 0
      %1492 = vmatprep.subr.bf16.mxu0 0
      %1493 = vmatpush2.bf16.msra.mxu0 0
      %1494 = vmatprep.mubr.bf16.mxu0 0
      %1495 = vmatmul.mubr.bf16.gmra.mxu0 %v1460
      %v1496 = vpop.f32.mrf.mxu0
      %v1497 = vadd.f32 %v1457, %v1496
      %v1498 = vpop.f32.mrf.mxu0
      %v1499 = vpop.f32.mrf.mxu0
      %v1500 = vadd.f32 %v1457, %v1499
      %v1501 = vpop.f32.mrf.mxu0
      %1502 = vdwg.mxu0
      %v1503 = vadd.f32 %v1497, %v280
      %v1504 = vadd.f32 %v1500, %v281
      %v1505 = vsel %vm330, %v1503, 0.0
      %1506 = vadd.xlane.f32.xlu0 %v1505
      %v1507 = vpop.xlane.xlu0 %1506
      %vm1508 = vcmask 516096
      %v1509 = vsel %vm1508, %v1504, 0.0
      %1510 = vadd.xlane.f32.xlu0 %v1509
      %v1511 = vpop.xlane.xlu0 %1510
      %v1512 = vrcp.pop 64.0
      %v1513 = vmul.f32 %v1507, %v1512
      %v1514 = vmul.f32 %v1511, %v1512
      %v1515 = vsub.f32 %v1503, %v1513
      %v1516 = vsub.f32 %v1504, %v1514
      %v1517 = vmul.f32 %v1515, %v1515
      %v1518 = vmul.f32 %v1516, %v1516
      %v1519 = vsel %vm330, %v1517, 0.0
      %1520 = vadd.xlane.f32.xlu0 %v1519
      %v1521 = vpop.xlane.xlu0 %1520
      %v1522 = vsel %vm1508, %v1518, 0.0
      %1523 = vadd.xlane.f32.xlu0 %v1522
      %v1524 = vpop.xlane.xlu0 %1523
      %v1525 = vmul.f32 %v1521, %v1512
      %v1526 = vmul.f32 %v1524, %v1512
      %v1527 = vadd.f32 %v1525, 1e-05
      %v1528 = vadd.f32 %v1526, 1e-05
      %v1529 = vrsqrt.pop %v1527
      %v1530 = vrsqrt.pop %v1528
      %v1531 = vmul.f32 %v1515, %v1529
      %v1532 = vmul.f32 %v1516, %v1530
      %v1534 = vlaneseq
      %v1535 = vshrl.u32 %v1534, 7
      %v1536 = vsub.s32 0, %v1535
      %v1537 = vrot.slane %v308, %v1536
      %v1539 = vmul.f32 %v1531, %v1537
      %v1540 = vmul.f32 %v1532, %v1537
      %v1542 = vlaneseq
      %v1543 = vshrl.u32 %v1542, 7
      %v1544 = vsub.s32 0, %v1543
      %v1545 = vrot.slane %v309, %v1544
      %v1547 = vadd.f32 %v1539, %v1545
      %v1548 = vadd.f32 %v1540, %v1545
      %1549 = vst.msk [vmem:[%s278] sm:$0xff] %vm330, %v1547
      %1550 = vst.msk [vmem:[%s278 + $0x8] sm:$0x1] %vm1508, %v1548
      %p1551 = scmp.lt.s32.totalorder %s18, 1
      %s1552 = scalar_select %p1551, %s18, 1
      %s1553 = smul.addr %s1552, 2
      %s1554 = smul.addr %s1553, 8
      %s1555 = scalar_lea.vmem %s7, %s1554
      // Predicated region
      $region49: #{mmformer_pallas.3} parent=47 // pred_check
        %p1556 = pneg %p188
      $region50: #{mmformer_pallas.3} parent=47 // pred_check_branch
        %1558 = sbr.rel (%p1556) target = $region52
      $region51: #{mmformer_pallas.3} parent=47 // pred_region
        _
      $region52: #{mmformer_pallas.3} parent=47 // pred_fallthru
        _
    $region48: #{mmformer_pallas.3} parent=5 // pred_fallthru
      _
    %p1559 = scmp.le.s32.totalorder 2, %s13
    // Predicated region
    $region53: #{mmformer_pallas.3} parent=5 // pred_check
      %p1560 = pneg %p1559
    $region54: #{mmformer_pallas.3} parent=5 // pred_check_branch
      %1562 = sbr.rel (%p1560) target = $region56
    $region55: #{mmformer_pallas.3} parent=5 // pred_region
      %s1563 = ssub.s32 %s13, 2
      // Predicated region
      $region57: #{mmformer_pallas.3} parent=55 // pred_check
        %p1564 = pneg %p194
      $region58: #{mmformer_pallas.3} parent=55 // pred_check_branch
        %1566 = sbr.rel (%p1564) target = $region60
      $region59: #{mmformer_pallas.3} parent=55 // pred_region
        %p1567 = scmp.lt.s32.totalorder %s19, 1
        %s1568 = scalar_select %p1567, %s19, 1
        %s1569 = smul.addr %s1568, 2
        %s1570 = smul.addr %s1569, 8
        %s1571 = scalar_lea.vmem %s7, %s1570
      $region60: #{mmformer_pallas.3} parent=55 // pred_fallthru
        _
    $region56: #{mmformer_pallas.3} parent=5 // pred_fallthru
      _
  $region6: #{mmformer_pallas.3} parent=0 // loop_footer
    %s17 = sadd.s32 1, %s13
  $region7: #{mmformer_pallas.3} parent=0 // loop_footer_branch
    %12 = sbr.rel target = $region3
  $region8: #{mmformer_pallas.3} parent=0 // loop_exit
    _

// kernel: mmformer_pallas.2
$region0: #{mmformer_pallas.2}
  #allocation0 [shape = 'u32[]', space=smem, size = 0x4, offset = 0x4, fixed_abs, tag = 'smem constant byte address 0x4 - core index']
  #allocation1 [shape = 'u32[144,128]{1,0:T(1,128)}', space=vmem, size = 0x12000, scoped, tag = 'internal scratch']
  %s0 = inlined_call_operand.vmem [shape: f32[2,9,64], index: 0, kind: input, shape index: {}]
  %s1 = inlined_call_operand.hbm [shape: f32[64,192], index: 1, kind: input, shape index: {}]
  %s2 = inlined_call_operand.vmem [shape: f32[1,192], index: 2, kind: input, shape index: {}]
  %s3 = inlined_call_operand.vmem [shape: f32[64,64], index: 3, kind: input, shape index: {}]
  %s4 = inlined_call_operand.hbm [shape: f32[1,64], index: 4, kind: input, shape index: {}]
  %s5 = inlined_call_operand.hbm [shape: f32[1,64], index: 5, kind: input, shape index: {}]
  %s6 = inlined_call_operand.hbm [shape: f32[1,64], index: 6, kind: input, shape index: {}]
  %s7 = inlined_call_operand.vmem [shape: f32[2,9,64], index: 7, kind: output, shape index: {}]
  %s8 = sld [smem:[#allocation0]]
  $region77: #{mmformer_pallas.2} parent=0
    _
  %s10 = ssub.s32 1, %s8
  %s11 = scalar_select 0, %s10, %s8
  $region1: #{mmformer_pallas.2} parent=0
    #allocation2 [shape = 'u8[65536]{0}', space=vmem, size = 0x10000, scoped, tag = 'input window, operand 1, single buffered']
    #allocation3 [shape = 's32[2]{0}', space=sflag, size = 0x8, scoped, tag = 'scoped memory for mmformer_pallas.2']
    #allocation4 [shape = 'u8[512]{0}', space=vmem, size = 0x400, scoped, tag = 'input window, operand 4, single buffered']
    #allocation5 [shape = 's32[1]{0}', space=sflag, size = 0x4, scoped, tag = 'scoped memory for mmformer_pallas.2']
    #allocation6 [shape = 'u8[512]{0}', space=vmem, size = 0x400, scoped, tag = 'input window, operand 5, single buffered']
    #allocation7 [shape = 'u8[512]{0}', space=vmem, size = 0x400, scoped, tag = 'input window, operand 6, single buffered']
    #allocation8 [shape = 's32[1]{0}', space=sflag, size = 0x4, scoped, tag = 'scoped memory for mmformer_pallas.2']
    %12 = vsyncpa [#allocation3], 0
    %13 = vsyncpa [#allocation5], 0
    %14 = vsyncpa [#allocation8], 0
    loop: start=0, step=1, limit=4
    $region2: #{mmformer_pallas.2} parent=1 // loop_pre_header
      _
    $region3: #{mmformer_pallas.2} parent=1 // loop_header
      %s16 = sphi 0, %s20
      %p17 = scmp.ge.s32.totalorder %s16, 4
      %s26 = sphi 0, %s28
      %s29 = sphi 0, %s26
      %s30 = sphi 0, %s29
      %s46 = sphi 0, %s30
      %s50 = sphi 0, %s50
      %s52 = sphi 0, %s50
      %s53 = sphi 0, %s52
      %s67 = sphi 0, %s53
      %s71 = sphi 0, %s71
      %s73 = sphi 0, %s71
      %s74 = sphi 0, %s73
      %s88 = sphi 0, %s74
      %s92 = sphi 0, %s92
      %s94 = sphi 0, %s92
      %s95 = sphi 0, %s94
      %s109 = sphi 0, %s95
      %s113 = sphi 0, %s113
      %s115 = sphi 0, %s113
      %s116 = sphi 0, %s115
      %s130 = sphi 0, %s116
      %s134 = sphi 0, %s134
      %s136 = sphi 0, %s134
      %s137 = sphi 0, %s136
      %s151 = sphi 0, %s137
      %s155 = sphi 0, %s155
      %s157 = sphi 0, %s155
      %s158 = sphi 0, %s157
      %s172 = sphi 0, %s158
      %s178 = sphi 0, %s180
      %s181 = sphi 0, %s178
      %s182 = sphi 0, %s181
      %s198 = sphi 0, %s182
    $region4: #{mmformer_pallas.2} parent=1 // loop_header_branch
      %19 = sbr.rel (%p17) target = $region8
    $region5: #{mmformer_pallas.2} parent=1 // loop_body
      %s21 = ssub.s32 %s16, 1
      %s22 = ssub.s32 %s16, 2
      %s23 = sadd.s32 %s16, 1
      %s24 = ssub.s32 %s16, %s23
      %p25 = scmp.eq.s32.totalorder %s24, 0
      %s27 = sadd.s32 %s26, 1
      %s28 = scalar_select %p25, %s26, %s27
      %p31 = pneg %p25
      %p32 = scmp.eq.s32.totalorder %s16, 1
      %p33 = por %p31, %p32
      %p34 = scmp.ne.s32.totalorder %s26, %s29
      %p35 = scmp.eq.s32.totalorder %s16, 0
      %p36 = por %p34, %p35
      %p37 = scmp.ne.s32.totalorder %s26, %s29
      %p38 = scmp.eq.s32.totalorder %s21, 1
      %p39 = por %p37, %p38
      %p40 = scmp.ne.s32.totalorder %s29, %s30
      %p41 = scmp.eq.s32.totalorder %s21, 0
      %p42 = por %p40, %p41
      %p43 = scmp.ne.s32.totalorder %s29, %s30
      %p44 = scmp.eq.s32.totalorder %s22, 1
      %p45 = por %p43, %p44
      %p47 = scmp.ne.s32.totalorder %s30, %s46
      %p48 = scmp.eq.s32.totalorder %s22, 0
      %p49 = por %p47, %p48
      %s51 = sadd.s32 %s50, 1
      %p54 = scmp.eq.s32.totalorder %s16, 1
      %p55 = scmp.ne.s32.totalorder %s50, %s52
      %p56 = scmp.eq.s32.totalorder %s16, 0
      %p57 = por %p55, %p56
      %p58 = scmp.ne.s32.totalorder %s50, %s52
      %p59 = scmp.eq.s32.totalorder %s21, 1
      %p60 = por %p58, %p59
      %p61 = scmp.ne.s32.totalorder %s52, %s53
      %p62 = scmp.eq.s32.totalorder %s21, 0
      %p63 = por %p61, %p62
      %p64 = scmp.ne.s32.totalorder %s52, %s53
      %p65 = scmp.eq.s32.totalorder %s22, 1
      %p66 = por %p64, %p65
      %p68 = scmp.ne.s32.totalorder %s53, %s67
      %p69 = scmp.eq.s32.totalorder %s22, 0
      %p70 = por %p68, %p69
      %s72 = sadd.s32 %s71, 1
      %p75 = scmp.eq.s32.totalorder %s16, 1
      %p76 = scmp.ne.s32.totalorder %s71, %s73
      %p77 = scmp.eq.s32.totalorder %s16, 0
      %p78 = por %p76, %p77
      %p79 = scmp.ne.s32.totalorder %s71, %s73
      %p80 = scmp.eq.s32.totalorder %s21, 1
      %p81 = por %p79, %p80
      %p82 = scmp.ne.s32.totalorder %s73, %s74
      %p83 = scmp.eq.s32.totalorder %s21, 0
      %p84 = por %p82, %p83
      %p85 = scmp.ne.s32.totalorder %s73, %s74
      %p86 = scmp.eq.s32.totalorder %s22, 1
      %p87 = por %p85, %p86
      %p89 = scmp.ne.s32.totalorder %s74, %s88
      %p90 = scmp.eq.s32.totalorder %s22, 0
      %p91 = por %p89, %p90
      %s93 = sadd.s32 %s92, 1
      %p96 = scmp.eq.s32.totalorder %s16, 1
      %p97 = scmp.ne.s32.totalorder %s92, %s94
      %p98 = scmp.eq.s32.totalorder %s16, 0
      %p99 = por %p97, %p98
      %p100 = scmp.ne.s32.totalorder %s92, %s94
      %p101 = scmp.eq.s32.totalorder %s21, 1
      %p102 = por %p100, %p101
      %p103 = scmp.ne.s32.totalorder %s94, %s95
      %p104 = scmp.eq.s32.totalorder %s21, 0
      %p105 = por %p103, %p104
      %p106 = scmp.ne.s32.totalorder %s94, %s95
      %p107 = scmp.eq.s32.totalorder %s22, 1
      %p108 = por %p106, %p107
      %p110 = scmp.ne.s32.totalorder %s95, %s109
      %p111 = scmp.eq.s32.totalorder %s22, 0
      %p112 = por %p110, %p111
      %s114 = sadd.s32 %s113, 1
      %p117 = scmp.eq.s32.totalorder %s16, 1
      %p118 = scmp.ne.s32.totalorder %s113, %s115
      %p119 = scmp.eq.s32.totalorder %s16, 0
      %p120 = por %p118, %p119
      %p121 = scmp.ne.s32.totalorder %s113, %s115
      %p122 = scmp.eq.s32.totalorder %s21, 1
      %p123 = por %p121, %p122
      %p124 = scmp.ne.s32.totalorder %s115, %s116
      %p125 = scmp.eq.s32.totalorder %s21, 0
      %p126 = por %p124, %p125
      %p127 = scmp.ne.s32.totalorder %s115, %s116
      %p128 = scmp.eq.s32.totalorder %s22, 1
      %p129 = por %p127, %p128
      %p131 = scmp.ne.s32.totalorder %s116, %s130
      %p132 = scmp.eq.s32.totalorder %s22, 0
      %p133 = por %p131, %p132
      %s135 = sadd.s32 %s134, 1
      %p138 = scmp.eq.s32.totalorder %s16, 1
      %p139 = scmp.ne.s32.totalorder %s134, %s136
      %p140 = scmp.eq.s32.totalorder %s16, 0
      %p141 = por %p139, %p140
      %p142 = scmp.ne.s32.totalorder %s134, %s136
      %p143 = scmp.eq.s32.totalorder %s21, 1
      %p144 = por %p142, %p143
      %p145 = scmp.ne.s32.totalorder %s136, %s137
      %p146 = scmp.eq.s32.totalorder %s21, 0
      %p147 = por %p145, %p146
      %p148 = scmp.ne.s32.totalorder %s136, %s137
      %p149 = scmp.eq.s32.totalorder %s22, 1
      %p150 = por %p148, %p149
      %p152 = scmp.ne.s32.totalorder %s137, %s151
      %p153 = scmp.eq.s32.totalorder %s22, 0
      %p154 = por %p152, %p153
      %s156 = sadd.s32 %s155, 1
      %p159 = scmp.eq.s32.totalorder %s16, 1
      %p160 = scmp.ne.s32.totalorder %s155, %s157
      %p161 = scmp.eq.s32.totalorder %s16, 0
      %p162 = por %p160, %p161
      %p163 = scmp.ne.s32.totalorder %s155, %s157
      %p164 = scmp.eq.s32.totalorder %s21, 1
      %p165 = por %p163, %p164
      %p166 = scmp.ne.s32.totalorder %s157, %s158
      %p167 = scmp.eq.s32.totalorder %s21, 0
      %p168 = por %p166, %p167
      %p169 = scmp.ne.s32.totalorder %s157, %s158
      %p170 = scmp.eq.s32.totalorder %s22, 1
      %p171 = por %p169, %p170
      %p173 = scmp.ne.s32.totalorder %s158, %s172
      %p174 = scmp.eq.s32.totalorder %s22, 0
      %p175 = por %p173, %p174
      %s176 = ssub.s32 %s16, %s23
      %p177 = scmp.eq.s32.totalorder %s176, 0
      %s179 = sadd.s32 %s178, 1
      %s180 = scalar_select %p177, %s178, %s179
      %p183 = pneg %p177
      %p184 = scmp.eq.s32.totalorder %s16, 1
      %p185 = por %p183, %p184
      %p186 = scmp.ne.s32.totalorder %s178, %s181
      %p187 = scmp.eq.s32.totalorder %s16, 0
      %p188 = por %p186, %p187
      %p189 = scmp.ne.s32.totalorder %s178, %s181
      %p190 = scmp.eq.s32.totalorder %s21, 1
      %p191 = por %p189, %p190
      %p192 = scmp.ne.s32.totalorder %s181, %s182
      %p193 = scmp.eq.s32.totalorder %s21, 0
      %p194 = por %p192, %p193
      %p195 = scmp.ne.s32.totalorder %s181, %s182
      %p196 = scmp.eq.s32.totalorder %s22, 1
      %p197 = por %p195, %p196
      %p199 = scmp.ne.s32.totalorder %s182, %s198
      %p200 = scmp.eq.s32.totalorder %s22, 0
      %p201 = por %p199, %p200
      %p202 = scmp.le.s32.totalorder 1, %s16
      %p203 = scmp.lt.s32.totalorder %s16, 3
      %p204 = pnand %p202, %p203
      %p205 = pneg %p204
      // Predicated region
      $region9: #{mmformer_pallas.2} parent=5 // pred_check
        _
      $region10: #{mmformer_pallas.2} parent=5 // pred_check_branch
        %207 = sbr.rel (%p204) target = $region12
      $region11: #{mmformer_pallas.2} parent=5 // pred_region
        %s208 = ssub.s32 %s16, 1
        // Predicated region
        $region13: #{mmformer_pallas.2} parent=11 // pred_check
          %p209 = pneg %p63
        $region14: #{mmformer_pallas.2} parent=11 // pred_check_branch
          %211 = sbr.rel (%p209) target = $region16
        $region15: #{mmformer_pallas.2} parent=11 // pred_region
          %s213 = ssub.s32 2048, 2048
          %214 = vsyncadd [#allocation3], %s213
          %s215 = sshll.u32 [#allocation2], 4
          %s216 = int_to_ptr.vmem [resolvable:$true] %s215
          %221 = dma.hbm_to_vmem [thread:$0]  %s1, 2048, %s216, [#allocation3], 256, 256, 16
        $region16: #{mmformer_pallas.2} parent=11 // pred_fallthru
          _
        // Predicated region
        $region17: #{mmformer_pallas.2} parent=11 // pred_check
          %p222 = pneg %p84
        $region18: #{mmformer_pallas.2} parent=11 // pred_check_branch
          %224 = sbr.rel (%p222) target = $region20
        $region19: #{mmformer_pallas.2} parent=11 // pred_region
          _
        $region20: #{mmformer_pallas.2} parent=11 // pred_fallthru
          _
        // Predicated region
        $region21: #{mmformer_pallas.2} parent=11 // pred_check
          %p225 = pneg %p105
        $region22: #{mmformer_pallas.2} parent=11 // pred_check_branch
          %227 = sbr.rel (%p225) target = $region24
        $region23: #{mmformer_pallas.2} parent=11 // pred_region
          _
        $region24: #{mmformer_pallas.2} parent=11 // pred_fallthru
          _
        // Predicated region
        $region25: #{mmformer_pallas.2} parent=11 // pred_check
          %p228 = pneg %p126
        $region26: #{mmformer_pallas.2} parent=11 // pred_check_branch
          %230 = sbr.rel (%p228) target = $region28
        $region27: #{mmformer_pallas.2} parent=11 // pred_region
          %s232 = ssub.s32 16, 16
          %233 = vsyncadd [#allocation5], %s232
          %s235 = sshll.u32 [#allocation4], 4
          %s236 = int_to_ptr.vmem [resolvable:$true] %s235
          %238 = dma.hbm_to_vmem [thread:$0]  %s4, 16, %s236, [#allocation5]
        $region28: #{mmformer_pallas.2} parent=11 // pred_fallthru
          _
        // Predicated region
        $region29: #{mmformer_pallas.2} parent=11 // pred_check
          %p239 = pneg %p147
        $region30: #{mmformer_pallas.2} parent=11 // pred_check_branch
          %241 = sbr.rel (%p239) target = $region32
        $region31: #{mmformer_pallas.2} parent=11 // pred_region
          %s243 = ssub.s32 16, 16
          %244 = vsyncadd [#allocation5], %s243
          %s246 = sshll.u32 [#allocation6], 4
          %s247 = int_to_ptr.vmem [resolvable:$true] %s246
          %249 = dma.hbm_to_vmem [thread:$0]  %s5, 16, %s247, [#allocation5]
        $region32: #{mmformer_pallas.2} parent=11 // pred_fallthru
          _
        // Predicated region
        $region33: #{mmformer_pallas.2} parent=11 // pred_check
          %p250 = pneg %p168
        $region34: #{mmformer_pallas.2} parent=11 // pred_check_branch
          %252 = sbr.rel (%p250) target = $region36
        $region35: #{mmformer_pallas.2} parent=11 // pred_region
          %s254 = ssub.s32 16, 16
          %255 = vsyncadd [#allocation8], %s254
          %s257 = sshll.u32 [#allocation7], 4
          %s258 = int_to_ptr.vmem [resolvable:$true] %s257
          %260 = dma.hbm_to_vmem [thread:$0]  %s6, 16, %s258, [#allocation8]
        $region36: #{mmformer_pallas.2} parent=11 // pred_fallthru
          _
      $region12: #{mmformer_pallas.2} parent=5 // pred_fallthru
        _
      %p261 = scmp.lt.s32.totalorder %s16, 2
      // Predicated region
      $region37: #{mmformer_pallas.2} parent=5 // pred_check
        %p262 = pneg %p261
      $region38: #{mmformer_pallas.2} parent=5 // pred_check_branch
        %264 = sbr.rel (%p262) target = $region40
      $region39: #{mmformer_pallas.2} parent=5 // pred_region
        // Predicated region
        $region41: #{mmformer_pallas.2} parent=39 // pred_check
          %p265 = pneg %p36
        $region42: #{mmformer_pallas.2} parent=39 // pred_check_branch
          %267 = sbr.rel (%p265) target = $region44
        $region43: #{mmformer_pallas.2} parent=39 // pred_region
          %p268 = scmp.lt.s32.totalorder %s16, 1
          %s269 = scalar_select %p268, %s16, 1
          %s270 = smul.addr %s269, 2
          %s271 = smul.addr %s270, 8
          %s272 = scalar_lea.vmem %s0, %s271
        $region44: #{mmformer_pallas.2} parent=39 // pred_fallthru
          _
      $region40: #{mmformer_pallas.2} parent=5 // pred_fallthru
        _
      %p273 = scmp.le.s32.totalorder 1, %s16
      %p274 = scmp.lt.s32.totalorder %s16, 3
      %p275 = pnand %p273, %p274
      %p276 = pneg %p275
      // Predicated region
      $region45: #{mmformer_pallas.2} parent=5 // pred_check
        _
      $region46: #{mmformer_pallas.2} parent=5 // pred_check_branch
        %278 = sbr.rel (%p275) target = $region48
      $region47: #{mmformer_pallas.2} parent=5 // pred_region
        %s279 = ssub.s32 %s16, 1
        // Predicated region
        $region49: #{mmformer_pallas.2} parent=47 // pred_check
          %p280 = pneg %p63
        $region50: #{mmformer_pallas.2} parent=47 // pred_check_branch
          %282 = sbr.rel (%p280) target = $region52
        $region51: #{mmformer_pallas.2} parent=47 // pred_region
          %283 = dma.done [#allocation3], 2048
        $region52: #{mmformer_pallas.2} parent=47 // pred_fallthru
          _
        // Predicated region
        $region53: #{mmformer_pallas.2} parent=47 // pred_check
          %p284 = pneg %p126
        $region54: #{mmformer_pallas.2} parent=47 // pred_check_branch
          %286 = sbr.rel (%p284) target = $region56
        $region55: #{mmformer_pallas.2} parent=47 // pred_region
          %287 = dma.done [#allocation5], 16
        $region56: #{mmformer_pallas.2} parent=47 // pred_fallthru
          _
        // Predicated region
        $region57: #{mmformer_pallas.2} parent=47 // pred_check
          %p288 = pneg %p147
        $region58: #{mmformer_pallas.2} parent=47 // pred_check_branch
          %290 = sbr.rel (%p288) target = $region60
        $region59: #{mmformer_pallas.2} parent=47 // pred_region
          %291 = dma.done [#allocation5], 16
        $region60: #{mmformer_pallas.2} parent=47 // pred_fallthru
          _
        // Predicated region
        $region61: #{mmformer_pallas.2} parent=47 // pred_check
          %p292 = pneg %p168
        $region62: #{mmformer_pallas.2} parent=47 // pred_check_branch
          %294 = sbr.rel (%p292) target = $region64
        $region63: #{mmformer_pallas.2} parent=47 // pred_region
          %295 = dma.done [#allocation8], 16
        $region64: #{mmformer_pallas.2} parent=47 // pred_fallthru
          _
        %p296 = scmp.lt.s32.totalorder %s21, 1
        %s297 = scalar_select %p296, %s21, 1
        %s298 = smul.addr %s297, 2
        %s299 = smul.addr %s298, 8
        %s300 = scalar_lea.vmem %s0, %s299
        %p301 = pneg %p42
        %p302 = pneg %p39
        %p303 = pneg %p63
        %p304 = pneg %p60
        %p305 = pneg %p84
        %p306 = pneg %p81
        %p307 = pneg %p105
        %p308 = pneg %p102
        %p309 = pneg %p126
        %p310 = pneg %p123
        %p311 = pneg %p147
        %p312 = pneg %p144
        %p313 = pneg %p168
        %p314 = pneg %p165
        %p315 = pneg %p194
        %p316 = pneg %p191
        %p317 = scmp.lt.s32.totalorder %s21, 1
        %s318 = scalar_select %p317, %s21, 1
        %s319 = smul.addr %s318, 2
        %s320 = smul.addr %s319, 8
        %s321 = scalar_lea.vmem %s7, %s320
        %p322 = scmp.lt.s32.totalorder %s21, 1
        %s323 = scalar_select %p322, %s21, 1
        %s324 = smul.addr %s323, 2
        %s325 = smul.addr %s324, 8
        %s326 = scalar_lea.vmem %s0, %s325
        %p327 = scmp.lt.s32.totalorder %s21, 1
        %s328 = scalar_select %p327, %s21, 1
        %s329 = smul.addr %s328, 2
        %s330 = smul.addr %s329, 8
        %s331 = scalar_lea.vmem %s7, %s330
        %v333 = vld [vmem:[%s326] sm:$0xff]
        %v334 = vld [vmem:[%s326 + $0x8] sm:$0x1]
        %v335 = vld [vmem:[#allocation2] sm:$0xff]
        %v336 = vld [vmem:[#allocation2 + $0x8] sm:$0xff]
        %v337 = vld [vmem:[#allocation2 + $0x10] sm:$0xff]
        %v338 = vld [vmem:[#allocation2 + $0x18] sm:$0xff]
        %v339 = vld [vmem:[#allocation2 + $0x20] sm:$0xff]
        %v340 = vld [vmem:[#allocation2 + $0x28] sm:$0xff]
        %v341 = vld [vmem:[#allocation2 + $0x30] sm:$0xff]
        %v342 = vld [vmem:[#allocation2 + $0x38] sm:$0xff]
        %v343 = vld [vmem:[#allocation2 + $0x40] sm:$0xff]
        %v344 = vld [vmem:[#allocation2 + $0x48] sm:$0xff]
        %v345 = vld [vmem:[#allocation2 + $0x50] sm:$0xff]
        %v346 = vld [vmem:[#allocation2 + $0x58] sm:$0xff]
        %v347 = vld [vmem:[#allocation2 + $0x60] sm:$0xff]
        %v348 = vld [vmem:[#allocation2 + $0x68] sm:$0xff]
        %v349 = vld [vmem:[#allocation2 + $0x70] sm:$0xff]
        %v350 = vld [vmem:[#allocation2 + $0x78] sm:$0xff]
        %v351 = vld [vmem:[%s2] sm:$0x3]
        %v352 = vld [vmem:[%s3] sm:$0xff]
        %v353 = vld [vmem:[%s3 + $0x8] sm:$0xff]
        %v354 = vld [vmem:[%s3 + $0x10] sm:$0xff]
        %v355 = vld [vmem:[%s3 + $0x18] sm:$0xff]
        %v356 = vld [vmem:[%s3 + $0x20] sm:$0xff]
        %v357 = vld [vmem:[%s3 + $0x28] sm:$0xff]
        %v358 = vld [vmem:[%s3 + $0x30] sm:$0xff]
        %v359 = vld [vmem:[%s3 + $0x38] sm:$0xff]
        %v360 = vld [vmem:[#allocation4] sm:$0x1]
        %v361 = vld [vmem:[#allocation6] sm:$0x1]
        %v362 = vld [vmem:[#allocation7] sm:$0x1]
        %v363 = vpack.c.bf16 %v334, %v333
        %v364 = vpack.c.bf16 %v337, %v335
        %v365 = vpack.c.bf16 %v338, %v336
        %v366 = vpack.c.bf16 %v341, %v339
        %v367 = vpack.c.bf16 %v342, %v340
        %v368 = vpack.c.bf16 %v345, %v343
        %v369 = vpack.c.bf16 %v346, %v344
        %v370 = vpack.c.bf16 %v349, %v347
        %v371 = vpack.c.bf16 %v350, %v348
        %v373 = vlaneseq
        %v374 = vshrl.u32 %v373, 7
        %v375 = vsub.s32 0, %v374
        %v376 = vrot.slane %v351, %v375
        %v377 = vlaneseq
        %v378 = vshrl.u32 %v377, 7
        %v379 = vsub.s32 1, %v378
        %v380 = vrot.slane %v351, %v379
        %vm383 = vcmask 523264
        %v385 = vsel %vm383, %v363, 0
        %387 = vmatprep.subr.bf16.mxu0 0
        %388 = vmatpush1.bf16.msra.mxu0 0
        %389 = vmatprep.subr.bf16.mxu0 0
        %390 = vmatpush1.bf16.msra.mxu0 0
        %391 = vmatprep.subr.bf16.mxu0 0
        %392 = vmatpush1.bf16.msra.mxu0 0
        %393 = vmatprep.subr.bf16.mxu0 0
        %394 = vmatpush1.bf16.msra.mxu0 0
        %395 = vmatprep.subr.bf16.mxu0 %v371
        %396 = vmatpush1.bf16.msra.mxu0 %v370
        %397 = vmatprep.subr.bf16.mxu0 %v369
        %398 = vmatpush1.bf16.msra.mxu0 %v368
        %399 = vmatprep.subr.bf16.mxu0 %v367
        %400 = vmatpush1.bf16.msra.mxu0 %v366
        %401 = vmatprep.subr.bf16.mxu0 %v365
        %402 = vmatpush1.bf16.msra.mxu0 %v364
        %403 = vmatprep.subr.bf16.mxu0 0
        %404 = vmatpush2.bf16.msra.mxu0 0
        %405 = vmatprep.subr.bf16.mxu0 0
        %406 = vmatpush2.bf16.msra.mxu0 0
        %407 = vmatprep.subr.bf16.mxu0 0
        %408 = vmatpush2.bf16.msra.mxu0 0
        %409 = vmatprep.subr.bf16.mxu0 0
        %410 = vmatpush2.bf16.msra.mxu0 0
        %411 = vmatprep.subr.bf16.mxu0 0
        %412 = vmatpush2.bf16.msra.mxu0 0
        %413 = vmatprep.subr.bf16.mxu0 0
        %414 = vmatpush2.bf16.msra.mxu0 0
        %415 = vmatprep.subr.bf16.mxu0 0
        %416 = vmatpush2.bf16.msra.mxu0 0
        %417 = vmatprep.subr.bf16.mxu0 0
        %418 = vmatpush2.bf16.msra.mxu0 0
        %419 = vmatprep.mubr.bf16.mxu0 0
        %420 = vmatmul.mubr.bf16.gmra.mxu0 %v385
        %v421 = vpop.f32.mrf.mxu0
        %v422 = vadd.f32 %v376, %v421
        %v423 = vpop.f32.mrf.mxu0
        %v424 = vadd.f32 %v380, %v423
        %v425 = vpop.f32.mrf.mxu0
        %v426 = vadd.f32 %v376, %v425
        %v427 = vpop.f32.mrf.mxu0
        %v428 = vadd.f32 %v380, %v427
        %429 = vdwg.mxu0
        %v430 = vmul.f32 %v422, 0.35355318
        %v431 = vmul.f32 %v426, 0.35355318
        %v432 = vpack.c.bf16 %v431, %v430
        %v433 = vpack.c.bf16 %v426, %v422
        %v434 = vpack.c.bf16 %v428, %v424
        %436 = vrot.lane.b32.xlu0 %v433, 64
        %v437 = vpop.permute.xlu0 %436
        %vm438 = vcmask 64512
        %v440 = vsel %vm438, %v432, 0
        %v443 = vsel %vm438, %v437, 0
        %445 = vmatprep.subr.bf16.mxu0 0
        %446 = vmatpush1.bf16.xpose.msra.mxu0 0
        %447 = vmatprep.subr.bf16.mxu0 0
        %448 = vmatpush1.bf16.xpose.msra.mxu0 0
        %449 = vmatprep.subr.bf16.mxu0 0
        %450 = vmatpush1.bf16.xpose.msra.mxu0 0
        %451 = vmatprep.subr.bf16.mxu0 0
        %452 = vmatpush1.bf16.xpose.msra.mxu0 0
        %453 = vmatprep.subr.bf16.mxu0 0
        %454 = vmatpush1.bf16.xpose.msra.mxu0 0
        %455 = vmatprep.subr.bf16.mxu0 0
        %456 = vmatpush1.bf16.xpose.msra.mxu0 0
        %457 = vmatprep.subr.bf16.mxu0 0
        %458 = vmatpush1.bf16.xpose.msra.mxu0 0
        %459 = vmatprep.subr.bf16.mxu0 0
        %460 = vmatpush1.bf16.xpose.msra.mxu0 %v443
        %461 = vmatprep.subr.bf16.mxu0 0
        %462 = vmatpush2.bf16.xpose.msra.mxu0 0
        %463 = vmatprep.subr.bf16.mxu0 0
        %464 = vmatpush2.bf16.xpose.msra.mxu0 0
        %465 = vmatprep.subr.bf16.mxu0 0
        %466 = vmatpush2.bf16.xpose.msra.mxu0 0
        %467 = vmatprep.subr.bf16.mxu0 0
        %468 = vmatpush2.bf16.xpose.msra.mxu0 0
        %469 = vmatprep.subr.bf16.mxu0 0
        %470 = vmatpush2.bf16.xpose.msra.mxu0 0
        %471 = vmatprep.subr.bf16.mxu0 0
        %472 = vmatpush2.bf16.xpose.msra.mxu0 0
        %473 = vmatprep.subr.bf16.mxu0 0
        %474 = vmatpush2.bf16.xpose.msra.mxu0 0
        %475 = vmatprep.subr.bf16.mxu0 0
        %476 = vmatpush2.bf16.xpose.msra.mxu0 0
        %477 = vmatprep.mubr.bf16.mxu0 0
        %478 = vmatmul.mubr.bf16.gmra.mxu0 %v440
        %v479 = vpop.f32.mrf.mxu0
        %v480 = vadd.f32 0.0, %v479
        %v481 = vpop.f32.mrf.mxu0
        %v482 = vpop.f32.mrf.mxu0
        %v483 = vadd.f32 0.0, %v482
        %v484 = vpop.f32.mrf.mxu0
        %485 = vdwg.mxu0
        %vm486 = vcmask 72704
        %v487 = vsel %vm486, %v480, -inf
        %488 = vmax.xlane.f32.xlu0 %v487
        %v489 = vpop.xlane.xlu0 %488
        %vm490 = vcmask 65536
        %v491 = vsel %vm490, %v483, -inf
        %492 = vmax.xlane.f32.xlu0 %v491
        %v493 = vpop.xlane.xlu0 %492
        %v494 = vsub.f32 %v480, %v489
        %v495 = vsub.f32 %v483, %v493
        %v496 = vmul.f32 %v494, 1.442695
        %v497 = vpow.pop %v496
        %v498 = vmul.f32 %v495, 1.442695
        %v499 = vpow.pop %v498
        %v500 = vsel %vm486, %v497, 0.0
        %501 = vadd.xlane.f32.xlu0 %v500
        %v502 = vpop.xlane.xlu0 %501
        %v503 = vsel %vm490, %v499, 0.0
        %504 = vadd.xlane.f32.xlu0 %v503
        %v505 = vpop.xlane.xlu0 %504
        %v506 = vrcp.pop %v502
        %v507 = vrcp.pop %v505
        %v508 = vmul.f32 %v497, %v506
        %v509 = vmul.f32 %v499, %v507
        %v510 = vpack.c.bf16 %v509, %v508
        %v512 = vsel %vm486, %v510, 0
        %vm514 = vcmask 1043456
        %vm515 = vcmask 1044480
        %v516 = vsel %vm514, 4294967295, 65535
        %v517 = vsel %vm515, %v516, 0
        %v519 = vand.u32 %v434, %v517
        %521 = vmatprep.subr.bf16.mxu0 0
        %522 = vmatpush1.bf16.msra.mxu0 0
        %523 = vmatprep.subr.bf16.mxu0 0
        %524 = vmatpush1.bf16.msra.mxu0 0
        %525 = vmatprep.subr.bf16.mxu0 0
        %526 = vmatpush1.bf16.msra.mxu0 0
        %527 = vmatprep.subr.bf16.mxu0 0
        %528 = vmatpush1.bf16.msra.mxu0 0
        %529 = vmatprep.subr.bf16.mxu0 0
        %530 = vmatpush1.bf16.msra.mxu0 0
        %531 = vmatprep.subr.bf16.mxu0 0
        %532 = vmatpush1.bf16.msra.mxu0 0
        %533 = vmatprep.subr.bf16.mxu0 0
        %534 = vmatpush1.bf16.msra.mxu0 0
        %535 = vmatprep.subr.bf16.mxu0 0
        %536 = vmatpush1.bf16.msra.mxu0 %v519
        %537 = vmatprep.subr.bf16.mxu0 0
        %538 = vmatpush2.bf16.msra.mxu0 0
        %539 = vmatprep.subr.bf16.mxu0 0
        %540 = vmatpush2.bf16.msra.mxu0 0
        %541 = vmatprep.subr.bf16.mxu0 0
        %542 = vmatpush2.bf16.msra.mxu0 0
        %543 = vmatprep.subr.bf16.mxu0 0
        %544 = vmatpush2.bf16.msra.mxu0 0
        %545 = vmatprep.subr.bf16.mxu0 0
        %546 = vmatpush2.bf16.msra.mxu0 0
        %547 = vmatprep.subr.bf16.mxu0 0
        %548 = vmatpush2.bf16.msra.mxu0 0
        %549 = vmatprep.subr.bf16.mxu0 0
        %550 = vmatpush2.bf16.msra.mxu0 0
        %551 = vmatprep.subr.bf16.mxu0 0
        %552 = vmatpush2.bf16.msra.mxu0 0
        %553 = vmatprep.mubr.bf16.mxu0 0
        %554 = vmatmul.mubr.bf16.gmra.mxu0 %v512
        %v555 = vpop.f32.mrf.mxu0
        %v556 = vadd.f32 0.0, %v555
        %v557 = vpop.f32.mrf.mxu0
        %v558 = vpop.f32.mrf.mxu0
        %v559 = vadd.f32 0.0, %v558
        %v560 = vpop.f32.mrf.mxu0
        %561 = vdwg.mxu0
        %563 = vrot.lane.b32.xlu0 %v432, 120
        %v564 = vpop.permute.xlu0 %563
        %565 = vrot.lane.b32.xlu0 %v433, 56
        %v566 = vpop.permute.xlu0 %565
        %v568 = vsel %vm438, %v564, 0
        %v571 = vsel %vm438, %v566, 0
        %573 = vmatprep.subr.bf16.mxu0 0
        %574 = vmatpush1.bf16.xpose.msra.mxu0 0
        %575 = vmatprep.subr.bf16.mxu0 0
        %576 = vmatpush1.bf16.xpose.msra.mxu0 0
        %577 = vmatprep.subr.bf16.mxu0 0
        %578 = vmatpush1.bf16.xpose.msra.mxu0 0
        %579 = vmatprep.subr.bf16.mxu0 0
        %580 = vmatpush1.bf16.xpose.msra.mxu0 0
        %581 = vmatprep.subr.bf16.mxu0 0
        %582 = vmatpush1.bf16.xpose.msra.mxu0 0
        %583 = vmatprep.subr.bf16.mxu0 0
        %584 = vmatpush1.bf16.xpose.msra.mxu0 0
        %585 = vmatprep.subr.bf16.mxu0 0
        %586 = vmatpush1.bf16.xpose.msra.mxu0 0
        %587 = vmatprep.subr.bf16.mxu0 0
        %588 = vmatpush1.bf16.xpose.msra.mxu0 %v571
        %589 = vmatprep.subr.bf16.mxu0 0
        %590 = vmatpush2.bf16.xpose.msra.mxu0 0
        %591 = vmatprep.subr.bf16.mxu0 0
        %592 = vmatpush2.bf16.xpose.msra.mxu0 0
        %593 = vmatprep.subr.bf16.mxu0 0
        %594 = vmatpush2.bf16.xpose.msra.mxu0 0
        %595 = vmatprep.subr.bf16.mxu0 0
        %596 = vmatpush2.bf16.xpose.msra.mxu0 0
        %597 = vmatprep.subr.bf16.mxu0 0
        %598 = vmatpush2.bf16.xpose.msra.mxu0 0
        %599 = vmatprep.subr.bf16.mxu0 0
        %600 = vmatpush2.bf16.xpose.msra.mxu0 0
        %601 = vmatprep.subr.bf16.mxu0 0
        %602 = vmatpush2.bf16.xpose.msra.mxu0 0
        %603 = vmatprep.subr.bf16.mxu0 0
        %604 = vmatpush2.bf16.xpose.msra.mxu0 0
        %605 = vmatprep.mubr.bf16.mxu0 0
        %606 = vmatmul.mubr.bf16.gmra.mxu0 %v568
        %v607 = vpop.f32.mrf.mxu0
        %v608 = vadd.f32 0.0, %v607
        %v609 = vpop.f32.mrf.mxu0
        %v610 = vpop.f32.mrf.mxu0
        %v611 = vadd.f32 0.0, %v610
        %v612 = vpop.f32.mrf.mxu0
        %613 = vdwg.mxu0
        %v614 = vsel %vm486, %v608, -inf
        %615 = vmax.xlane.f32.xlu0 %v614
        %v616 = vpop.xlane.xlu0 %615
        %v617 = vsel %vm490, %v611, -inf
        %618 = vmax.xlane.f32.xlu0 %v617
        %v619 = vpop.xlane.xlu0 %618
        %v620 = vsub.f32 %v608, %v616
        %v621 = vsub.f32 %v611, %v619
        %v622 = vmul.f32 %v620, 1.442695
        %v623 = vpow.pop %v622
        %v624 = vmul.f32 %v621, 1.442695
        %v625 = vpow.pop %v624
        %v626 = vsel %vm486, %v623, 0.0
        %627 = vadd.xlane.f32.xlu0 %v626
        %v628 = vpop.xlane.xlu0 %627
        %v629 = vsel %vm490, %v625, 0.0
        %630 = vadd.xlane.f32.xlu0 %v629
        %v631 = vpop.xlane.xlu0 %630
        %v632 = vrcp.pop %v628
        %v633 = vrcp.pop %v631
        %v634 = vmul.f32 %v623, %v632
        %v635 = vmul.f32 %v625, %v633
        %v636 = vpack.c.bf16 %v635, %v634
        %638 = vrot.lane.b32.xlu0 %v434, 120
        %v639 = vpop.permute.xlu0 %638
        %v641 = vsel %vm486, %v636, 0
        %v644 = vand.u32 %v639, %v517
        %646 = vmatprep.subr.bf16.mxu0 0
        %647 = vmatpush1.bf16.msra.mxu0 0
        %648 = vmatprep.subr.bf16.mxu0 0
        %649 = vmatpush1.bf16.msra.mxu0 0
        %650 = vmatprep.subr.bf16.mxu0 0
        %651 = vmatpush1.bf16.msra.mxu0 0
        %652 = vmatprep.subr.bf16.mxu0 0
        %653 = vmatpush1.bf16.msra.mxu0 0
        %654 = vmatprep.subr.bf16.mxu0 0
        %655 = vmatpush1.bf16.msra.mxu0 0
        %656 = vmatprep.subr.bf16.mxu0 0
        %657 = vmatpush1.bf16.msra.mxu0 0
        %658 = vmatprep.subr.bf16.mxu0 0
        %659 = vmatpush1.bf16.msra.mxu0 0
        %660 = vmatprep.subr.bf16.mxu0 0
        %661 = vmatpush1.bf16.msra.mxu0 %v644
        %662 = vmatprep.subr.bf16.mxu0 0
        %663 = vmatpush2.bf16.msra.mxu0 0
        %664 = vmatprep.subr.bf16.mxu0 0
        %665 = vmatpush2.bf16.msra.mxu0 0
        %666 = vmatprep.subr.bf16.mxu0 0
        %667 = vmatpush2.bf16.msra.mxu0 0
        %668 = vmatprep.subr.bf16.mxu0 0
        %669 = vmatpush2.bf16.msra.mxu0 0
        %670 = vmatprep.subr.bf16.mxu0 0
        %671 = vmatpush2.bf16.msra.mxu0 0
        %672 = vmatprep.subr.bf16.mxu0 0
        %673 = vmatpush2.bf16.msra.mxu0 0
        %674 = vmatprep.subr.bf16.mxu0 0
        %675 = vmatpush2.bf16.msra.mxu0 0
        %676 = vmatprep.subr.bf16.mxu0 0
        %677 = vmatpush2.bf16.msra.mxu0 0
        %678 = vmatprep.mubr.bf16.mxu0 0
        %679 = vmatmul.mubr.bf16.gmra.mxu0 %v641
        %v680 = vpop.f32.mrf.mxu0
        %v681 = vadd.f32 0.0, %v680
        %v682 = vpop.f32.mrf.mxu0
        %v683 = vpop.f32.mrf.mxu0
        %v684 = vadd.f32 0.0, %v683
        %v685 = vpop.f32.mrf.mxu0
        %686 = vdwg.mxu0
        %687 = vrot.lane.b32.xlu0 %v432, 112
        %v688 = vpop.permute.xlu0 %687
        %689 = vrot.lane.b32.xlu0 %v433, 48
        %v690 = vpop.permute.xlu0 %689
        %v692 = vsel %vm438, %v688, 0
        %v695 = vsel %vm438, %v690, 0
        %697 = vmatprep.subr.bf16.mxu0 0
        %698 = vmatpush1.bf16.xpose.msra.mxu0 0
        %699 = vmatprep.subr.bf16.mxu0 0
        %700 = vmatpush1.bf16.xpose.msra.mxu0 0
        %701 = vmatprep.subr.bf16.mxu0 0
        %702 = vmatpush1.bf16.xpose.msra.mxu0 0
        %703 = vmatprep.subr.bf16.mxu0 0
        %704 = vmatpush1.bf16.xpose.msra.mxu0 0
        %705 = vmatprep.subr.bf16.mxu0 0
        %706 = vmatpush1.bf16.xpose.msra.mxu0 0
        %707 = vmatprep.subr.bf16.mxu0 0
        %708 = vmatpush1.bf16.xpose.msra.mxu0 0
        %709 = vmatprep.subr.bf16.mxu0 0
        %710 = vmatpush1.bf16.xpose.msra.mxu0 0
        %711 = vmatprep.subr.bf16.mxu0 0
        %712 = vmatpush1.bf16.xpose.msra.mxu0 %v695
        %713 = vmatprep.subr.bf16.mxu0 0
        %714 = vmatpush2.bf16.xpose.msra.mxu0 0
        %715 = vmatprep.subr.bf16.mxu0 0
        %716 = vmatpush2.bf16.xpose.msra.mxu0 0
        %717 = vmatprep.subr.bf16.mxu0 0
        %718 = vmatpush2.bf16.xpose.msra.mxu0 0
        %719 = vmatprep.subr.bf16.mxu0 0
        %720 = vmatpush2.bf16.xpose.msra.mxu0 0
        %721 = vmatprep.subr.bf16.mxu0 0
        %722 = vmatpush2.bf16.xpose.msra.mxu0 0
        %723 = vmatprep.subr.bf16.mxu0 0
        %724 = vmatpush2.bf16.xpose.msra.mxu0 0
        %725 = vmatprep.subr.bf16.mxu0 0
        %726 = vmatpush2.bf16.xpose.msra.mxu0 0
        %727 = vmatprep.subr.bf16.mxu0 0
        %728 = vmatpush2.bf16.xpose.msra.mxu0 0
        %729 = vmatprep.mubr.bf16.mxu0 0
        %730 = vmatmul.mubr.bf16.gmra.mxu0 %v692
        %v731 = vpop.f32.mrf.mxu0
        %v732 = vadd.f32 0.0, %v731
        %v733 = vpop.f32.mrf.mxu0
        %v734 = vpop.f32.mrf.mxu0
        %v735 = vadd.f32 0.0, %v734
        %v736 = vpop.f32.mrf.mxu0
        %737 = vdwg.mxu0
        %v738 = vsel %vm486, %v732, -inf
        %739 = vmax.xlane.f32.xlu0 %v738
        %v740 = vpop.xlane.xlu0 %739
        %v741 = vsel %vm490, %v735, -inf
        %742 = vmax.xlane.f32.xlu0 %v741
        %v743 = vpop.xlane.xlu0 %742
        %v744 = vsub.f32 %v732, %v740
        %v745 = vsub.f32 %v735, %v743
        %v746 = vmul.f32 %v744, 1.442695
        %v747 = vpow.pop %v746
        %v748 = vmul.f32 %v745, 1.442695
        %v749 = vpow.pop %v748
        %v750 = vsel %vm486, %v747, 0.0
        %751 = vadd.xlane.f32.xlu0 %v750
        %v752 = vpop.xlane.xlu0 %751
        %v753 = vsel %vm490, %v749, 0.0
        %754 = vadd.xlane.f32.xlu0 %v753
        %v755 = vpop.xlane.xlu0 %754
        %v756 = vrcp.pop %v752
        %v757 = vrcp.pop %v755
        %v758 = vmul.f32 %v747, %v756
        %v759 = vmul.f32 %v749, %v757
        %v760 = vpack.c.bf16 %v759, %v758
        %761 = vrot.lane.b32.xlu0 %v434, 112
        %v762 = vpop.permute.xlu0 %761
        %v764 = vsel %vm486, %v760, 0
        %v767 = vand.u32 %v762, %v517
        %769 = vmatprep.subr.bf16.mxu0 0
        %770 = vmatpush1.bf16.msra.mxu0 0
        %771 = vmatprep.subr.bf16.mxu0 0
        %772 = vmatpush1.bf16.msra.mxu0 0
        %773 = vmatprep.subr.bf16.mxu0 0
        %774 = vmatpush1.bf16.msra.mxu0 0
        %775 = vmatprep.subr.bf16.mxu0 0
        %776 = vmatpush1.bf16.msra.mxu0 0
        %777 = vmatprep.subr.bf16.mxu0 0
        %778 = vmatpush1.bf16.msra.mxu0 0
        %779 = vmatprep.subr.bf16.mxu0 0
        %780 = vmatpush1.bf16.msra.mxu0 0
        %781 = vmatprep.subr.bf16.mxu0 0
        %782 = vmatpush1.bf16.msra.mxu0 0
        %783 = vmatprep.subr.bf16.mxu0 0
        %784 = vmatpush1.bf16.msra.mxu0 %v767
        %785 = vmatprep.subr.bf16.mxu0 0
        %786 = vmatpush2.bf16.msra.mxu0 0
        %787 = vmatprep.subr.bf16.mxu0 0
        %788 = vmatpush2.bf16.msra.mxu0 0
        %789 = vmatprep.subr.bf16.mxu0 0
        %790 = vmatpush2.bf16.msra.mxu0 0
        %791 = vmatprep.subr.bf16.mxu0 0
        %792 = vmatpush2.bf16.msra.mxu0 0
        %793 = vmatprep.subr.bf16.mxu0 0
        %794 = vmatpush2.bf16.msra.mxu0 0
        %795 = vmatprep.subr.bf16.mxu0 0
        %796 = vmatpush2.bf16.msra.mxu0 0
        %797 = vmatprep.subr.bf16.mxu0 0
        %798 = vmatpush2.bf16.msra.mxu0 0
        %799 = vmatprep.subr.bf16.mxu0 0
        %800 = vmatpush2.bf16.msra.mxu0 0
        %801 = vmatprep.mubr.bf16.mxu0 0
        %802 = vmatmul.mubr.bf16.gmra.mxu0 %v764
        %v803 = vpop.f32.mrf.mxu0
        %v804 = vadd.f32 0.0, %v803
        %v805 = vpop.f32.mrf.mxu0
        %v806 = vpop.f32.mrf.mxu0
        %v807 = vadd.f32 0.0, %v806
        %v808 = vpop.f32.mrf.mxu0
        %809 = vdwg.mxu0
        %810 = vrot.lane.b32.xlu0 %v432, 104
        %v811 = vpop.permute.xlu0 %810
        %812 = vrot.lane.b32.xlu0 %v433, 40
        %v813 = vpop.permute.xlu0 %812
        %v815 = vsel %vm438, %v811, 0
        %v818 = vsel %vm438, %v813, 0
        %820 = vmatprep.subr.bf16.mxu0 0
        %821 = vmatpush1.bf16.xpose.msra.mxu0 0
        %822 = vmatprep.subr.bf16.mxu0 0
        %823 = vmatpush1.bf16.xpose.msra.mxu0 0
        %824 = vmatprep.subr.bf16.mxu0 0
        %825 = vmatpush1.bf16.xpose.msra.mxu0 0
        %826 = vmatprep.subr.bf16.mxu0 0
        %827 = vmatpush1.bf16.xpose.msra.mxu0 0
        %828 = vmatprep.subr.bf16.mxu0 0
        %829 = vmatpush1.bf16.xpose.msra.mxu0 0
        %830 = vmatprep.subr.bf16.mxu0 0
        %831 = vmatpush1.bf16.xpose.msra.mxu0 0
        %832 = vmatprep.subr.bf16.mxu0 0
        %833 = vmatpush1.bf16.xpose.msra.mxu0 0
        %834 = vmatprep.subr.bf16.mxu0 0
        %835 = vmatpush1.bf16.xpose.msra.mxu0 %v818
        %836 = vmatprep.subr.bf16.mxu0 0
        %837 = vmatpush2.bf16.xpose.msra.mxu0 0
        %838 = vmatprep.subr.bf16.mxu0 0
        %839 = vmatpush2.bf16.xpose.msra.mxu0 0
        %840 = vmatprep.subr.bf16.mxu0 0
        %841 = vmatpush2.bf16.xpose.msra.mxu0 0
        %842 = vmatprep.subr.bf16.mxu0 0
        %843 = vmatpush2.bf16.xpose.msra.mxu0 0
        %844 = vmatprep.subr.bf16.mxu0 0
        %845 = vmatpush2.bf16.xpose.msra.mxu0 0
        %846 = vmatprep.subr.bf16.mxu0 0
        %847 = vmatpush2.bf16.xpose.msra.mxu0 0
        %848 = vmatprep.subr.bf16.mxu0 0
        %849 = vmatpush2.bf16.xpose.msra.mxu0 0
        %850 = vmatprep.subr.bf16.mxu0 0
        %851 = vmatpush2.bf16.xpose.msra.mxu0 0
        %852 = vmatprep.mubr.bf16.mxu0 0
        %853 = vmatmul.mubr.bf16.gmra.mxu0 %v815
        %v854 = vpop.f32.mrf.mxu0
        %v855 = vadd.f32 0.0, %v854
        %v856 = vpop.f32.mrf.mxu0
        %v857 = vpop.f32.mrf.mxu0
        %v858 = vadd.f32 0.0, %v857
        %v859 = vpop.f32.mrf.mxu0
        %860 = vdwg.mxu0
        %v861 = vsel %vm486, %v855, -inf
        %862 = vmax.xlane.f32.xlu0 %v861
        %v863 = vpop.xlane.xlu0 %862
        %v864 = vsel %vm490, %v858, -inf
        %865 = vmax.xlane.f32.xlu0 %v864
        %v866 = vpop.xlane.xlu0 %865
        %v867 = vsub.f32 %v855, %v863
        %v868 = vsub.f32 %v858, %v866
        %v869 = vmul.f32 %v867, 1.442695
        %v870 = vpow.pop %v869
        %v871 = vmul.f32 %v868, 1.442695
        %v872 = vpow.pop %v871
        %v873 = vsel %vm486, %v870, 0.0
        %874 = vadd.xlane.f32.xlu0 %v873
        %v875 = vpop.xlane.xlu0 %874
        %v876 = vsel %vm490, %v872, 0.0
        %877 = vadd.xlane.f32.xlu0 %v876
        %v878 = vpop.xlane.xlu0 %877
        %v879 = vrcp.pop %v875
        %v880 = vrcp.pop %v878
        %v881 = vmul.f32 %v870, %v879
        %v882 = vmul.f32 %v872, %v880
        %v883 = vpack.c.bf16 %v882, %v881
        %884 = vrot.lane.b32.xlu0 %v434, 104
        %v885 = vpop.permute.xlu0 %884
        %v887 = vsel %vm486, %v883, 0
        %v890 = vand.u32 %v885, %v517
        %892 = vmatprep.subr.bf16.mxu0 0
        %893 = vmatpush1.bf16.msra.mxu0 0
        %894 = vmatprep.subr.bf16.mxu0 0
        %895 = vmatpush1.bf16.msra.mxu0 0
        %896 = vmatprep.subr.bf16.mxu0 0
        %897 = vmatpush1.bf16.msra.mxu0 0
        %898 = vmatprep.subr.bf16.mxu0 0
        %899 = vmatpush1.bf16.msra.mxu0 0
        %900 = vmatprep.subr.bf16.mxu0 0
        %901 = vmatpush1.bf16.msra.mxu0 0
        %902 = vmatprep.subr.bf16.mxu0 0
        %903 = vmatpush1.bf16.msra.mxu0 0
        %904 = vmatprep.subr.bf16.mxu0 0
        %905 = vmatpush1.bf16.msra.mxu0 0
        %906 = vmatprep.subr.bf16.mxu0 0
        %907 = vmatpush1.bf16.msra.mxu0 %v890
        %908 = vmatprep.subr.bf16.mxu0 0
        %909 = vmatpush2.bf16.msra.mxu0 0
        %910 = vmatprep.subr.bf16.mxu0 0
        %911 = vmatpush2.bf16.msra.mxu0 0
        %912 = vmatprep.subr.bf16.mxu0 0
        %913 = vmatpush2.bf16.msra.mxu0 0
        %914 = vmatprep.subr.bf16.mxu0 0
        %915 = vmatpush2.bf16.msra.mxu0 0
        %916 = vmatprep.subr.bf16.mxu0 0
        %917 = vmatpush2.bf16.msra.mxu0 0
        %918 = vmatprep.subr.bf16.mxu0 0
        %919 = vmatpush2.bf16.msra.mxu0 0
        %920 = vmatprep.subr.bf16.mxu0 0
        %921 = vmatpush2.bf16.msra.mxu0 0
        %922 = vmatprep.subr.bf16.mxu0 0
        %923 = vmatpush2.bf16.msra.mxu0 0
        %924 = vmatprep.mubr.bf16.mxu0 0
        %925 = vmatmul.mubr.bf16.gmra.mxu0 %v887
        %v926 = vpop.f32.mrf.mxu0
        %v927 = vadd.f32 0.0, %v926
        %v928 = vpop.f32.mrf.mxu0
        %v929 = vpop.f32.mrf.mxu0
        %v930 = vadd.f32 0.0, %v929
        %v931 = vpop.f32.mrf.mxu0
        %932 = vdwg.mxu0
        %933 = vrot.lane.b32.xlu0 %v432, 96
        %v934 = vpop.permute.xlu0 %933
        %935 = vrot.lane.b32.xlu0 %v433, 32
        %v936 = vpop.permute.xlu0 %935
        %v938 = vsel %vm438, %v934, 0
        %v941 = vsel %vm438, %v936, 0
        %943 = vmatprep.subr.bf16.mxu0 0
        %944 = vmatpush1.bf16.xpose.msra.mxu0 0
        %945 = vmatprep.subr.bf16.mxu0 0
        %946 = vmatpush1.bf16.xpose.msra.mxu0 0
        %947 = vmatprep.subr.bf16.mxu0 0
        %948 = vmatpush1.bf16.xpose.msra.mxu0 0
        %949 = vmatprep.subr.bf16.mxu0 0
        %950 = vmatpush1.bf16.xpose.msra.mxu0 0
        %951 = vmatprep.subr.bf16.mxu0 0
        %952 = vmatpush1.bf16.xpose.msra.mxu0 0
        %953 = vmatprep.subr.bf16.mxu0 0
        %954 = vmatpush1.bf16.xpose.msra.mxu0 0
        %955 = vmatprep.subr.bf16.mxu0 0
        %956 = vmatpush1.bf16.xpose.msra.mxu0 0
        %957 = vmatprep.subr.bf16.mxu0 0
        %958 = vmatpush1.bf16.xpose.msra.mxu0 %v941
        %959 = vmatprep.subr.bf16.mxu0 0
        %960 = vmatpush2.bf16.xpose.msra.mxu0 0
        %961 = vmatprep.subr.bf16.mxu0 0
        %962 = vmatpush2.bf16.xpose.msra.mxu0 0
        %963 = vmatprep.subr.bf16.mxu0 0
        %964 = vmatpush2.bf16.xpose.msra.mxu0 0
        %965 = vmatprep.subr.bf16.mxu0 0
        %966 = vmatpush2.bf16.xpose.msra.mxu0 0
        %967 = vmatprep.subr.bf16.mxu0 0
        %968 = vmatpush2.bf16.xpose.msra.mxu0 0
        %969 = vmatprep.subr.bf16.mxu0 0
        %970 = vmatpush2.bf16.xpose.msra.mxu0 0
        %971 = vmatprep.subr.bf16.mxu0 0
        %972 = vmatpush2.bf16.xpose.msra.mxu0 0
        %973 = vmatprep.subr.bf16.mxu0 0
        %974 = vmatpush2.bf16.xpose.msra.mxu0 0
        %975 = vmatprep.mubr.bf16.mxu0 0
        %976 = vmatmul.mubr.bf16.gmra.mxu0 %v938
        %v977 = vpop.f32.mrf.mxu0
        %v978 = vadd.f32 0.0, %v977
        %v979 = vpop.f32.mrf.mxu0
        %v980 = vpop.f32.mrf.mxu0
        %v981 = vadd.f32 0.0, %v980
        %v982 = vpop.f32.mrf.mxu0
        %983 = vdwg.mxu0
        %v984 = vsel %vm486, %v978, -inf
        %985 = vmax.xlane.f32.xlu0 %v984
        %v986 = vpop.xlane.xlu0 %985
        %v987 = vsel %vm490, %v981, -inf
        %988 = vmax.xlane.f32.xlu0 %v987
        %v989 = vpop.xlane.xlu0 %988
        %v990 = vsub.f32 %v978, %v986
        %v991 = vsub.f32 %v981, %v989
        %v992 = vmul.f32 %v990, 1.442695
        %v993 = vpow.pop %v992
        %v994 = vmul.f32 %v991, 1.442695
        %v995 = vpow.pop %v994
        %v996 = vsel %vm486, %v993, 0.0
        %997 = vadd.xlane.f32.xlu0 %v996
        %v998 = vpop.xlane.xlu0 %997
        %v999 = vsel %vm490, %v995, 0.0
        %1000 = vadd.xlane.f32.xlu0 %v999
        %v1001 = vpop.xlane.xlu0 %1000
        %v1002 = vrcp.pop %v998
        %v1003 = vrcp.pop %v1001
        %v1004 = vmul.f32 %v993, %v1002
        %v1005 = vmul.f32 %v995, %v1003
        %v1006 = vpack.c.bf16 %v1005, %v1004
        %1007 = vrot.lane.b32.xlu0 %v434, 96
        %v1008 = vpop.permute.xlu0 %1007
        %v1010 = vsel %vm486, %v1006, 0
        %v1013 = vand.u32 %v1008, %v517
        %1015 = vmatprep.subr.bf16.mxu0 0
        %1016 = vmatpush1.bf16.msra.mxu0 0
        %1017 = vmatprep.subr.bf16.mxu0 0
        %1018 = vmatpush1.bf16.msra.mxu0 0
        %1019 = vmatprep.subr.bf16.mxu0 0
        %1020 = vmatpush1.bf16.msra.mxu0 0
        %1021 = vmatprep.subr.bf16.mxu0 0
        %1022 = vmatpush1.bf16.msra.mxu0 0
        %1023 = vmatprep.subr.bf16.mxu0 0
        %1024 = vmatpush1.bf16.msra.mxu0 0
        %1025 = vmatprep.subr.bf16.mxu0 0
        %1026 = vmatpush1.bf16.msra.mxu0 0
        %1027 = vmatprep.subr.bf16.mxu0 0
        %1028 = vmatpush1.bf16.msra.mxu0 0
        %1029 = vmatprep.subr.bf16.mxu0 0
        %1030 = vmatpush1.bf16.msra.mxu0 %v1013
        %1031 = vmatprep.subr.bf16.mxu0 0
        %1032 = vmatpush2.bf16.msra.mxu0 0
        %1033 = vmatprep.subr.bf16.mxu0 0
        %1034 = vmatpush2.bf16.msra.mxu0 0
        %1035 = vmatprep.subr.bf16.mxu0 0
        %1036 = vmatpush2.bf16.msra.mxu0 0
        %1037 = vmatprep.subr.bf16.mxu0 0
        %1038 = vmatpush2.bf16.msra.mxu0 0
        %1039 = vmatprep.subr.bf16.mxu0 0
        %1040 = vmatpush2.bf16.msra.mxu0 0
        %1041 = vmatprep.subr.bf16.mxu0 0
        %1042 = vmatpush2.bf16.msra.mxu0 0
        %1043 = vmatprep.subr.bf16.mxu0 0
        %1044 = vmatpush2.bf16.msra.mxu0 0
        %1045 = vmatprep.subr.bf16.mxu0 0
        %1046 = vmatpush2.bf16.msra.mxu0 0
        %1047 = vmatprep.mubr.bf16.mxu0 0
        %1048 = vmatmul.mubr.bf16.gmra.mxu0 %v1010
        %v1049 = vpop.f32.mrf.mxu0
        %v1050 = vadd.f32 0.0, %v1049
        %v1051 = vpop.f32.mrf.mxu0
        %v1052 = vpop.f32.mrf.mxu0
        %v1053 = vadd.f32 0.0, %v1052
        %v1054 = vpop.f32.mrf.mxu0
        %1055 = vdwg.mxu0
        %1056 = vrot.lane.b32.xlu0 %v432, 88
        %v1057 = vpop.permute.xlu0 %1056
        %1058 = vrot.lane.b32.xlu0 %v433, 24
        %v1059 = vpop.permute.xlu0 %1058
        %v1061 = vsel %vm438, %v1057, 0
        %v1064 = vsel %vm438, %v1059, 0
        %1066 = vmatprep.subr.bf16.mxu0 0
        %1067 = vmatpush1.bf16.xpose.msra.mxu0 0
        %1068 = vmatprep.subr.bf16.mxu0 0
        %1069 = vmatpush1.bf16.xpose.msra.mxu0 0
        %1070 = vmatprep.subr.bf16.mxu0 0
        %1071 = vmatpush1.bf16.xpose.msra.mxu0 0
        %1072 = vmatprep.subr.bf16.mxu0 0
        %1073 = vmatpush1.bf16.xpose.msra.mxu0 0
        %1074 = vmatprep.subr.bf16.mxu0 0
        %1075 = vmatpush1.bf16.xpose.msra.mxu0 0
        %1076 = vmatprep.subr.bf16.mxu0 0
        %1077 = vmatpush1.bf16.xpose.msra.mxu0 0
        %1078 = vmatprep.subr.bf16.mxu0 0
        %1079 = vmatpush1.bf16.xpose.msra.mxu0 0
        %1080 = vmatprep.subr.bf16.mxu0 0
        %1081 = vmatpush1.bf16.xpose.msra.mxu0 %v1064
        %1082 = vmatprep.subr.bf16.mxu0 0
        %1083 = vmatpush2.bf16.xpose.msra.mxu0 0
        %1084 = vmatprep.subr.bf16.mxu0 0
        %1085 = vmatpush2.bf16.xpose.msra.mxu0 0
        %1086 = vmatprep.subr.bf16.mxu0 0
        %1087 = vmatpush2.bf16.xpose.msra.mxu0 0
        %1088 = vmatprep.subr.bf16.mxu0 0
        %1089 = vmatpush2.bf16.xpose.msra.mxu0 0
        %1090 = vmatprep.subr.bf16.mxu0 0
        %1091 = vmatpush2.bf16.xpose.msra.mxu0 0
        %1092 = vmatprep.subr.bf16.mxu0 0
        %1093 = vmatpush2.bf16.xpose.msra.mxu0 0
        %1094 = vmatprep.subr.bf16.mxu0 0
        %1095 = vmatpush2.bf16.xpose.msra.mxu0 0
        %1096 = vmatprep.subr.bf16.mxu0 0
        %1097 = vmatpush2.bf16.xpose.msra.mxu0 0
        %1098 = vmatprep.mubr.bf16.mxu0 0
        %1099 = vmatmul.mubr.bf16.gmra.mxu0 %v1061
        %v1100 = vpop.f32.mrf.mxu0
        %v1101 = vadd.f32 0.0, %v1100
        %v1102 = vpop.f32.mrf.mxu0
        %v1103 = vpop.f32.mrf.mxu0
        %v1104 = vadd.f32 0.0, %v1103
        %v1105 = vpop.f32.mrf.mxu0
        %1106 = vdwg.mxu0
        %v1107 = vsel %vm486, %v1101, -inf
        %1108 = vmax.xlane.f32.xlu0 %v1107
        %v1109 = vpop.xlane.xlu0 %1108
        %v1110 = vsel %vm490, %v1104, -inf
        %1111 = vmax.xlane.f32.xlu0 %v1110
        %v1112 = vpop.xlane.xlu0 %1111
        %v1113 = vsub.f32 %v1101, %v1109
        %v1114 = vsub.f32 %v1104, %v1112
        %v1115 = vmul.f32 %v1113, 1.442695
        %v1116 = vpow.pop %v1115
        %v1117 = vmul.f32 %v1114, 1.442695
        %v1118 = vpow.pop %v1117
        %v1119 = vsel %vm486, %v1116, 0.0
        %1120 = vadd.xlane.f32.xlu0 %v1119
        %v1121 = vpop.xlane.xlu0 %1120
        %v1122 = vsel %vm490, %v1118, 0.0
        %1123 = vadd.xlane.f32.xlu0 %v1122
        %v1124 = vpop.xlane.xlu0 %1123
        %v1125 = vrcp.pop %v1121
        %v1126 = vrcp.pop %v1124
        %v1127 = vmul.f32 %v1116, %v1125
        %v1128 = vmul.f32 %v1118, %v1126
        %v1129 = vpack.c.bf16 %v1128, %v1127
        %1130 = vrot.lane.b32.xlu0 %v434, 88
        %v1131 = vpop.permute.xlu0 %1130
        %v1133 = vsel %vm486, %v1129, 0
        %v1136 = vand.u32 %v1131, %v517
        %1138 = vmatprep.subr.bf16.mxu0 0
        %1139 = vmatpush1.bf16.msra.mxu0 0
        %1140 = vmatprep.subr.bf16.mxu0 0
        %1141 = vmatpush1.bf16.msra.mxu0 0
        %1142 = vmatprep.subr.bf16.mxu0 0
        %1143 = vmatpush1.bf16.msra.mxu0 0
        %1144 = vmatprep.subr.bf16.mxu0 0
        %1145 = vmatpush1.bf16.msra.mxu0 0
        %1146 = vmatprep.subr.bf16.mxu0 0
        %1147 = vmatpush1.bf16.msra.mxu0 0
        %1148 = vmatprep.subr.bf16.mxu0 0
        %1149 = vmatpush1.bf16.msra.mxu0 0
        %1150 = vmatprep.subr.bf16.mxu0 0
        %1151 = vmatpush1.bf16.msra.mxu0 0
        %1152 = vmatprep.subr.bf16.mxu0 0
        %1153 = vmatpush1.bf16.msra.mxu0 %v1136
        %1154 = vmatprep.subr.bf16.mxu0 0
        %1155 = vmatpush2.bf16.msra.mxu0 0
        %1156 = vmatprep.subr.bf16.mxu0 0
        %1157 = vmatpush2.bf16.msra.mxu0 0
        %1158 = vmatprep.subr.bf16.mxu0 0
        %1159 = vmatpush2.bf16.msra.mxu0 0
        %1160 = vmatprep.subr.bf16.mxu0 0
        %1161 = vmatpush2.bf16.msra.mxu0 0
        %1162 = vmatprep.subr.bf16.mxu0 0
        %1163 = vmatpush2.bf16.msra.mxu0 0
        %1164 = vmatprep.subr.bf16.mxu0 0
        %1165 = vmatpush2.bf16.msra.mxu0 0
        %1166 = vmatprep.subr.bf16.mxu0 0
        %1167 = vmatpush2.bf16.msra.mxu0 0
        %1168 = vmatprep.subr.bf16.mxu0 0
        %1169 = vmatpush2.bf16.msra.mxu0 0
        %1170 = vmatprep.mubr.bf16.mxu0 0
        %1171 = vmatmul.mubr.bf16.gmra.mxu0 %v1133
        %v1172 = vpop.f32.mrf.mxu0
        %v1173 = vadd.f32 0.0, %v1172
        %v1174 = vpop.f32.mrf.mxu0
        %v1175 = vpop.f32.mrf.mxu0
        %v1176 = vadd.f32 0.0, %v1175
        %v1177 = vpop.f32.mrf.mxu0
        %1178 = vdwg.mxu0
        %1179 = vrot.lane.b32.xlu0 %v432, 80
        %v1180 = vpop.permute.xlu0 %1179
        %1181 = vrot.lane.b32.xlu0 %v433, 16
        %v1182 = vpop.permute.xlu0 %1181
        %v1184 = vsel %vm438, %v1180, 0
        %v1187 = vsel %vm438, %v1182, 0
        %1189 = vmatprep.subr.bf16.mxu0 0
        %1190 = vmatpush1.bf16.xpose.msra.mxu0 0
        %1191 = vmatprep.subr.bf16.mxu0 0
        %1192 = vmatpush1.bf16.xpose.msra.mxu0 0
        %1193 = vmatprep.subr.bf16.mxu0 0
        %1194 = vmatpush1.bf16.xpose.msra.mxu0 0
        %1195 = vmatprep.subr.bf16.mxu0 0
        %1196 = vmatpush1.bf16.xpose.msra.mxu0 0
        %1197 = vmatprep.subr.bf16.mxu0 0
        %1198 = vmatpush1.bf16.xpose.msra.mxu0 0
        %1199 = vmatprep.subr.bf16.mxu0 0
        %1200 = vmatpush1.bf16.xpose.msra.mxu0 0
        %1201 = vmatprep.subr.bf16.mxu0 0
        %1202 = vmatpush1.bf16.xpose.msra.mxu0 0
        %1203 = vmatprep.subr.bf16.mxu0 0
        %1204 = vmatpush1.bf16.xpose.msra.mxu0 %v1187
        %1205 = vmatprep.subr.bf16.mxu0 0
        %1206 = vmatpush2.bf16.xpose.msra.mxu0 0
        %1207 = vmatprep.subr.bf16.mxu0 0
        %1208 = vmatpush2.bf16.xpose.msra.mxu0 0
        %1209 = vmatprep.subr.bf16.mxu0 0
        %1210 = vmatpush2.bf16.xpose.msra.mxu0 0
        %1211 = vmatprep.subr.bf16.mxu0 0
        %1212 = vmatpush2.bf16.xpose.msra.mxu0 0
        %1213 = vmatprep.subr.bf16.mxu0 0
        %1214 = vmatpush2.bf16.xpose.msra.mxu0 0
        %1215 = vmatprep.subr.bf16.mxu0 0
        %1216 = vmatpush2.bf16.xpose.msra.mxu0 0
        %1217 = vmatprep.subr.bf16.mxu0 0
        %1218 = vmatpush2.bf16.xpose.msra.mxu0 0
        %1219 = vmatprep.subr.bf16.mxu0 0
        %1220 = vmatpush2.bf16.xpose.msra.mxu0 0
        %1221 = vmatprep.mubr.bf16.mxu0 0
        %1222 = vmatmul.mubr.bf16.gmra.mxu0 %v1184
        %v1223 = vpop.f32.mrf.mxu0
        %v1224 = vadd.f32 0.0, %v1223
        %v1225 = vpop.f32.mrf.mxu0
        %v1226 = vpop.f32.mrf.mxu0
        %v1227 = vadd.f32 0.0, %v1226
        %v1228 = vpop.f32.mrf.mxu0
        %1229 = vdwg.mxu0
        %v1230 = vsel %vm486, %v1224, -inf
        %1231 = vmax.xlane.f32.xlu0 %v1230
        %v1232 = vpop.xlane.xlu0 %1231
        %v1233 = vsel %vm490, %v1227, -inf
        %1234 = vmax.xlane.f32.xlu0 %v1233
        %v1235 = vpop.xlane.xlu0 %1234
        %v1236 = vsub.f32 %v1224, %v1232
        %v1237 = vsub.f32 %v1227, %v1235
        %v1238 = vmul.f32 %v1236, 1.442695
        %v1239 = vpow.pop %v1238
        %v1240 = vmul.f32 %v1237, 1.442695
        %v1241 = vpow.pop %v1240
        %v1242 = vsel %vm486, %v1239, 0.0
        %1243 = vadd.xlane.f32.xlu0 %v1242
        %v1244 = vpop.xlane.xlu0 %1243
        %v1245 = vsel %vm490, %v1241, 0.0
        %1246 = vadd.xlane.f32.xlu0 %v1245
        %v1247 = vpop.xlane.xlu0 %1246
        %v1248 = vrcp.pop %v1244
        %v1249 = vrcp.pop %v1247
        %v1250 = vmul.f32 %v1239, %v1248
        %v1251 = vmul.f32 %v1241, %v1249
        %v1252 = vpack.c.bf16 %v1251, %v1250
        %1253 = vrot.lane.b32.xlu0 %v434, 80
        %v1254 = vpop.permute.xlu0 %1253
        %v1256 = vsel %vm486, %v1252, 0
        %v1259 = vand.u32 %v1254, %v517
        %1261 = vmatprep.subr.bf16.mxu0 0
        %1262 = vmatpush1.bf16.msra.mxu0 0
        %1263 = vmatprep.subr.bf16.mxu0 0
        %1264 = vmatpush1.bf16.msra.mxu0 0
        %1265 = vmatprep.subr.bf16.mxu0 0
        %1266 = vmatpush1.bf16.msra.mxu0 0
        %1267 = vmatprep.subr.bf16.mxu0 0
        %1268 = vmatpush1.bf16.msra.mxu0 0
        %1269 = vmatprep.subr.bf16.mxu0 0
        %1270 = vmatpush1.bf16.msra.mxu0 0
        %1271 = vmatprep.subr.bf16.mxu0 0
        %1272 = vmatpush1.bf16.msra.mxu0 0
        %1273 = vmatprep.subr.bf16.mxu0 0
        %1274 = vmatpush1.bf16.msra.mxu0 0
        %1275 = vmatprep.subr.bf16.mxu0 0
        %1276 = vmatpush1.bf16.msra.mxu0 %v1259
        %1277 = vmatprep.subr.bf16.mxu0 0
        %1278 = vmatpush2.bf16.msra.mxu0 0
        %1279 = vmatprep.subr.bf16.mxu0 0
        %1280 = vmatpush2.bf16.msra.mxu0 0
        %1281 = vmatprep.subr.bf16.mxu0 0
        %1282 = vmatpush2.bf16.msra.mxu0 0
        %1283 = vmatprep.subr.bf16.mxu0 0
        %1284 = vmatpush2.bf16.msra.mxu0 0
        %1285 = vmatprep.subr.bf16.mxu0 0
        %1286 = vmatpush2.bf16.msra.mxu0 0
        %1287 = vmatprep.subr.bf16.mxu0 0
        %1288 = vmatpush2.bf16.msra.mxu0 0
        %1289 = vmatprep.subr.bf16.mxu0 0
        %1290 = vmatpush2.bf16.msra.mxu0 0
        %1291 = vmatprep.subr.bf16.mxu0 0
        %1292 = vmatpush2.bf16.msra.mxu0 0
        %1293 = vmatprep.mubr.bf16.mxu0 0
        %1294 = vmatmul.mubr.bf16.gmra.mxu0 %v1256
        %v1295 = vpop.f32.mrf.mxu0
        %v1296 = vadd.f32 0.0, %v1295
        %v1297 = vpop.f32.mrf.mxu0
        %v1298 = vpop.f32.mrf.mxu0
        %v1299 = vadd.f32 0.0, %v1298
        %v1300 = vpop.f32.mrf.mxu0
        %1301 = vdwg.mxu0
        %1302 = vrot.lane.b32.xlu0 %v432, 72
        %v1303 = vpop.permute.xlu0 %1302
        %1304 = vrot.lane.b32.xlu0 %v433, 8
        %v1305 = vpop.permute.xlu0 %1304
        %v1307 = vsel %vm438, %v1303, 0
        %v1310 = vsel %vm438, %v1305, 0
        %1312 = vmatprep.subr.bf16.mxu0 0
        %1313 = vmatpush1.bf16.xpose.msra.mxu0 0
        %1314 = vmatprep.subr.bf16.mxu0 0
        %1315 = vmatpush1.bf16.xpose.msra.mxu0 0
        %1316 = vmatprep.subr.bf16.mxu0 0
        %1317 = vmatpush1.bf16.xpose.msra.mxu0 0
        %1318 = vmatprep.subr.bf16.mxu0 0
        %1319 = vmatpush1.bf16.xpose.msra.mxu0 0
        %1320 = vmatprep.subr.bf16.mxu0 0
        %1321 = vmatpush1.bf16.xpose.msra.mxu0 0
        %1322 = vmatprep.subr.bf16.mxu0 0
        %1323 = vmatpush1.bf16.xpose.msra.mxu0 0
        %1324 = vmatprep.subr.bf16.mxu0 0
        %1325 = vmatpush1.bf16.xpose.msra.mxu0 0
        %1326 = vmatprep.subr.bf16.mxu0 0
        %1327 = vmatpush1.bf16.xpose.msra.mxu0 %v1310
        %1328 = vmatprep.subr.bf16.mxu0 0
        %1329 = vmatpush2.bf16.xpose.msra.mxu0 0
        %1330 = vmatprep.subr.bf16.mxu0 0
        %1331 = vmatpush2.bf16.xpose.msra.mxu0 0
        %1332 = vmatprep.subr.bf16.mxu0 0
        %1333 = vmatpush2.bf16.xpose.msra.mxu0 0
        %1334 = vmatprep.subr.bf16.mxu0 0
        %1335 = vmatpush2.bf16.xpose.msra.mxu0 0
        %1336 = vmatprep.subr.bf16.mxu0 0
        %1337 = vmatpush2.bf16.xpose.msra.mxu0 0
        %1338 = vmatprep.subr.bf16.mxu0 0
        %1339 = vmatpush2.bf16.xpose.msra.mxu0 0
        %1340 = vmatprep.subr.bf16.mxu0 0
        %1341 = vmatpush2.bf16.xpose.msra.mxu0 0
        %1342 = vmatprep.subr.bf16.mxu0 0
        %1343 = vmatpush2.bf16.xpose.msra.mxu0 0
        %1344 = vmatprep.mubr.bf16.mxu0 0
        %1345 = vmatmul.mubr.bf16.gmra.mxu0 %v1307
        %v1346 = vpop.f32.mrf.mxu0
        %v1347 = vadd.f32 0.0, %v1346
        %v1348 = vpop.f32.mrf.mxu0
        %v1349 = vpop.f32.mrf.mxu0
        %v1350 = vadd.f32 0.0, %v1349
        %v1351 = vpop.f32.mrf.mxu0
        %1352 = vdwg.mxu0
        %v1353 = vsel %vm486, %v1347, -inf
        %1354 = vmax.xlane.f32.xlu0 %v1353
        %v1355 = vpop.xlane.xlu0 %1354
        %v1356 = vsel %vm490, %v1350, -inf
        %1357 = vmax.xlane.f32.xlu0 %v1356
        %v1358 = vpop.xlane.xlu0 %1357
        %v1359 = vsub.f32 %v1347, %v1355
        %v1360 = vsub.f32 %v1350, %v1358
        %v1361 = vmul.f32 %v1359, 1.442695
        %v1362 = vpow.pop %v1361
        %v1363 = vmul.f32 %v1360, 1.442695
        %v1364 = vpow.pop %v1363
        %v1365 = vsel %vm486, %v1362, 0.0
        %1366 = vadd.xlane.f32.xlu0 %v1365
        %v1367 = vpop.xlane.xlu0 %1366
        %v1368 = vsel %vm490, %v1364, 0.0
        %1369 = vadd.xlane.f32.xlu0 %v1368
        %v1370 = vpop.xlane.xlu0 %1369
        %v1371 = vrcp.pop %v1367
        %v1372 = vrcp.pop %v1370
        %v1373 = vmul.f32 %v1362, %v1371
        %v1374 = vmul.f32 %v1364, %v1372
        %v1375 = vpack.c.bf16 %v1374, %v1373
        %1376 = vrot.lane.b32.xlu0 %v434, 72
        %v1377 = vpop.permute.xlu0 %1376
        %v1379 = vsel %vm486, %v1375, 0
        %v1382 = vand.u32 %v1377, %v517
        %1384 = vmatprep.subr.bf16.mxu0 0
        %1385 = vmatpush1.bf16.msra.mxu0 0
        %1386 = vmatprep.subr.bf16.mxu0 0
        %1387 = vmatpush1.bf16.msra.mxu0 0
        %1388 = vmatprep.subr.bf16.mxu0 0
        %1389 = vmatpush1.bf16.msra.mxu0 0
        %1390 = vmatprep.subr.bf16.mxu0 0
        %1391 = vmatpush1.bf16.msra.mxu0 0
        %1392 = vmatprep.subr.bf16.mxu0 0
        %1393 = vmatpush1.bf16.msra.mxu0 0
        %1394 = vmatprep.subr.bf16.mxu0 0
        %1395 = vmatpush1.bf16.msra.mxu0 0
        %1396 = vmatprep.subr.bf16.mxu0 0
        %1397 = vmatpush1.bf16.msra.mxu0 0
        %1398 = vmatprep.subr.bf16.mxu0 0
        %1399 = vmatpush1.bf16.msra.mxu0 %v1382
        %1400 = vmatprep.subr.bf16.mxu0 0
        %1401 = vmatpush2.bf16.msra.mxu0 0
        %1402 = vmatprep.subr.bf16.mxu0 0
        %1403 = vmatpush2.bf16.msra.mxu0 0
        %1404 = vmatprep.subr.bf16.mxu0 0
        %1405 = vmatpush2.bf16.msra.mxu0 0
        %1406 = vmatprep.subr.bf16.mxu0 0
        %1407 = vmatpush2.bf16.msra.mxu0 0
        %1408 = vmatprep.subr.bf16.mxu0 0
        %1409 = vmatpush2.bf16.msra.mxu0 0
        %1410 = vmatprep.subr.bf16.mxu0 0
        %1411 = vmatpush2.bf16.msra.mxu0 0
        %1412 = vmatprep.subr.bf16.mxu0 0
        %1413 = vmatpush2.bf16.msra.mxu0 0
        %1414 = vmatprep.subr.bf16.mxu0 0
        %1415 = vmatpush2.bf16.msra.mxu0 0
        %1416 = vmatprep.mubr.bf16.mxu0 0
        %1417 = vmatmul.mubr.bf16.gmra.mxu0 %v1379
        %v1418 = vpop.f32.mrf.mxu0
        %v1419 = vadd.f32 0.0, %v1418
        %v1420 = vpop.f32.mrf.mxu0
        %v1421 = vpop.f32.mrf.mxu0
        %v1422 = vadd.f32 0.0, %v1421
        %v1423 = vpop.f32.mrf.mxu0
        %1424 = vdwg.mxu0
        %1427 = vrot.lane.b32.xlu0 %v681, 8
        %v1428 = vpop.permute.xlu0 %1427
        %1429 = vrot.lane.b32.xlu0 %v684, 8
        %v1430 = vpop.permute.xlu0 %1429
        %1435 = vrot.lane.b32.xlu0 %v804, 16
        %v1436 = vpop.permute.xlu0 %1435
        %1437 = vrot.lane.b32.xlu0 %v807, 16
        %v1438 = vpop.permute.xlu0 %1437
        %1443 = vrot.lane.b32.xlu0 %v927, 24
        %v1444 = vpop.permute.xlu0 %1443
        %1445 = vrot.lane.b32.xlu0 %v930, 24
        %v1446 = vpop.permute.xlu0 %1445
        %1451 = vrot.lane.b32.xlu0 %v1050, 32
        %v1452 = vpop.permute.xlu0 %1451
        %1453 = vrot.lane.b32.xlu0 %v1053, 32
        %v1454 = vpop.permute.xlu0 %1453
        %1459 = vrot.lane.b32.xlu0 %v1173, 40
        %v1460 = vpop.permute.xlu0 %1459
        %1461 = vrot.lane.b32.xlu0 %v1176, 40
        %v1462 = vpop.permute.xlu0 %1461
        %1467 = vrot.lane.b32.xlu0 %v1296, 48
        %v1468 = vpop.permute.xlu0 %1467
        %1469 = vrot.lane.b32.xlu0 %v1299, 48
        %v1470 = vpop.permute.xlu0 %1469
        %1475 = vrot.lane.b32.xlu0 %v1419, 56
        %v1476 = vpop.permute.xlu0 %1475
        %1477 = vrot.lane.b32.xlu0 %v1422, 56
        %v1478 = vpop.permute.xlu0 %1477
        %v1481 = vsel %vm438, %v556, %v1428
        %v1482 = vsel %vm438, %v559, %v1430
        %vm1483 = vcmask 130048
        %v1484 = vsel %vm1483, %v1481, %v1436
        %v1485 = vsel %vm1483, %v1482, %v1438
        %vm1486 = vcmask 195584
        %v1487 = vsel %vm1486, %v1484, %v1444
        %v1488 = vsel %vm1486, %v1485, %v1446
        %vm1489 = vcmask 261120
        %v1490 = vsel %vm1489, %v1487, %v1452
        %v1491 = vsel %vm1489, %v1488, %v1454
        %vm1492 = vcmask 326656
        %v1493 = vsel %vm1492, %v1490, %v1460
        %v1494 = vsel %vm1492, %v1491, %v1462
        %vm1495 = vcmask 392192
        %v1496 = vsel %vm1495, %v1493, %v1468
        %v1497 = vsel %vm1495, %v1494, %v1470
        %vm1498 = vcmask 457728
        %v1499 = vsel %vm1498, %v1496, %v1476
        %v1500 = vsel %vm1498, %v1497, %v1478
        %v1501 = vpack.c.bf16 %v1500, %v1499
        %v1502 = vpack.c.bf16 %v353, %v352
        %v1503 = vpack.c.bf16 %v355, %v354
        %v1504 = vpack.c.bf16 %v357, %v356
        %v1505 = vpack.c.bf16 %v359, %v358
        %v1507 = vlaneseq
        %v1508 = vshrl.u32 %v1507, 7
        %v1509 = vsub.s32 0, %v1508
        %v1510 = vrot.slane %v360, %v1509
        %v1513 = vsel %vm383, %v1501, 0
        %1515 = vmatprep.subr.bf16.mxu0 0
        %1516 = vmatpush1.bf16.msra.mxu0 0
        %1517 = vmatprep.subr.bf16.mxu0 0
        %1518 = vmatpush1.bf16.msra.mxu0 0
        %1519 = vmatprep.subr.bf16.mxu0 0
        %1520 = vmatpush1.bf16.msra.mxu0 0
        %1521 = vmatprep.subr.bf16.mxu0 0
        %1522 = vmatpush1.bf16.msra.mxu0 0
        %1523 = vmatprep.subr.bf16.mxu0 0
        %1524 = vmatpush1.bf16.msra.mxu0 %v1505
        %1525 = vmatprep.subr.bf16.mxu0 0
        %1526 = vmatpush1.bf16.msra.mxu0 %v1504
        %1527 = vmatprep.subr.bf16.mxu0 0
        %1528 = vmatpush1.bf16.msra.mxu0 %v1503
        %1529 = vmatprep.subr.bf16.mxu0 0
        %1530 = vmatpush1.bf16.msra.mxu0 %v1502
        %1531 = vmatprep.subr.bf16.mxu0 0
        %1532 = vmatpush2.bf16.msra.mxu0 0
        %1533 = vmatprep.subr.bf16.mxu0 0
        %1534 = vmatpush2.bf16.msra.mxu0 0
        %1535 = vmatprep.subr.bf16.mxu0 0
        %1536 = vmatpush2.bf16.msra.mxu0 0
        %1537 = vmatprep.subr.bf16.mxu0 0
        %1538 = vmatpush2.bf16.msra.mxu0 0
        %1539 = vmatprep.subr.bf16.mxu0 0
        %1540 = vmatpush2.bf16.msra.mxu0 0
        %1541 = vmatprep.subr.bf16.mxu0 0
        %1542 = vmatpush2.bf16.msra.mxu0 0
        %1543 = vmatprep.subr.bf16.mxu0 0
        %1544 = vmatpush2.bf16.msra.mxu0 0
        %1545 = vmatprep.subr.bf16.mxu0 0
        %1546 = vmatpush2.bf16.msra.mxu0 0
        %1547 = vmatprep.mubr.bf16.mxu0 0
        %1548 = vmatmul.mubr.bf16.gmra.mxu0 %v1513
        %v1549 = vpop.f32.mrf.mxu0
        %v1550 = vadd.f32 %v1510, %v1549
        %v1551 = vpop.f32.mrf.mxu0
        %v1552 = vpop.f32.mrf.mxu0
        %v1553 = vadd.f32 %v1510, %v1552
        %v1554 = vpop.f32.mrf.mxu0
        %1555 = vdwg.mxu0
        %v1556 = vadd.f32 %v1550, %v333
        %v1557 = vadd.f32 %v1553, %v334
        %v1558 = vsel %vm383, %v1556, 0.0
        %1559 = vadd.xlane.f32.xlu0 %v1558
        %v1560 = vpop.xlane.xlu0 %1559
        %vm1561 = vcmask 516096
        %v1562 = vsel %vm1561, %v1557, 0.0
        %1563 = vadd.xlane.f32.xlu0 %v1562
        %v1564 = vpop.xlane.xlu0 %1563
        %v1565 = vrcp.pop 64.0
        %v1566 = vmul.f32 %v1560, %v1565
        %v1567 = vmul.f32 %v1564, %v1565
        %v1568 = vsub.f32 %v1556, %v1566
        %v1569 = vsub.f32 %v1557, %v1567
        %v1570 = vmul.f32 %v1568, %v1568
        %v1571 = vmul.f32 %v1569, %v1569
        %v1572 = vsel %vm383, %v1570, 0.0
        %1573 = vadd.xlane.f32.xlu0 %v1572
        %v1574 = vpop.xlane.xlu0 %1573
        %v1575 = vsel %vm1561, %v1571, 0.0
        %1576 = vadd.xlane.f32.xlu0 %v1575
        %v1577 = vpop.xlane.xlu0 %1576
        %v1578 = vmul.f32 %v1574, %v1565
        %v1579 = vmul.f32 %v1577, %v1565
        %v1580 = vadd.f32 %v1578, 1e-05
        %v1581 = vadd.f32 %v1579, 1e-05
        %v1582 = vrsqrt.pop %v1580
        %v1583 = vrsqrt.pop %v1581
        %v1584 = vmul.f32 %v1568, %v1582
        %v1585 = vmul.f32 %v1569, %v1583
        %v1587 = vlaneseq
        %v1588 = vshrl.u32 %v1587, 7
        %v1589 = vsub.s32 0, %v1588
        %v1590 = vrot.slane %v361, %v1589
        %v1592 = vmul.f32 %v1584, %v1590
        %v1593 = vmul.f32 %v1585, %v1590
        %v1595 = vlaneseq
        %v1596 = vshrl.u32 %v1595, 7
        %v1597 = vsub.s32 0, %v1596
        %v1598 = vrot.slane %v362, %v1597
        %v1600 = vadd.f32 %v1592, %v1598
        %v1601 = vadd.f32 %v1593, %v1598
        %1602 = vst.msk [vmem:[%s331] sm:$0xff] %vm383, %v1600
        %1603 = vst.msk [vmem:[%s331 + $0x8] sm:$0x1] %vm1561, %v1601
        %p1604 = scmp.lt.s32.totalorder %s21, 1
        %s1605 = scalar_select %p1604, %s21, 1
        %s1606 = smul.addr %s1605, 2
        %s1607 = smul.addr %s1606, 8
        %s1608 = scalar_lea.vmem %s7, %s1607
        // Predicated region
        $region65: #{mmformer_pallas.2} parent=47 // pred_check
          %p1609 = pneg %p191
        $region66: #{mmformer_pallas.2} parent=47 // pred_check_branch
          %1611 = sbr.rel (%p1609) target = $region68
        $region67: #{mmformer_pallas.2} parent=47 // pred_region
          _
        $region68: #{mmformer_pallas.2} parent=47 // pred_fallthru
          _
      $region48: #{mmformer_pallas.2} parent=5 // pred_fallthru
        _
      %p1612 = scmp.le.s32.totalorder 2, %s16
      // Predicated region
      $region69: #{mmformer_pallas.2} parent=5 // pred_check
        %p1613 = pneg %p1612
      $region70: #{mmformer_pallas.2} parent=5 // pred_check_branch
        %1615 = sbr.rel (%p1613) target = $region72
      $region71: #{mmformer_pallas.2} parent=5 // pred_region
        %s1616 = ssub.s32 %s16, 2
        // Predicated region
        $region73: #{mmformer_pallas.2} parent=71 // pred_check
          %p1617 = pneg %p197
        $region74: #{mmformer_pallas.2} parent=71 // pred_check_branch
          %1619 = sbr.rel (%p1617) target = $region76
        $region75: #{mmformer_pallas.2} parent=71 // pred_region
          %p1620 = scmp.lt.s32.totalorder %s22, 1
          %s1621 = scalar_select %p1620, %s22, 1
          %s1622 = smul.addr %s1621, 2
          %s1623 = smul.addr %s1622, 8
          %s1624 = scalar_lea.vmem %s7, %s1623
        $region76: #{mmformer_pallas.2} parent=71 // pred_fallthru
          _
      $region72: #{mmformer_pallas.2} parent=5 // pred_fallthru
        _
    $region6: #{mmformer_pallas.2} parent=1 // loop_footer
      %s20 = sadd.s32 1, %s16
    $region7: #{mmformer_pallas.2} parent=1 // loop_footer_branch
      %15 = sbr.rel target = $region3
    $region8: #{mmformer_pallas.2} parent=1 // loop_exit
      _
    %1625 = vsyncpa [#allocation3], 1
    %s1626 = scalar_lea.sflag [#allocation3], 1
    %1627 = vsyncpa %s1626, 1
    %1628 = vsyncpa [#allocation5], 1
    %1629 = vsyncpa [#allocation8], 1

</llo_original>
